<compile_context>
chip_gen: v6e
topology: v6e:2x2x1
jax: 0.10.0
libtpu: 0.0.40
codegen_flags: <defaults>
</compile_context>

<pallas_src>
import jax
import jax.numpy as jnp
import numpy as np
from jax.experimental import pallas as pl
from jax.experimental.pallas import tpu as pltpu


# ---------------------------------------------------------------------------
# Pallas kernel: fused stride-1 conv (in-kernel window extraction)
#                + bias + act  [+ fused 1x1 conv + bias + act]
# ---------------------------------------------------------------------------
def _apply_act(v, kind):
    if kind == "relu":
        return jnp.maximum(v, 0.0)
    if kind == "sigmoid":
        # Exact sigmoid: exp on the EUP, exact divide -> output stays in [0, 1].
        return 1.0 / (1.0 + jnp.exp(-v))
    return v


def _make_conv_kernel(kh, kw, act, fuse_mode, fuse_act):
    """Per grid step (one image):
         x_ref  : (1, Hp, Wp, Cin)      padded input, bf16
         w_ref  : (kh*kw, Cin, Cout1)   conv taps, bf16
         b_ref  : (1, Cout1)            f32
        [w2_ref : (Cout1, Cout2) f32    if fuse_mode == 'dot'
                  (1, Cout1)     f32    if fuse_mode == 'rowvec' (Cout2 == 1)]
        [b2_ref : (1, Cout2) f32]
         o_ref  : (1, Ho, Wo, Cout_out)
    """
    def kernel(x_ref, w_ref, b_ref, *rest):
        if fuse_mode is None:
            (o_ref,) = rest
            w2_ref = b2_ref = None
        else:
            w2_ref, b2_ref, o_ref = rest

        Ho, Wo, cout_out = o_ref.shape[1], o_ref.shape[2], o_ref.shape[3]
        cin, cout1 = w_ref.shape[1], w_ref.shape[2]

        x = x_ref[0]                                   # (Hp, Wp, Cin), stays in VMEM
        # kh*kw shifted windows -> accumulating MXU dots, f32 accumulation.
        acc = jnp.zeros((Ho * Wo, cout1), jnp.float32)
        for i in range(kh):
            for j in range(kw):
                patch = x[i:i + Ho, j:j + Wo, :]       # static unit-stride slice
                acc = acc + jnp.dot(patch.reshape(Ho * Wo, cin),
                                    w_ref[i * kw + j],
                                    preferred_element_type=jnp.float32)

        y = _apply_act(acc + b_ref[...], act)

        if fuse_mode == "dot":          # fused 1x1 conv (FPN-lite neck)
            y = _apply_act(
                jnp.dot(y, w2_ref[...], preferred_element_type=jnp.float32)
                + b2_ref[...], fuse_act)
        elif fuse_mode == "rowvec":     # fused 1x1 conv, Cout == 1: VPU mul + reduce
            y = _apply_act(
                jnp.sum(y * w2_ref[...], axis=-1, keepdims=True) + b2_ref[...],
                fuse_act)

        o_ref[0] = y.reshape(Ho, Wo, cout_out).astype(o_ref.dtype)

    return kernel


def conv_block(x_nhwc, w, b, *, kh, kw, act=None, out_dtype=jnp.bfloat16,
               fuse_w=None, fuse_b=None, fuse_act=None, fuse_mode=None):
    """Stride-1 valid conv over an already-padded NHWC input, one pallas_call.

    x_nhwc: (N, Hp, Wp, Cin) bf16, w: (kh*kw, Cin, Cout1) bf16, b: (1, Cout1) f32.
    Optional fused 1x1 conv (fuse_w / fuse_b / fuse_act) applied to the activated
    conv output inside the same kernel.
    """
    N, Hp, Wp, Cin = x_nhwc.shape
    taps, cin_w, cout1 = w.shape
    assert taps == kh * kw and cin_w == Cin, (w.shape, (kh, kw, Cin))
    Ho, Wo = Hp - kh + 1, Wp - kw + 1
    if fuse_mode is None:
        cout_out = cout1
    elif fuse_mode == "dot":
        cout_out = fuse_w.shape[-1]
    else:
        cout_out = 1

    operands = [x_nhwc, w, b]
    in_specs = [
        pl.BlockSpec((1, Hp, Wp, Cin), lambda n: (n, 0, 0, 0)),
        pl.BlockSpec((taps, Cin, cout1), lambda n: (0, 0, 0)),
        pl.BlockSpec((1, cout1), lambda n: (0, 0)),
    ]
    if fuse_mode is not None:
        operands += [fuse_w, fuse_b]
        in_specs += [pl.BlockSpec(fuse_w.shape, lambda n: (0, 0)),
                     pl.BlockSpec(fuse_b.shape, lambda n: (0, 0))]

    # TODO(synk): at production DBNet resolutions, also tile the output rows
    # (grid=(N, Ho//th)) with an overlapping input window so the per-step VMEM
    # footprint stays well under v7x's 64 MiB; full-image blocks are fine here.
    return pl.pallas_call(
        _make_conv_kernel(kh, kw, act, fuse_mode, fuse_act),
        out_shape=jax.ShapeDtypeStruct((N, Ho, Wo, cout_out), out_dtype),
        grid_spec=pltpu.PrefetchScalarGridSpec(
            num_scalar_prefetch=0,
            grid=(N,),
            in_specs=in_specs,
            out_specs=pl.BlockSpec((1, Ho, Wo, cout_out), lambda n: (n, 0, 0, 0)),
        ),
        compiler_params=pltpu.CompilerParams(
            dimension_semantics=("parallel",),
            vmem_limit_bytes=32 * 1024 * 1024,   # safe on v5e/v6e/v7x at these tiles
        ),
    )(*operands)


# ---------------------------------------------------------------------------
# Pallas kernel: fused bilinear (align_corners=True) upsample, one image per step
# ---------------------------------------------------------------------------
def _upsample_kernel(x_ref, ah_ref, awt_ref, o_ref):
    # W-interp then H-interp on the MXU; the intermediate never leaves VMEM.
    t = jnp.dot(x_ref[0], awt_ref[...], preferred_element_type=jnp.float32)
    o_ref[0] = jnp.dot(ah_ref[...], t, preferred_element_type=jnp.float32)


def _bilinear_matrix(in_size, out_size):
    """A (out,in) such that A @ x == F.interpolate(x, mode='bilinear', align_corners=True)."""
    A = np.zeros((out_size, in_size), np.float32)
    if out_size > 1:
        pos = np.arange(out_size, dtype=np.float64) * (in_size - 1) / (out_size - 1)
    else:
        pos = np.zeros((out_size,), np.float64)
    low = np.clip(np.floor(pos).astype(np.int64), 0, in_size - 1)
    high = np.clip(low + 1, 0, in_size - 1)
    frac = (pos - low).astype(np.float32)
    A[np.arange(out_size), low] += 1.0 - frac
    A[np.arange(out_size), high] += frac
    return A


def bilinear_upsample_nchw(x_nchw, H_out, W_out):
    N, C, Hin, Win = x_nchw.shape
    Ah = jnp.asarray(_bilinear_matrix(Hin, H_out))        # (Hout, Hin), baked constant
    Awt = jnp.asarray(_bilinear_matrix(Win, W_out).T)     # (Win, Wout)
    xb = x_nchw.reshape(N * C, Hin, Win).astype(jnp.float32)

    out = pl.pallas_call(
        _upsample_kernel,
        out_shape=jax.ShapeDtypeStruct((N * C, H_out, W_out), jnp.float32),
        grid_spec=pltpu.PrefetchScalarGridSpec(
            num_scalar_prefetch=0,
            grid=(N * C,),
            in_specs=[pl.BlockSpec((1, Hin, Win), lambda b: (b, 0, 0)),
                      pl.BlockSpec((H_out, Hin), lambda b: (0, 0)),
                      pl.BlockSpec((Win, W_out), lambda b: (0, 0))],
            out_specs=pl.BlockSpec((1, H_out, W_out), lambda b: (b, 0, 0)),
        ),
        compiler_params=pltpu.CompilerParams(
            dimension_semantics=("parallel",),
            vmem_limit_bytes=32 * 1024 * 1024,
        ),
    )(xb, Ah, Awt)
    return out.reshape(N, C, H_out, W_out)


# ---------------------------------------------------------------------------
# Plain-JAX glue: space-to-depth (stride-2 -> stride-1), parameter preparation
# ---------------------------------------------------------------------------
def _space_to_depth_pad(x_nhwc, pad):
    """Pad spatially then split into the 4 stride-2 phases, concatenated on channels.

    Turns a 3x3 / stride-2 / pad-`pad` conv into a 2x2 / stride-1 conv over the
    result (with correspondingly rearranged weights): one pass over the input,
    no im2col blow-up, no strided loads inside the kernel.
    """
    N, H, W, C = x_nhwc.shape
    assert (H + 2 * pad) % 2 == 0 and (W + 2 * pad) % 2 == 0
    xp = jnp.pad(x_nhwc, ((0, 0), (pad, pad), (pad, pad), (0, 0)))
    phases = [xp[:, pi::2, pj::2, :] for pi in (0, 1) for pj in (0, 1)]
    return jnp.concatenate(phases, axis=-1)


def init_params(key):
    """Raw PyTorch-layout conv params (HWIO weights, f32) for the small DBNet-ish stack."""
    def conv_init(k, kh, kw, cin, cout):
        w = jax.random.normal(k, (kh, kw, cin, cout), jnp.float32) / np.sqrt(kh * kw * cin)
        b = jnp.zeros((cout,), jnp.float32)
        return w, b

    keys = jax.random.split(key, 5)
    return {
        "bb1":   conv_init(keys[0], 3, 3, 3, 8),     # backbone stage 1 (3x3, stride 2)
        "bb2":   conv_init(keys[1], 3, 3, 8, 16),    # backbone stage 2 (3x3, stride 2)
        "neck":  conv_init(keys[2], 1, 1, 16, 16),   # FPN-lite 1x1 reduce
        "head1": conv_init(keys[3], 3, 3, 16, 16),   # DB head 3x3
        "head2": conv_init(keys[4], 1, 1, 16, 1),    # DB head 1x1 -> probability map
    }
    # TODO(synk): the real DBNet backbone/neck/head come from a config registry
    # (build_backbone / build_neck / build_head); a representative small stack is used.


def _s2d_weight(w, cin_pad):
    """(3,3,Cin,Cout) stride-2 weights -> (4, 4*cin_pad, Cout) stride-1 2x2 weights."""
    kh, kw, cin, cout = w.shape
    wn = np.zeros((kh, kw, cin_pad, cout), np.float32)
    wn[:, :, :cin, :] = np.asarray(w)
    w2 = np.zeros((2, 2, 4 * cin_pad, cout), np.float32)
    for di in range(2):
        for dj in range(2):
            for pi in range(2):
                for pj in range(2):
                    ki, kj = 2 * di + pi, 2 * dj + pj
                    if ki < kh and kj < kw:
                        cs = (pi * 2 + pj) * cin_pad
                        w2[di, dj, cs:cs + cin_pad, :] = wn[ki, kj]
    return jnp.asarray(w2.reshape(4, 4 * cin_pad, cout), jnp.bfloat16)


def prepare_params(raw):
    """One-time weight rearrangement / pre-cast (kept out of the jitted forward)."""
    p = {}
    w, b = raw["bb1"]
    cin_pad = -(-w.shape[2] // 4) * 4                     # 3 -> 4, so 4*cin is 16-aligned
    p["bb1_w"] = _s2d_weight(w, cin_pad)                  # (4, 16, 8) bf16
    p["bb1_b"] = b.reshape(1, -1)
    w, b = raw["bb2"]
    p["bb2_w"] = _s2d_weight(w, w.shape[2])               # (4, 32, 16) bf16
    p["bb2_b"] = b.reshape(1, -1)
    w, b = raw["neck"]
    p["neck_w"] = w.reshape(w.shape[2], w.shape[3]).astype(jnp.float32)   # (16, 16)
    p["neck_b"] = b.reshape(1, -1)
    w, b = raw["head1"]
    p["head1_w"] = jnp.asarray(w.reshape(9, w.shape[2], w.shape[3]), jnp.bfloat16)
    p["head1_b"] = b.reshape(1, -1)
    w, b = raw["head2"]
    p["head2_w"] = w.reshape(w.shape[2], w.shape[3]).T.astype(jnp.float32)  # (1, 16)
    p["head2_b"] = b.reshape(1, -1)
    return p


# ---------------------------------------------------------------------------
# DBNet-style forward: backbone -> neck -> head -> upsample to input size
# ---------------------------------------------------------------------------
def model_forward(params, x_nchw):
    N, C, H, W = x_nchw.shape
    x = x_nchw.transpose(0, 2, 3, 1).astype(jnp.bfloat16)     # NHWC, bf16 activations

    # pad input channels (3 -> 4) so the space-to-depth K dim is 16-aligned
    cin_pad = params["bb1_w"].shape[1] // 4
    if cin_pad != C:
        x = jnp.pad(x, ((0, 0), (0, 0), (0, 0), (0, cin_pad - C)))

    # backbone stage 1: 3x3 stride-2 conv (as 2x2 stride-1 over the phase split)
    f = conv_block(_space_to_depth_pad(x, 1), params["bb1_w"], params["bb1_b"],
                   kh=2, kw=2, act="relu", out_dtype=jnp.bfloat16)      # (N,H/2,W/2,8)

    # backbone stage 2 (3x3 stride-2) with the neck's 1x1+relu fused in the epilogue
    f = conv_block(_space_to_depth_pad(f, 1), params["bb2_w"], params["bb2_b"],
                   kh=2, kw=2, act="relu",
                   fuse_w=params["neck_w"], fuse_b=params["neck_b"],
                   fuse_act="relu", fuse_mode="dot",
                   out_dtype=jnp.bfloat16)                              # (N,H/4,W/4,16)

    # head: 3x3+relu with the 1-channel 1x1+sigmoid fused in the epilogue (VPU path)
    fp = jnp.pad(f, ((0, 0), (1, 1), (1, 1), (0, 0)))
    y = conv_block(fp, params["head1_w"], params["head1_b"],
                   kh=3, kw=3, act="relu",
                   fuse_w=params["head2_w"], fuse_b=params["head2_b"],
                   fuse_act="sigmoid", fuse_mode="rowvec",
                   out_dtype=jnp.float32)                               # (N,H/4,W/4,1)

    # NCHW + align_corners=True bilinear upsample back to (H, W)
    y = y.transpose(0, 3, 1, 2)
    return bilinear_upsample_nchw(y, H, W)                              # (N,1,H,W)


if __name__ == "__main__":
    key = jax.random.PRNGKey(0)
    k_in, k_par = jax.random.split(key)
    x = jax.random.normal(k_in, (2, 3, 16, 16), jnp.float32)   # NCHW input, like PyTorch
    params = prepare_params(init_params(k_par))

    fwd = jax.jit(model_forward)
    y = jax.block_until_ready(fwd(params, x))
    assert y.shape == (2, 1, 16, 16), y.shape
    assert bool(jnp.all(jnp.isfinite(y)))
    assert bool(jnp.all((y >= 0.0) & (y <= 1.0)))   # exact sigmoid keeps map in [0,1]
    print("KERNEL_OK")
</pallas_src>

<mosaic_0001>
module attributes {stable_mosaic.version = 11 : i64} {
  func.func @kernel(%arg0: i32, %arg1: memref<1x9x9x16xbf16, #tpu.memory_space<vmem>>, %arg2: memref<4x16x8xbf16, #tpu.memory_space<vmem>>, %arg3: memref<1x8xf32, #tpu.memory_space<vmem>>, %arg4: memref<1x8x8x8xbf16, #tpu.memory_space<vmem>>) attributes {dimension_semantics = [#tpu.dimension_semantics<parallel>], iteration_bounds = array<i64: 2>, scalar_prefetch = 0 : i64, scratch_operands = 0 : i64, tpu.core_type = #tpu.core_type<tc>, window_params = [{transform_indices = @transform_0, window_bounds = array<i64: 1, 9, 9, 16>}, {pipeline_mode = #tpu.pipeline_mode<synchronous>, transform_indices = @transform_1, window_bounds = array<i64: 4, 16, 8>}, {pipeline_mode = #tpu.pipeline_mode<synchronous>, transform_indices = @transform_2, window_bounds = array<i64: 1, 8>}, {transform_indices = @transform_3, window_bounds = array<i64: 1, 8, 8, 8>}]} {
    %c0 = arith.constant 0 : index
    %c0_0 = arith.constant 0 : index
    %c0_1 = arith.constant 0 : index
    %c0_2 = arith.constant 0 : index
    %0 = vector.load %arg1[%c0, %c0_0, %c0_1, %c0_2] : memref<1x9x9x16xbf16, #tpu.memory_space<vmem>>, vector<1x9x9x16xbf16>
    %1 = vector.shape_cast %0 : vector<1x9x9x16xbf16> to vector<9x9x16xbf16>
    %cst = arith.constant 0.000000e+00 : f32
    %2 = vector.broadcast %cst : f32 to vector<64x8xf32>
    %3 = vector.extract_strided_slice %1 {offsets = [0, 0, 0], sizes = [8, 8, 16], strides = [1, 1, 1]} : vector<9x9x16xbf16> to vector<8x8x16xbf16>
    %4 = vector.shape_cast %3 : vector<8x8x16xbf16> to vector<64x16xbf16>
    %c0_3 = arith.constant 0 : index
    %c0_4 = arith.constant 0 : index
    %c0_5 = arith.constant 0 : index
    %5 = vector.load %arg2[%c0_3, %c0_4, %c0_5] : memref<4x16x8xbf16, #tpu.memory_space<vmem>>, vector<1x16x8xbf16>
    %6 = vector.shape_cast %5 : vector<1x16x8xbf16> to vector<16x8xbf16>
    %cst_6 = arith.constant dense<0.000000e+00> : vector<64x8xf32>
    %7 = tpu.matmul %4, %6, %cst_6 {dimension_numbers = #tpu.dot_dimension_numbers<[1], [0], [0], [1], [0, 0, 1, 1], [], []>} : vector<64x16xbf16>, vector<16x8xbf16>, vector<64x8xf32> -> vector<64x8xf32>
    %8 = arith.addf %2, %7 : vector<64x8xf32>
    %9 = vector.extract_strided_slice %1 {offsets = [0, 1, 0], sizes = [8, 8, 16], strides = [1, 1, 1]} : vector<9x9x16xbf16> to vector<8x8x16xbf16>
    %10 = vector.shape_cast %9 : vector<8x8x16xbf16> to vector<64x16xbf16>
    %c1 = arith.constant 1 : index
    %c0_7 = arith.constant 0 : index
    %c0_8 = arith.constant 0 : index
    %11 = vector.load %arg2[%c1, %c0_7, %c0_8] : memref<4x16x8xbf16, #tpu.memory_space<vmem>>, vector<1x16x8xbf16>
    %12 = vector.shape_cast %11 : vector<1x16x8xbf16> to vector<16x8xbf16>
    %cst_9 = arith.constant dense<0.000000e+00> : vector<64x8xf32>
    %13 = tpu.matmul %10, %12, %cst_9 {dimension_numbers = #tpu.dot_dimension_numbers<[1], [0], [0], [1], [0, 0, 1, 1], [], []>} : vector<64x16xbf16>, vector<16x8xbf16>, vector<64x8xf32> -> vector<64x8xf32>
    %14 = arith.addf %8, %13 : vector<64x8xf32>
    %15 = vector.extract_strided_slice %1 {offsets = [1, 0, 0], sizes = [8, 8, 16], strides = [1, 1, 1]} : vector<9x9x16xbf16> to vector<8x8x16xbf16>
    %16 = vector.shape_cast %15 : vector<8x8x16xbf16> to vector<64x16xbf16>
    %c2 = arith.constant 2 : index
    %c0_10 = arith.constant 0 : index
    %c0_11 = arith.constant 0 : index
    %17 = vector.load %arg2[%c2, %c0_10, %c0_11] : memref<4x16x8xbf16, #tpu.memory_space<vmem>>, vector<1x16x8xbf16>
    %18 = vector.shape_cast %17 : vector<1x16x8xbf16> to vector<16x8xbf16>
    %cst_12 = arith.constant dense<0.000000e+00> : vector<64x8xf32>
    %19 = tpu.matmul %16, %18, %cst_12 {dimension_numbers = #tpu.dot_dimension_numbers<[1], [0], [0], [1], [0, 0, 1, 1], [], []>} : vector<64x16xbf16>, vector<16x8xbf16>, vector<64x8xf32> -> vector<64x8xf32>
    %20 = arith.addf %14, %19 : vector<64x8xf32>
    %21 = vector.extract_strided_slice %1 {offsets = [1, 1, 0], sizes = [8, 8, 16], strides = [1, 1, 1]} : vector<9x9x16xbf16> to vector<8x8x16xbf16>
    %22 = vector.shape_cast %21 : vector<8x8x16xbf16> to vector<64x16xbf16>
    %c3 = arith.constant 3 : index
    %c0_13 = arith.constant 0 : index
    %c0_14 = arith.constant 0 : index
    %23 = vector.load %arg2[%c3, %c0_13, %c0_14] : memref<4x16x8xbf16, #tpu.memory_space<vmem>>, vector<1x16x8xbf16>
    %24 = vector.shape_cast %23 : vector<1x16x8xbf16> to vector<16x8xbf16>
    %cst_15 = arith.constant dense<0.000000e+00> : vector<64x8xf32>
    %25 = tpu.matmul %22, %24, %cst_15 {dimension_numbers = #tpu.dot_dimension_numbers<[1], [0], [0], [1], [0, 0, 1, 1], [], []>} : vector<64x16xbf16>, vector<16x8xbf16>, vector<64x8xf32> -> vector<64x8xf32>
    %26 = arith.addf %20, %25 : vector<64x8xf32>
    %c0_16 = arith.constant 0 : index
    %c0_17 = arith.constant 0 : index
    %27 = vector.load %arg3[%c0_16, %c0_17] : memref<1x8xf32, #tpu.memory_space<vmem>>, vector<1x8xf32>
    %28 = vector.broadcast %27 : vector<1x8xf32> to vector<64x8xf32>
    %29 = arith.addf %26, %28 : vector<64x8xf32>
    %cst_18 = arith.constant 0.000000e+00 : f32
    %30 = vector.broadcast %cst_18 : f32 to vector<64x8xf32>
    %31 = arith.maximumf %29, %30 : vector<64x8xf32>
    %32 = vector.shape_cast %31 : vector<64x8xf32> to vector<8x8x8xf32>
    %33 = arith.truncf %32 : vector<8x8x8xf32> to vector<8x8x8xbf16>
    %c0_19 = arith.constant 0 : index
    %c0_20 = arith.constant 0 : index
    %c0_21 = arith.constant 0 : index
    %c0_22 = arith.constant 0 : index
    %34 = vector.load %arg4[%c0_19, %c0_20, %c0_21, %c0_22] : memref<1x8x8x8xbf16, #tpu.memory_space<vmem>>, vector<1x8x8x8xbf16>
    %35 = vector.shape_cast %34 : vector<1x8x8x8xbf16> to vector<8x8x8xbf16>
    %36 = vector.shape_cast %33 : vector<8x8x8xbf16> to vector<1x8x8x8xbf16>
    tpu.vector_store %arg4[%c0_19, %c0_20, %c0_21, %c0_22], %36 {strides = array<i32>} : memref<1x8x8x8xbf16, #tpu.memory_space<vmem>>, vector<1x8x8x8xbf16>,
    return
  }
  func.func @transform_0(%arg0: i32) -> (i32, i32, i32, i32) {
    %c0_i32 = arith.constant 0 : i32
    %c0_i32_0 = arith.constant 0 : i32
    %c0_i32_1 = arith.constant 0 : i32
    %c0_i32_2 = arith.constant 0 : i32
    return %arg0, %c0_i32, %c0_i32_0, %c0_i32_1 : i32, i32, i32, i32
  }
  func.func @transform_1(%arg0: i32) -> (i32, i32, i32) {
    %c0_i32 = arith.constant 0 : i32
    %c0_i32_0 = arith.constant 0 : i32
    %c0_i32_1 = arith.constant 0 : i32
    %c0_i32_2 = arith.constant 0 : i32
    return %c0_i32, %c0_i32_0, %c0_i32_1 : i32, i32, i32
  }
  func.func @transform_2(%arg0: i32) -> (i32, i32) {
    %c0_i32 = arith.constant 0 : i32
    %c0_i32_0 = arith.constant 0 : i32
    %c0_i32_1 = arith.constant 0 : i32
    return %c0_i32, %c0_i32_0 : i32, i32
  }
  func.func @transform_3(%arg0: i32) -> (i32, i32, i32, i32) {
    %c0_i32 = arith.constant 0 : i32
    %c0_i32_0 = arith.constant 0 : i32
    %c0_i32_1 = arith.constant 0 : i32
    %c0_i32_2 = arith.constant 0 : i32
    return %arg0, %c0_i32, %c0_i32_0, %c0_i32_1 : i32, i32, i32, i32
  }
}

module attributes {stable_mosaic.version = 11 : i64} {
  func.func @kernel(%arg0: i32, %arg1: memref<1x5x5x32xbf16, #tpu.memory_space<vmem>>, %arg2: memref<4x32x16xbf16, #tpu.memory_space<vmem>>, %arg3: memref<1x16xf32, #tpu.memory_space<vmem>>, %arg4: memref<16x16xf32, #tpu.memory_space<vmem>>, %arg5: memref<1x16xf32, #tpu.memory_space<vmem>>, %arg6: memref<1x4x4x16xbf16, #tpu.memory_space<vmem>>) attributes {dimension_semantics = [#tpu.dimension_semantics<parallel>], iteration_bounds = array<i64: 2>, scalar_prefetch = 0 : i64, scratch_operands = 0 : i64, tpu.core_type = #tpu.core_type<tc>, window_params = [{transform_indices = @transform_0, window_bounds = array<i64: 1, 5, 5, 32>}, {pipeline_mode = #tpu.pipeline_mode<synchronous>, transform_indices = @transform_1, window_bounds = array<i64: 4, 32, 16>}, {pipeline_mode = #tpu.pipeline_mode<synchronous>, transform_indices = @transform_2, window_bounds = array<i64: 1, 16>}, {pipeline_mode = #tpu.pipeline_mode<synchronous>, transform_indices = @transform_3, window_bounds = array<i64: 16, 16>}, {pipeline_mode = #tpu.pipeline_mode<synchronous>, transform_indices = @transform_4, window_bounds = array<i64: 1, 16>}, {transform_indices = @transform_5, window_bounds = array<i64: 1, 4, 4, 16>}]} {
    %c0 = arith.constant 0 : index
    %c0_0 = arith.constant 0 : index
    %c0_1 = arith.constant 0 : index
    %c0_2 = arith.constant 0 : index
    %0 = vector.load %arg1[%c0, %c0_0, %c0_1, %c0_2] : memref<1x5x5x32xbf16, #tpu.memory_space<vmem>>, vector<1x5x5x32xbf16>
    %1 = vector.shape_cast %0 : vector<1x5x5x32xbf16> to vector<5x5x32xbf16>
    %cst = arith.constant 0.000000e+00 : f32
    %2 = vector.broadcast %cst : f32 to vector<16x16xf32>
    %3 = vector.extract_strided_slice %1 {offsets = [0, 0, 0], sizes = [4, 4, 32], strides = [1, 1, 1]} : vector<5x5x32xbf16> to vector<4x4x32xbf16>
    %4 = vector.shape_cast %3 : vector<4x4x32xbf16> to vector<16x32xbf16>
    %c0_3 = arith.constant 0 : index
    %c0_4 = arith.constant 0 : index
    %c0_5 = arith.constant 0 : index
    %5 = vector.load %arg2[%c0_3, %c0_4, %c0_5] : memref<4x32x16xbf16, #tpu.memory_space<vmem>>, vector<1x32x16xbf16>
    %6 = vector.shape_cast %5 : vector<1x32x16xbf16> to vector<32x16xbf16>
    %cst_6 = arith.constant dense<0.000000e+00> : vector<16x16xf32>
    %7 = tpu.matmul %4, %6, %cst_6 {dimension_numbers = #tpu.dot_dimension_numbers<[1], [0], [0], [1], [0, 0, 1, 1], [], []>} : vector<16x32xbf16>, vector<32x16xbf16>, vector<16x16xf32> -> vector<16x16xf32>
    %8 = arith.addf %2, %7 : vector<16x16xf32>
    %9 = vector.extract_strided_slice %1 {offsets = [0, 1, 0], sizes = [4, 4, 32], strides = [1, 1, 1]} : vector<5x5x32xbf16> to vector<4x4x32xbf16>
    %10 = vector.shape_cast %9 : vector<4x4x32xbf16> to vector<16x32xbf16>
    %c1 = arith.constant 1 : index
    %c0_7 = arith.constant 0 : index
    %c0_8 = arith.constant 0 : index
    %11 = vector.load %arg2[%c1, %c0_7, %c0_8] : memref<4x32x16xbf16, #tpu.memory_space<vmem>>, vector<1x32x16xbf16>
    %12 = vector.shape_cast %11 : vector<1x32x16xbf16> to vector<32x16xbf16>
    %cst_9 = arith.constant dense<0.000000e+00> : vector<16x16xf32>
    %13 = tpu.matmul %10, %12, %cst_9 {dimension_numbers = #tpu.dot_dimension_numbers<[1], [0], [0], [1], [0, 0, 1, 1], [], []>} : vector<16x32xbf16>, vector<32x16xbf16>, vector<16x16xf32> -> vector<16x16xf32>
    %14 = arith.addf %8, %13 : vector<16x16xf32>
    %15 = vector.extract_strided_slice %1 {offsets = [1, 0, 0], sizes = [4, 4, 32], strides = [1, 1, 1]} : vector<5x5x32xbf16> to vector<4x4x32xbf16>
    %16 = vector.shape_cast %15 : vector<4x4x32xbf16> to vector<16x32xbf16>
    %c2 = arith.constant 2 : index
    %c0_10 = arith.constant 0 : index
    %c0_11 = arith.constant 0 : index
    %17 = vector.load %arg2[%c2, %c0_10, %c0_11] : memref<4x32x16xbf16, #tpu.memory_space<vmem>>, vector<1x32x16xbf16>
    %18 = vector.shape_cast %17 : vector<1x32x16xbf16> to vector<32x16xbf16>
    %cst_12 = arith.constant dense<0.000000e+00> : vector<16x16xf32>
    %19 = tpu.matmul %16, %18, %cst_12 {dimension_numbers = #tpu.dot_dimension_numbers<[1], [0], [0], [1], [0, 0, 1, 1], [], []>} : vector<16x32xbf16>, vector<32x16xbf16>, vector<16x16xf32> -> vector<16x16xf32>
    %20 = arith.addf %14, %19 : vector<16x16xf32>
    %21 = vector.extract_strided_slice %1 {offsets = [1, 1, 0], sizes = [4, 4, 32], strides = [1, 1, 1]} : vector<5x5x32xbf16> to vector<4x4x32xbf16>
    %22 = vector.shape_cast %21 : vector<4x4x32xbf16> to vector<16x32xbf16>
    %c3 = arith.constant 3 : index
    %c0_13 = arith.constant 0 : index
    %c0_14 = arith.constant 0 : index
    %23 = vector.load %arg2[%c3, %c0_13, %c0_14] : memref<4x32x16xbf16, #tpu.memory_space<vmem>>, vector<1x32x16xbf16>
    %24 = vector.shape_cast %23 : vector<1x32x16xbf16> to vector<32x16xbf16>
    %cst_15 = arith.constant dense<0.000000e+00> : vector<16x16xf32>
    %25 = tpu.matmul %22, %24, %cst_15 {dimension_numbers = #tpu.dot_dimension_numbers<[1], [0], [0], [1], [0, 0, 1, 1], [], []>} : vector<16x32xbf16>, vector<32x16xbf16>, vector<16x16xf32> -> vector<16x16xf32>
    %26 = arith.addf %20, %25 : vector<16x16xf32>
    %c0_16 = arith.constant 0 : index
    %c0_17 = arith.constant 0 : index
    %27 = vector.load %arg3[%c0_16, %c0_17] : memref<1x16xf32, #tpu.memory_space<vmem>>, vector<1x16xf32>
    %28 = vector.broadcast %27 : vector<1x16xf32> to vector<16x16xf32>
    %29 = arith.addf %26, %28 : vector<16x16xf32>
    %cst_18 = arith.constant 0.000000e+00 : f32
    %30 = vector.broadcast %cst_18 : f32 to vector<16x16xf32>
    %31 = arith.maximumf %29, %30 : vector<16x16xf32>
    %c0_19 = arith.constant 0 : index
    %c0_20 = arith.constant 0 : index
    %32 = vector.load %arg4[%c0_19, %c0_20] : memref<16x16xf32, #tpu.memory_space<vmem>>, vector<16x16xf32>
    %cst_21 = arith.constant dense<0.000000e+00> : vector<16x16xf32>
    %33 = tpu.matmul %31, %32, %cst_21 {dimension_numbers = #tpu.dot_dimension_numbers<[1], [0], [0], [1], [0, 0, 1, 1], [], []>} : vector<16x16xf32>, vector<16x16xf32>, vector<16x16xf32> -> vector<16x16xf32>
    %c0_22 = arith.constant 0 : index
    %c0_23 = arith.constant 0 : index
    %34 = vector.load %arg5[%c0_22, %c0_23] : memref<1x16xf32, #tpu.memory_space<vmem>>, vector<1x16xf32>
    %35 = vector.broadcast %34 : vector<1x16xf32> to vector<16x16xf32>
    %36 = arith.addf %33, %35 : vector<16x16xf32>
    %cst_24 = arith.constant 0.000000e+00 : f32
    %37 = vector.broadcast %cst_24 : f32 to vector<16x16xf32>
    %38 = arith.maximumf %36, %37 : vector<16x16xf32>
    %39 = vector.shape_cast %38 : vector<16x16xf32> to vector<4x4x16xf32>
    %40 = arith.truncf %39 : vector<4x4x16xf32> to vector<4x4x16xbf16>
    %c0_25 = arith.constant 0 : index
    %c0_26 = arith.constant 0 : index
    %c0_27 = arith.constant 0 : index
    %c0_28 = arith.constant 0 : index
    %41 = vector.load %arg6[%c0_25, %c0_26, %c0_27, %c0_28] : memref<1x4x4x16xbf16, #tpu.memory_space<vmem>>, vector<1x4x4x16xbf16>
    %42 = vector.shape_cast %41 : vector<1x4x4x16xbf16> to vector<4x4x16xbf16>
    %43 = vector.shape_cast %40 : vector<4x4x16xbf16> to vector<1x4x4x16xbf16>
    tpu.vector_store %arg6[%c0_25, %c0_26, %c0_27, %c0_28], %43 {strides = array<i32>} : memref<1x4x4x16xbf16, #tpu.memory_space<vmem>>, vector<1x4x4x16xbf16>,
    return
  }
  func.func @transform_0(%arg0: i32) -> (i32, i32, i32, i32) {
    %c0_i32 = arith.constant 0 : i32
    %c0_i32_0 = arith.constant 0 : i32
    %c0_i32_1 = arith.constant 0 : i32
    %c0_i32_2 = arith.constant 0 : i32
    return %arg0, %c0_i32, %c0_i32_0, %c0_i32_1 : i32, i32, i32, i32
  }
  func.func @transform_1(%arg0: i32) -> (i32, i32, i32) {
    %c0_i32 = arith.constant 0 : i32
    %c0_i32_0 = arith.constant 0 : i32
    %c0_i32_1 = arith.constant 0 : i32
    %c0_i32_2 = arith.constant 0 : i32
    return %c0_i32, %c0_i32_0, %c0_i32_1 : i32, i32, i32
  }
  func.func @transform_2(%arg0: i32) -> (i32, i32) {
    %c0_i32 = arith.constant 0 : i32
    %c0_i32_0 = arith.constant 0 : i32
    %c0_i32_1 = arith.constant 0 : i32
    return %c0_i32, %c0_i32_0 : i32, i32
  }
  func.func @transform_3(%arg0: i32) -> (i32, i32) {
    %c0_i32 = arith.constant 0 : i32
    %c0_i32_0 = arith.constant 0 : i32
    %c0_i32_1 = arith.constant 0 : i32
    return %c0_i32, %c0_i32_0 : i32, i32
  }
  func.func @transform_4(%arg0: i32) -> (i32, i32) {
    %c0_i32 = arith.constant 0 : i32
    %c0_i32_0 = arith.constant 0 : i32
    %c0_i32_1 = arith.constant 0 : i32
    return %c0_i32, %c0_i32_0 : i32, i32
  }
  func.func @transform_5(%arg0: i32) -> (i32, i32, i32, i32) {
    %c0_i32 = arith.constant 0 : i32
    %c0_i32_0 = arith.constant 0 : i32
    %c0_i32_1 = arith.constant 0 : i32
    %c0_i32_2 = arith.constant 0 : i32
    return %arg0, %c0_i32, %c0_i32_0, %c0_i32_1 : i32, i32, i32, i32
  }
}

module attributes {stable_mosaic.version = 11 : i64} {
  func.func @kernel(%arg0: i32, %arg1: memref<1x6x6x16xbf16, #tpu.memory_space<vmem>>, %arg2: memref<9x16x16xbf16, #tpu.memory_space<vmem>>, %arg3: memref<1x16xf32, #tpu.memory_space<vmem>>, %arg4: memref<1x16xf32, #tpu.memory_space<vmem>>, %arg5: memref<1x1xf32, #tpu.memory_space<vmem>>, %arg6: memref<1x4x4x1xf32, #tpu.memory_space<vmem>>) attributes {dimension_semantics = [#tpu.dimension_semantics<parallel>], iteration_bounds = array<i64: 2>, scalar_prefetch = 0 : i64, scratch_operands = 0 : i64, tpu.core_type = #tpu.core_type<tc>, window_params = [{transform_indices = @transform_0, window_bounds = array<i64: 1, 6, 6, 16>}, {pipeline_mode = #tpu.pipeline_mode<synchronous>, transform_indices = @transform_1, window_bounds = array<i64: 9, 16, 16>}, {pipeline_mode = #tpu.pipeline_mode<synchronous>, transform_indices = @transform_2, window_bounds = array<i64: 1, 16>}, {pipeline_mode = #tpu.pipeline_mode<synchronous>, transform_indices = @transform_3, window_bounds = array<i64: 1, 16>}, {pipeline_mode = #tpu.pipeline_mode<synchronous>, transform_indices = @transform_4, window_bounds = array<i64: 1, 1>}, {transform_indices = @transform_5, window_bounds = array<i64: 1, 4, 4, 1>}]} {
    %c0 = arith.constant 0 : index
    %c0_0 = arith.constant 0 : index
    %c0_1 = arith.constant 0 : index
    %c0_2 = arith.constant 0 : index
    %0 = vector.load %arg1[%c0, %c0_0, %c0_1, %c0_2] : memref<1x6x6x16xbf16, #tpu.memory_space<vmem>>, vector<1x6x6x16xbf16>
    %1 = vector.shape_cast %0 : vector<1x6x6x16xbf16> to vector<6x6x16xbf16>
    %cst = arith.constant 0.000000e+00 : f32
    %2 = vector.broadcast %cst : f32 to vector<16x16xf32>
    %3 = vector.extract_strided_slice %1 {offsets = [0, 0, 0], sizes = [4, 4, 16], strides = [1, 1, 1]} : vector<6x6x16xbf16> to vector<4x4x16xbf16>
    %4 = vector.shape_cast %3 : vector<4x4x16xbf16> to vector<16x16xbf16>
    %c0_3 = arith.constant 0 : index
    %c0_4 = arith.constant 0 : index
    %c0_5 = arith.constant 0 : index
    %5 = vector.load %arg2[%c0_3, %c0_4, %c0_5] : memref<9x16x16xbf16, #tpu.memory_space<vmem>>, vector<1x16x16xbf16>
    %6 = vector.shape_cast %5 : vector<1x16x16xbf16> to vector<16x16xbf16>
    %cst_6 = arith.constant dense<0.000000e+00> : vector<16x16xf32>
    %7 = tpu.matmul %4, %6, %cst_6 {dimension_numbers = #tpu.dot_dimension_numbers<[1], [0], [0], [1], [0, 0, 1, 1], [], []>} : vector<16x16xbf16>, vector<16x16xbf16>, vector<16x16xf32> -> vector<16x16xf32>
    %8 = arith.addf %2, %7 : vector<16x16xf32>
    %9 = vector.extract_strided_slice %1 {offsets = [0, 1, 0], sizes = [4, 4, 16], strides = [1, 1, 1]} : vector<6x6x16xbf16> to vector<4x4x16xbf16>
    %10 = vector.shape_cast %9 : vector<4x4x16xbf16> to vector<16x16xbf16>
    %c1 = arith.constant 1 : index
    %c0_7 = arith.constant 0 : index
    %c0_8 = arith.constant 0 : index
    %11 = vector.load %arg2[%c1, %c0_7, %c0_8] : memref<9x16x16xbf16, #tpu.memory_space<vmem>>, vector<1x16x16xbf16>
    %12 = vector.shape_cast %11 : vector<1x16x16xbf16> to vector<16x16xbf16>
    %cst_9 = arith.constant dense<0.000000e+00> : vector<16x16xf32>
    %13 = tpu.matmul %10, %12, %cst_9 {dimension_numbers = #tpu.dot_dimension_numbers<[1], [0], [0], [1], [0, 0, 1, 1], [], []>} : vector<16x16xbf16>, vector<16x16xbf16>, vector<16x16xf32> -> vector<16x16xf32>
    %14 = arith.addf %8, %13 : vector<16x16xf32>
    %15 = vector.extract_strided_slice %1 {offsets = [0, 2, 0], sizes = [4, 4, 16], strides = [1, 1, 1]} : vector<6x6x16xbf16> to vector<4x4x16xbf16>
    %16 = vector.shape_cast %15 : vector<4x4x16xbf16> to vector<16x16xbf16>
    %c2 = arith.constant 2 : index
    %c0_10 = arith.constant 0 : index
    %c0_11 = arith.constant 0 : index
    %17 = vector.load %arg2[%c2, %c0_10, %c0_11] : memref<9x16x16xbf16, #tpu.memory_space<vmem>>, vector<1x16x16xbf16>
    %18 = vector.shape_cast %17 : vector<1x16x16xbf16> to vector<16x16xbf16>
    %cst_12 = arith.constant dense<0.000000e+00> : vector<16x16xf32>
    %19 = tpu.matmul %16, %18, %cst_12 {dimension_numbers = #tpu.dot_dimension_numbers<[1], [0], [0], [1], [0, 0, 1, 1], [], []>} : vector<16x16xbf16>, vector<16x16xbf16>, vector<16x16xf32> -> vector<16x16xf32>
    %20 = arith.addf %14, %19 : vector<16x16xf32>
    %21 = vector.extract_strided_slice %1 {offsets = [1, 0, 0], sizes = [4, 4, 16], strides = [1, 1, 1]} : vector<6x6x16xbf16> to vector<4x4x16xbf16>
    %22 = vector.shape_cast %21 : vector<4x4x16xbf16> to vector<16x16xbf16>
    %c3 = arith.constant 3 : index
    %c0_13 = arith.constant 0 : index
    %c0_14 = arith.constant 0 : index
    %23 = vector.load %arg2[%c3, %c0_13, %c0_14] : memref<9x16x16xbf16, #tpu.memory_space<vmem>>, vector<1x16x16xbf16>
    %24 = vector.shape_cast %23 : vector<1x16x16xbf16> to vector<16x16xbf16>
    %cst_15 = arith.constant dense<0.000000e+00> : vector<16x16xf32>
    %25 = tpu.matmul %22, %24, %cst_15 {dimension_numbers = #tpu.dot_dimension_numbers<[1], [0], [0], [1], [0, 0, 1, 1], [], []>} : vector<16x16xbf16>, vector<16x16xbf16>, vector<16x16xf32> -> vector<16x16xf32>
    %26 = arith.addf %20, %25 : vector<16x16xf32>
    %27 = vector.extract_strided_slice %1 {offsets = [1, 1, 0], sizes = [4, 4, 16], strides = [1, 1, 1]} : vector<6x6x16xbf16> to vector<4x4x16xbf16>
    %28 = vector.shape_cast %27 : vector<4x4x16xbf16> to vector<16x16xbf16>
    %c4 = arith.constant 4 : index
    %c0_16 = arith.constant 0 : index
    %c0_17 = arith.constant 0 : index
    %29 = vector.load %arg2[%c4, %c0_16, %c0_17] : memref<9x16x16xbf16, #tpu.memory_space<vmem>>, vector<1x16x16xbf16>
    %30 = vector.shape_cast %29 : vector<1x16x16xbf16> to vector<16x16xbf16>
    %cst_18 = arith.constant dense<0.000000e+00> : vector<16x16xf32>
    %31 = tpu.matmul %28, %30, %cst_18 {dimension_numbers = #tpu.dot_dimension_numbers<[1], [0], [0], [1], [0, 0, 1, 1], [], []>} : vector<16x16xbf16>, vector<16x16xbf16>, vector<16x16xf32> -> vector<16x16xf32>
    %32 = arith.addf %26, %31 : vector<16x16xf32>
    %33 = vector.extract_strided_slice %1 {offsets = [1, 2, 0], sizes = [4, 4, 16], strides = [1, 1, 1]} : vector<6x6x16xbf16> to vector<4x4x16xbf16>
    %34 = vector.shape_cast %33 : vector<4x4x16xbf16> to vector<16x16xbf16>
    %c5 = arith.constant 5 : index
    %c0_19 = arith.constant 0 : index
    %c0_20 = arith.constant 0 : index
    %35 = vector.load %arg2[%c5, %c0_19, %c0_20] : memref<9x16x16xbf16, #tpu.memory_space<vmem>>, vector<1x16x16xbf16>
    %36 = vector.shape_cast %35 : vector<1x16x16xbf16> to vector<16x16xbf16>
    %cst_21 = arith.constant dense<0.000000e+00> : vector<16x16xf32>
    %37 = tpu.matmul %34, %36, %cst_21 {dimension_numbers = #tpu.dot_dimension_numbers<[1], [0], [0], [1], [0, 0, 1, 1], [], []>} : vector<16x16xbf16>, vector<16x16xbf16>, vector<16x16xf32> -> vector<16x16xf32>
    %38 = arith.addf %32, %37 : vector<16x16xf32>
    %39 = vector.extract_strided_slice %1 {offsets = [2, 0, 0], sizes = [4, 4, 16], strides = [1, 1, 1]} : vector<6x6x16xbf16> to vector<4x4x16xbf16>
    %40 = vector.shape_cast %39 : vector<4x4x16xbf16> to vector<16x16xbf16>
    %c6 = arith.constant 6 : index
    %c0_22 = arith.constant 0 : index
    %c0_23 = arith.constant 0 : index
    %41 = vector.load %arg2[%c6, %c0_22, %c0_23] : memref<9x16x16xbf16, #tpu.memory_space<vmem>>, vector<1x16x16xbf16>
    %42 = vector.shape_cast %41 : vector<1x16x16xbf16> to vector<16x16xbf16>
    %cst_24 = arith.constant dense<0.000000e+00> : vector<16x16xf32>
    %43 = tpu.matmul %40, %42, %cst_24 {dimension_numbers = #tpu.dot_dimension_numbers<[1], [0], [0], [1], [0, 0, 1, 1], [], []>} : vector<16x16xbf16>, vector<16x16xbf16>, vector<16x16xf32> -> vector<16x16xf32>
    %44 = arith.addf %38, %43 : vector<16x16xf32>
    %45 = vector.extract_strided_slice %1 {offsets = [2, 1, 0], sizes = [4, 4, 16], strides = [1, 1, 1]} : vector<6x6x16xbf16> to vector<4x4x16xbf16>
    %46 = vector.shape_cast %45 : vector<4x4x16xbf16> to vector<16x16xbf16>
    %c7 = arith.constant 7 : index
    %c0_25 = arith.constant 0 : index
    %c0_26 = arith.constant 0 : index
    %47 = vector.load %arg2[%c7, %c0_25, %c0_26] : memref<9x16x16xbf16, #tpu.memory_space<vmem>>, vector<1x16x16xbf16>
    %48 = vector.shape_cast %47 : vector<1x16x16xbf16> to vector<16x16xbf16>
    %cst_27 = arith.constant dense<0.000000e+00> : vector<16x16xf32>
    %49 = tpu.matmul %46, %48, %cst_27 {dimension_numbers = #tpu.dot_dimension_numbers<[1], [0], [0], [1], [0, 0, 1, 1], [], []>} : vector<16x16xbf16>, vector<16x16xbf16>, vector<16x16xf32> -> vector<16x16xf32>
    %50 = arith.addf %44, %49 : vector<16x16xf32>
    %51 = vector.extract_strided_slice %1 {offsets = [2, 2, 0], sizes = [4, 4, 16], strides = [1, 1, 1]} : vector<6x6x16xbf16> to vector<4x4x16xbf16>
    %52 = vector.shape_cast %51 : vector<4x4x16xbf16> to vector<16x16xbf16>
    %c8 = arith.constant 8 : index
    %c0_28 = arith.constant 0 : index
    %c0_29 = arith.constant 0 : index
    %53 = vector.load %arg2[%c8, %c0_28, %c0_29] : memref<9x16x16xbf16, #tpu.memory_space<vmem>>, vector<1x16x16xbf16>
    %54 = vector.shape_cast %53 : vector<1x16x16xbf16> to vector<16x16xbf16>
    %cst_30 = arith.constant dense<0.000000e+00> : vector<16x16xf32>
    %55 = tpu.matmul %52, %54, %cst_30 {dimension_numbers = #tpu.dot_dimension_numbers<[1], [0], [0], [1], [0, 0, 1, 1], [], []>} : vector<16x16xbf16>, vector<16x16xbf16>, vector<16x16xf32> -> vector<16x16xf32>
    %56 = arith.addf %50, %55 : vector<16x16xf32>
    %c0_31 = arith.constant 0 : index
    %c0_32 = arith.constant 0 : index
    %57 = vector.load %arg3[%c0_31, %c0_32] : memref<1x16xf32, #tpu.memory_space<vmem>>, vector<1x16xf32>
    %58 = vector.broadcast %57 : vector<1x16xf32> to vector<16x16xf32>
    %59 = arith.addf %56, %58 : vector<16x16xf32>
    %cst_33 = arith.constant 0.000000e+00 : f32
    %60 = vector.broadcast %cst_33 : f32 to vector<16x16xf32>
    %61 = arith.maximumf %59, %60 : vector<16x16xf32>
    %c0_34 = arith.constant 0 : index
    %c0_35 = arith.constant 0 : index
    %62 = vector.load %arg4[%c0_34, %c0_35] : memref<1x16xf32, #tpu.memory_space<vmem>>, vector<1x16xf32>
    %63 = vector.broadcast %62 : vector<1x16xf32> to vector<16x16xf32>
    %64 = arith.mulf %61, %63 : vector<16x16xf32>
    %cst_36 = arith.constant dense<0.000000e+00> : vector<16xf32>
    %65 = vector.multi_reduction <add>, %64, %cst_36 [1] : vector<16x16xf32> to vector<16xf32>
    %66 = vector.shape_cast %65 : vector<16xf32> to vector<16x1xf32>
    %c0_37 = arith.constant 0 : index
    %c0_38 = arith.constant 0 : index
    %67 = vector.load %arg5[%c0_37, %c0_38] : memref<1x1xf32, #tpu.memory_space<vmem>>, vector<1x1xf32>
    %68 = vector.broadcast %67 : vector<1x1xf32> to vector<16x1xf32>
    %69 = arith.addf %66, %68 : vector<16x1xf32>
    %cst_39 = arith.constant 0.000000e+00 : f32
    %70 = vector.broadcast %cst_39 : f32 to vector<16x1xf32>
    %71 = arith.subf %70, %69 : vector<16x1xf32>
    %72 = math.exp %71 : vector<16x1xf32>
    %cst_40 = arith.constant 1.000000e+00 : f32
    %73 = vector.broadcast %cst_40 : f32 to vector<16x1xf32>
    %74 = arith.addf %73, %72 : vector<16x1xf32>
    %cst_41 = arith.constant 1.000000e+00 : f32
    %75 = vector.broadcast %cst_41 : f32 to vector<16x1xf32>
    %76 = arith.divf %75, %74 : vector<16x1xf32>
    %77 = vector.shape_cast %76 : vector<16x1xf32> to vector<4x4x1xf32>
    %c0_42 = arith.constant 0 : index
    %c0_43 = arith.constant 0 : index
    %c0_44 = arith.constant 0 : index
    %c0_45 = arith.constant 0 : index
    %78 = vector.load %arg6[%c0_42, %c0_43, %c0_44, %c0_45] : memref<1x4x4x1xf32, #tpu.memory_space<vmem>>, vector<1x4x4x1xf32>
    %79 = vector.shape_cast %78 : vector<1x4x4x1xf32> to vector<4x4x1xf32>
    %80 = vector.shape_cast %77 : vector<4x4x1xf32> to vector<1x4x4x1xf32>
    tpu.vector_store %arg6[%c0_42, %c0_43, %c0_44, %c0_45], %80 {strides = array<i32>} : memref<1x4x4x1xf32, #tpu.memory_space<vmem>>, vector<1x4x4x1xf32>,
    return
  }
  func.func @transform_0(%arg0: i32) -> (i32, i32, i32, i32) {
    %c0_i32 = arith.constant 0 : i32
    %c0_i32_0 = arith.constant 0 : i32
    %c0_i32_1 = arith.constant 0 : i32
    %c0_i32_2 = arith.constant 0 : i32
    return %arg0, %c0_i32, %c0_i32_0, %c0_i32_1 : i32, i32, i32, i32
  }
  func.func @transform_1(%arg0: i32) -> (i32, i32, i32) {
    %c0_i32 = arith.constant 0 : i32
    %c0_i32_0 = arith.constant 0 : i32
    %c0_i32_1 = arith.constant 0 : i32
    %c0_i32_2 = arith.constant 0 : i32
    return %c0_i32, %c0_i32_0, %c0_i32_1 : i32, i32, i32
  }
  func.func @transform_2(%arg0: i32) -> (i32, i32) {
    %c0_i32 = arith.constant 0 : i32
    %c0_i32_0 = arith.constant 0 : i32
    %c0_i32_1 = arith.constant 0 : i32
    return %c0_i32, %c0_i32_0 : i32, i32
  }
  func.func @transform_3(%arg0: i32) -> (i32, i32) {
    %c0_i32 = arith.constant 0 : i32
    %c0_i32_0 = arith.constant 0 : i32
    %c0_i32_1 = arith.constant 0 : i32
    return %c0_i32, %c0_i32_0 : i32, i32
  }
  func.func @transform_4(%arg0: i32) -> (i32, i32) {
    %c0_i32 = arith.constant 0 : i32
    %c0_i32_0 = arith.constant 0 : i32
    %c0_i32_1 = arith.constant 0 : i32
    return %c0_i32, %c0_i32_0 : i32, i32
  }
  func.func @transform_5(%arg0: i32) -> (i32, i32, i32, i32) {
    %c0_i32 = arith.constant 0 : i32
    %c0_i32_0 = arith.constant 0 : i32
    %c0_i32_1 = arith.constant 0 : i32
    %c0_i32_2 = arith.constant 0 : i32
    return %arg0, %c0_i32, %c0_i32_0, %c0_i32_1 : i32, i32, i32, i32
  }
}

module attributes {stable_mosaic.version = 11 : i64} {
  func.func @_upsample_kernel(%arg0: i32, %arg1: memref<1x4x4xf32, #tpu.memory_space<vmem>>, %arg2: memref<16x4xf32, #tpu.memory_space<vmem>>, %arg3: memref<4x16xf32, #tpu.memory_space<vmem>>, %arg4: memref<1x16x16xf32, #tpu.memory_space<vmem>>) attributes {dimension_semantics = [#tpu.dimension_semantics<parallel>], iteration_bounds = array<i64: 2>, scalar_prefetch = 0 : i64, scratch_operands = 0 : i64, tpu.core_type = #tpu.core_type<tc>, window_params = [{transform_indices = @transform_0, window_bounds = array<i64: 1, 4, 4>}, {pipeline_mode = #tpu.pipeline_mode<synchronous>, transform_indices = @transform_1, window_bounds = array<i64: 16, 4>}, {pipeline_mode = #tpu.pipeline_mode<synchronous>, transform_indices = @transform_2, window_bounds = array<i64: 4, 16>}, {transform_indices = @transform_3, window_bounds = array<i64: 1, 16, 16>}]} {
    %c0 = arith.constant 0 : index
    %c0_0 = arith.constant 0 : index
    %c0_1 = arith.constant 0 : index
    %0 = vector.load %arg1[%c0, %c0_0, %c0_1] : memref<1x4x4xf32, #tpu.memory_space<vmem>>, vector<1x4x4xf32>
    %1 = vector.shape_cast %0 : vector<1x4x4xf32> to vector<4x4xf32>
    %c0_2 = arith.constant 0 : index
    %c0_3 = arith.constant 0 : index
    %2 = vector.load %arg3[%c0_2, %c0_3] : memref<4x16xf32, #tpu.memory_space<vmem>>, vector<4x16xf32>
    %cst = arith.constant dense<0.000000e+00> : vector<4x16xf32>
    %3 = tpu.matmul %1, %2, %cst {dimension_numbers = #tpu.dot_dimension_numbers<[1], [0], [0], [1], [0, 0, 1, 1], [], []>} : vector<4x4xf32>, vector<4x16xf32>, vector<4x16xf32> -> vector<4x16xf32>
    %c0_4 = arith.constant 0 : index
    %c0_5 = arith.constant 0 : index
    %4 = vector.load %arg2[%c0_4, %c0_5] : memref<16x4xf32, #tpu.memory_space<vmem>>, vector<16x4xf32>
    %cst_6 = arith.constant dense<0.000000e+00> : vector<16x16xf32>
    %5 = tpu.matmul %4, %3, %cst_6 {dimension_numbers = #tpu.dot_dimension_numbers<[1], [0], [0], [1], [0, 0, 1, 1], [], []>} : vector<16x4xf32>, vector<4x16xf32>, vector<16x16xf32> -> vector<16x16xf32>
    %c0_7 = arith.constant 0 : index
    %c0_8 = arith.constant 0 : index
    %c0_9 = arith.constant 0 : index
    %6 = vector.load %arg4[%c0_7, %c0_8, %c0_9] : memref<1x16x16xf32, #tpu.memory_space<vmem>>, vector<1x16x16xf32>
    %7 = vector.shape_cast %6 : vector<1x16x16xf32> to vector<16x16xf32>
    %8 = vector.shape_cast %5 : vector<16x16xf32> to vector<1x16x16xf32>
    tpu.vector_store %arg4[%c0_7, %c0_8, %c0_9], %8 {strides = array<i32>} : memref<1x16x16xf32, #tpu.memory_space<vmem>>, vector<1x16x16xf32>,
    return
  }
  func.func @transform_0(%arg0: i32) -> (i32, i32, i32) {
    %c0_i32 = arith.constant 0 : i32
    %c0_i32_0 = arith.constant 0 : i32
    %c0_i32_1 = arith.constant 0 : i32
    return %arg0, %c0_i32, %c0_i32_0 : i32, i32, i32
  }
  func.func @transform_1(%arg0: i32) -> (i32, i32) {
    %c0_i32 = arith.constant 0 : i32
    %c0_i32_0 = arith.constant 0 : i32
    %c0_i32_1 = arith.constant 0 : i32
    return %c0_i32, %c0_i32_0 : i32, i32
  }
  func.func @transform_2(%arg0: i32) -> (i32, i32) {
    %c0_i32 = arith.constant 0 : i32
    %c0_i32_0 = arith.constant 0 : i32
    %c0_i32_1 = arith.constant 0 : i32
    return %c0_i32, %c0_i32_0 : i32, i32
  }
  func.func @transform_3(%arg0: i32) -> (i32, i32, i32) {
    %c0_i32 = arith.constant 0 : i32
    %c0_i32_0 = arith.constant 0 : i32
    %c0_i32_1 = arith.constant 0 : i32
    return %arg0, %c0_i32, %c0_i32_0 : i32, i32, i32
  }
}

</mosaic_0001>

<llo_original>
// kernel: model_forward.4
$region0: #{model_forward.4}
  #allocation0 [shape = 'u32[]', space=smem, size = 0x4, offset = 0x4, fixed_abs, tag = 'smem constant byte address 0x4 - core index']
  #allocation1 [shape = 'u32[144,128]{1,0:T(1,128)}', space=vmem, size = 0x12000, scoped, tag = 'internal scratch']
  %s0 = inlined_call_operand.vmem [shape: bf16[2,9,9,16], index: 0, kind: input, shape index: {}]
  %s1 = inlined_call_operand.vmem [shape: bf16[4,16,8], index: 1, kind: input, shape index: {}]
  %s2 = inlined_call_operand.vmem [shape: f32[1,8], index: 2, kind: input, shape index: {}]
  %s3 = inlined_call_operand.vmem [shape: bf16[2,8,8,8], index: 3, kind: output, shape index: {}]
  %s4 = sld [smem:[#allocation0]]
  $region45: #{model_forward.4} parent=0
    _
  %s6 = ssub.s32 1, %s4
  %s7 = scalar_select 0, %s6, %s4
  loop: start=0, step=1, limit=4
  $region2: #{model_forward.4} parent=0 // loop_pre_header
    _
  $region3: #{model_forward.4} parent=0 // loop_header
    %s9 = sphi 0, %s13
    %p10 = scmp.ge.s32.totalorder %s9, 4
    %s19 = sphi 0, %s21
    %s22 = sphi 0, %s19
    %s23 = sphi 0, %s22
    %s39 = sphi 0, %s23
    %s43 = sphi 0, %s43
    %s45 = sphi 0, %s43
    %s46 = sphi 0, %s45
    %s60 = sphi 0, %s46
    %s64 = sphi 0, %s64
    %s66 = sphi 0, %s64
    %s67 = sphi 0, %s66
    %s81 = sphi 0, %s67
    %s87 = sphi 0, %s89
    %s90 = sphi 0, %s87
    %s91 = sphi 0, %s90
    %s107 = sphi 0, %s91
  $region4: #{model_forward.4} parent=0 // loop_header_branch
    %12 = sbr.rel (%p10) target = $region8
  $region5: #{model_forward.4} parent=0 // loop_body
    %s14 = ssub.s32 %s9, 1
    %s15 = ssub.s32 %s9, 2
    %s16 = sadd.s32 %s9, 1
    %s17 = ssub.s32 %s9, %s16
    %p18 = scmp.eq.s32.totalorder %s17, 0
    %s20 = sadd.s32 %s19, 1
    %s21 = scalar_select %p18, %s19, %s20
    %p24 = pneg %p18
    %p25 = scmp.eq.s32.totalorder %s9, 1
    %p26 = por %p24, %p25
    %p27 = scmp.ne.s32.totalorder %s19, %s22
    %p28 = scmp.eq.s32.totalorder %s9, 0
    %p29 = por %p27, %p28
    %p30 = scmp.ne.s32.totalorder %s19, %s22
    %p31 = scmp.eq.s32.totalorder %s14, 1
    %p32 = por %p30, %p31
    %p33 = scmp.ne.s32.totalorder %s22, %s23
    %p34 = scmp.eq.s32.totalorder %s14, 0
    %p35 = por %p33, %p34
    %p36 = scmp.ne.s32.totalorder %s22, %s23
    %p37 = scmp.eq.s32.totalorder %s15, 1
    %p38 = por %p36, %p37
    %p40 = scmp.ne.s32.totalorder %s23, %s39
    %p41 = scmp.eq.s32.totalorder %s15, 0
    %p42 = por %p40, %p41
    %s44 = sadd.s32 %s43, 1
    %p47 = scmp.eq.s32.totalorder %s9, 1
    %p48 = scmp.ne.s32.totalorder %s43, %s45
    %p49 = scmp.eq.s32.totalorder %s9, 0
    %p50 = por %p48, %p49
    %p51 = scmp.ne.s32.totalorder %s43, %s45
    %p52 = scmp.eq.s32.totalorder %s14, 1
    %p53 = por %p51, %p52
    %p54 = scmp.ne.s32.totalorder %s45, %s46
    %p55 = scmp.eq.s32.totalorder %s14, 0
    %p56 = por %p54, %p55
    %p57 = scmp.ne.s32.totalorder %s45, %s46
    %p58 = scmp.eq.s32.totalorder %s15, 1
    %p59 = por %p57, %p58
    %p61 = scmp.ne.s32.totalorder %s46, %s60
    %p62 = scmp.eq.s32.totalorder %s15, 0
    %p63 = por %p61, %p62
    %s65 = sadd.s32 %s64, 1
    %p68 = scmp.eq.s32.totalorder %s9, 1
    %p69 = scmp.ne.s32.totalorder %s64, %s66
    %p70 = scmp.eq.s32.totalorder %s9, 0
    %p71 = por %p69, %p70
    %p72 = scmp.ne.s32.totalorder %s64, %s66
    %p73 = scmp.eq.s32.totalorder %s14, 1
    %p74 = por %p72, %p73
    %p75 = scmp.ne.s32.totalorder %s66, %s67
    %p76 = scmp.eq.s32.totalorder %s14, 0
    %p77 = por %p75, %p76
    %p78 = scmp.ne.s32.totalorder %s66, %s67
    %p79 = scmp.eq.s32.totalorder %s15, 1
    %p80 = por %p78, %p79
    %p82 = scmp.ne.s32.totalorder %s67, %s81
    %p83 = scmp.eq.s32.totalorder %s15, 0
    %p84 = por %p82, %p83
    %s85 = ssub.s32 %s9, %s16
    %p86 = scmp.eq.s32.totalorder %s85, 0
    %s88 = sadd.s32 %s87, 1
    %s89 = scalar_select %p86, %s87, %s88
    %p92 = pneg %p86
    %p93 = scmp.eq.s32.totalorder %s9, 1
    %p94 = por %p92, %p93
    %p95 = scmp.ne.s32.totalorder %s87, %s90
    %p96 = scmp.eq.s32.totalorder %s9, 0
    %p97 = por %p95, %p96
    %p98 = scmp.ne.s32.totalorder %s87, %s90
    %p99 = scmp.eq.s32.totalorder %s14, 1
    %p100 = por %p98, %p99
    %p101 = scmp.ne.s32.totalorder %s90, %s91
    %p102 = scmp.eq.s32.totalorder %s14, 0
    %p103 = por %p101, %p102
    %p104 = scmp.ne.s32.totalorder %s90, %s91
    %p105 = scmp.eq.s32.totalorder %s15, 1
    %p106 = por %p104, %p105
    %p108 = scmp.ne.s32.totalorder %s91, %s107
    %p109 = scmp.eq.s32.totalorder %s15, 0
    %p110 = por %p108, %p109
    %p111 = scmp.le.s32.totalorder 1, %s9
    %p112 = scmp.lt.s32.totalorder %s9, 3
    %p113 = pnand %p111, %p112
    %p114 = pneg %p113
    // Predicated region
    $region9: #{model_forward.4} parent=5 // pred_check
      _
    $region10: #{model_forward.4} parent=5 // pred_check_branch
      %116 = sbr.rel (%p113) target = $region12
    $region11: #{model_forward.4} parent=5 // pred_region
      %s117 = ssub.s32 %s9, 1
      // Predicated region
      $region13: #{model_forward.4} parent=11 // pred_check
        %p118 = pneg %p56
      $region14: #{model_forward.4} parent=11 // pred_check_branch
        %120 = sbr.rel (%p118) target = $region16
      $region15: #{model_forward.4} parent=11 // pred_region
        _
      $region16: #{model_forward.4} parent=11 // pred_fallthru
        _
      // Predicated region
      $region17: #{model_forward.4} parent=11 // pred_check
        %p121 = pneg %p77
      $region18: #{model_forward.4} parent=11 // pred_check_branch
        %123 = sbr.rel (%p121) target = $region20
      $region19: #{model_forward.4} parent=11 // pred_region
        _
      $region20: #{model_forward.4} parent=11 // pred_fallthru
        _
    $region12: #{model_forward.4} parent=5 // pred_fallthru
      _
    %p124 = scmp.lt.s32.totalorder %s9, 2
    // Predicated region
    $region21: #{model_forward.4} parent=5 // pred_check
      %p125 = pneg %p124
    $region22: #{model_forward.4} parent=5 // pred_check_branch
      %127 = sbr.rel (%p125) target = $region24
    $region23: #{model_forward.4} parent=5 // pred_region
      // Predicated region
      $region25: #{model_forward.4} parent=23 // pred_check
        %p128 = pneg %p29
      $region26: #{model_forward.4} parent=23 // pred_check_branch
        %130 = sbr.rel (%p128) target = $region28
      $region27: #{model_forward.4} parent=23 // pred_region
        %p131 = scmp.lt.s32.totalorder %s9, 1
        %s132 = scalar_select %p131, %s9, 1
        %s133 = smul.addr %s132, 18
        %s134 = smul.addr %s133, 4
        %s135 = scalar_lea.vmem %s0, %s134
      $region28: #{model_forward.4} parent=23 // pred_fallthru
        _
    $region24: #{model_forward.4} parent=5 // pred_fallthru
      _
    %p136 = scmp.le.s32.totalorder 1, %s9
    %p137 = scmp.lt.s32.totalorder %s9, 3
    %p138 = pnand %p136, %p137
    %p139 = pneg %p138
    // Predicated region
    $region29: #{model_forward.4} parent=5 // pred_check
      _
    $region30: #{model_forward.4} parent=5 // pred_check_branch
      %141 = sbr.rel (%p138) target = $region32
    $region31: #{model_forward.4} parent=5 // pred_region
      %s142 = ssub.s32 %s9, 1
      %p143 = scmp.lt.s32.totalorder %s14, 1
      %s144 = scalar_select %p143, %s14, 1
      %s145 = smul.addr %s144, 18
      %s146 = smul.addr %s145, 4
      %s147 = scalar_lea.vmem %s0, %s146
      %p148 = pneg %p35
      %p149 = pneg %p32
      %p150 = pneg %p56
      %p151 = pneg %p53
      %p152 = pneg %p77
      %p153 = pneg %p74
      %p154 = pneg %p103
      %p155 = pneg %p100
      %p156 = scmp.lt.s32.totalorder %s14, 1
      %s157 = scalar_select %p156, %s14, 1
      %s158 = smul.addr %s157, 8
      %s159 = smul.addr %s158, 4
      %s160 = scalar_lea.vmem %s3, %s159
      %p161 = scmp.lt.s32.totalorder %s14, 1
      %s162 = scalar_select %p161, %s14, 1
      %s163 = smul.addr %s162, 18
      %s164 = smul.addr %s163, 4
      %s165 = scalar_lea.vmem %s0, %s164
      %p166 = scmp.lt.s32.totalorder %s14, 1
      %s167 = scalar_select %p166, %s14, 1
      %s168 = smul.addr %s167, 8
      %s169 = smul.addr %s168, 4
      %s170 = scalar_lea.vmem %s3, %s169
      %v172 = vld [vmem:[%s165] sm:$0xf]
      %v173 = vld [vmem:[%s165 + $0x4] sm:$0x1]
      %v174 = vld [vmem:[%s165 + $0x8] sm:$0xf]
      %v175 = vld [vmem:[%s165 + $0xc] sm:$0x1]
      %v176 = vld [vmem:[%s165 + $0x10] sm:$0xf]
      %v177 = vld [vmem:[%s165 + $0x14] sm:$0x1]
      %v178 = vld [vmem:[%s165 + $0x18] sm:$0xf]
      %v179 = vld [vmem:[%s165 + $0x1c] sm:$0x1]
      %v180 = vld [vmem:[%s165 + $0x20] sm:$0xf]
      %v181 = vld [vmem:[%s165 + $0x24] sm:$0x1]
      %v182 = vld [vmem:[%s165 + $0x28] sm:$0xf]
      %v183 = vld [vmem:[%s165 + $0x2c] sm:$0x1]
      %v184 = vld [vmem:[%s165 + $0x30] sm:$0xf]
      %v185 = vld [vmem:[%s165 + $0x34] sm:$0x1]
      %v186 = vld [vmem:[%s165 + $0x38] sm:$0xf]
      %v187 = vld [vmem:[%s165 + $0x3c] sm:$0x1]
      %v188 = vld [vmem:[%s165 + $0x40] sm:$0xf]
      %v189 = vld [vmem:[%s165 + $0x44] sm:$0x1]
      %v190 = vld [vmem:[%s1] sm:$0xf]
      %v191 = vld [vmem:[%s1 + $0x4] sm:$0xf]
      %vm192 = vsmask.f32 3328
      %vm193 = vsmask.f32 7440
      %vm194 = vmor %vm192, %vm193
      %v196 = vshrl.u32 %v172, 16
      %v198 = vrot.slane %v196, 4
      %v199 = vshll.u32 %v172, 16
      %v201 = vrot.slane %v199, 5
      %v202 = vor.u32 %v198, %v201
      %v203 = vrot.slane %v202, 4
      %v205 = vshll.u32 %v173, 16
      %v207 = vrot.slane %v205, 5
      %v208 = vsel %vm194, %v203, %v207
      %v210 = vshrl.u32 %v174, 16
      %v212 = vrot.slane %v210, 4
      %v213 = vshll.u32 %v174, 16
      %v215 = vrot.slane %v213, 5
      %v216 = vor.u32 %v212, %v215
      %v217 = vrot.slane %v216, 4
      %v219 = vshll.u32 %v175, 16
      %v221 = vrot.slane %v219, 5
      %v222 = vsel %vm194, %v217, %v221
      %v224 = vshrl.u32 %v176, 16
      %v226 = vrot.slane %v224, 4
      %v227 = vshll.u32 %v176, 16
      %v229 = vrot.slane %v227, 5
      %v230 = vor.u32 %v226, %v229
      %v231 = vrot.slane %v230, 4
      %v233 = vshll.u32 %v177, 16
      %v235 = vrot.slane %v233, 5
      %v236 = vsel %vm194, %v231, %v235
      %v238 = vshrl.u32 %v178, 16
      %v240 = vrot.slane %v238, 4
      %v241 = vshll.u32 %v178, 16
      %v243 = vrot.slane %v241, 5
      %v244 = vor.u32 %v240, %v243
      %v245 = vrot.slane %v244, 4
      %v247 = vshll.u32 %v179, 16
      %v249 = vrot.slane %v247, 5
      %v250 = vsel %vm194, %v245, %v249
      %v252 = vshrl.u32 %v180, 16
      %v254 = vrot.slane %v252, 4
      %v255 = vshll.u32 %v180, 16
      %v257 = vrot.slane %v255, 5
      %v258 = vor.u32 %v254, %v257
      %v259 = vrot.slane %v258, 4
      %v261 = vshll.u32 %v181, 16
      %v263 = vrot.slane %v261, 5
      %v264 = vsel %vm194, %v259, %v263
      %v266 = vshrl.u32 %v182, 16
      %v268 = vrot.slane %v266, 4
      %v269 = vshll.u32 %v182, 16
      %v271 = vrot.slane %v269, 5
      %v272 = vor.u32 %v268, %v271
      %v273 = vrot.slane %v272, 4
      %v275 = vshll.u32 %v183, 16
      %v277 = vrot.slane %v275, 5
      %v278 = vsel %vm194, %v273, %v277
      %v280 = vshrl.u32 %v184, 16
      %v282 = vrot.slane %v280, 4
      %v283 = vshll.u32 %v184, 16
      %v285 = vrot.slane %v283, 5
      %v286 = vor.u32 %v282, %v285
      %v287 = vrot.slane %v286, 4
      %v289 = vshll.u32 %v185, 16
      %v291 = vrot.slane %v289, 5
      %v292 = vsel %vm194, %v287, %v291
      %v294 = vshrl.u32 %v186, 16
      %v296 = vrot.slane %v294, 4
      %v297 = vshll.u32 %v186, 16
      %v299 = vrot.slane %v297, 5
      %v300 = vor.u32 %v296, %v299
      %v301 = vrot.slane %v300, 4
      %v303 = vshll.u32 %v187, 16
      %v305 = vrot.slane %v303, 5
      %v306 = vsel %vm194, %v301, %v305
      %s307 = scalar_lea.vmem %s1, 8
      %v308 = vld [vmem:[%s307] sm:$0xf]
      %v309 = vld [vmem:[%s307 + $0x4] sm:$0xf]
      %v310 = vunpack.c.l.b16 %v208
      %v311 = vunpack.c.l.b16 %v222
      %v312 = vunpack.c.l.b16 %v236
      %v313 = vunpack.c.l.b16 %v250
      %v314 = vunpack.c.l.b16 %v264
      %v315 = vunpack.c.l.b16 %v278
      %v316 = vunpack.c.l.b16 %v292
      %v317 = vunpack.c.l.b16 %v306
      %v318 = vpack.c.b16 %v311, %v310
      %v319 = vpack.c.b16 %v313, %v312
      %v320 = vpack.c.b16 %v315, %v314
      %v321 = vpack.c.b16 %v317, %v316
      %v324 = vunpack.c.l.b16 %v308
      %v325 = vunpack.c.l.b16 %v309
      %v326 = vpack.c.b16 %v325, %v324
      %vm328 = vcmask 130048
      %v330 = vsel %vm328, %v318, 0
      %v333 = vsel %vm328, %v319, 0
      %v336 = vsel %vm328, %v320, 0
      %v339 = vsel %vm328, %v321, 0
      %341 = vmatprep.subr.bf16.mxu0 0
      %342 = vmatpush1.bf16.msra.mxu0 0
      %343 = vmatprep.subr.bf16.mxu0 0
      %344 = vmatpush1.bf16.msra.mxu0 0
      %345 = vmatprep.subr.bf16.mxu0 0
      %346 = vmatpush1.bf16.msra.mxu0 0
      %347 = vmatprep.subr.bf16.mxu0 0
      %348 = vmatpush1.bf16.msra.mxu0 0
      %349 = vmatprep.subr.bf16.mxu0 0
      %350 = vmatpush1.bf16.msra.mxu0 0
      %351 = vmatprep.subr.bf16.mxu0 0
      %352 = vmatpush1.bf16.msra.mxu0 0
      %353 = vmatprep.subr.bf16.mxu0 0
      %354 = vmatpush1.bf16.msra.mxu0 0
      %355 = vmatprep.subr.bf16.mxu0 0
      %356 = vmatpush1.bf16.msra.mxu0 %v326
      %357 = vmatprep.subr.bf16.mxu0 0
      %358 = vmatpush2.bf16.msra.mxu0 0
      %359 = vmatprep.subr.bf16.mxu0 0
      %360 = vmatpush2.bf16.msra.mxu0 0
      %361 = vmatprep.subr.bf16.mxu0 0
      %362 = vmatpush2.bf16.msra.mxu0 0
      %363 = vmatprep.subr.bf16.mxu0 0
      %364 = vmatpush2.bf16.msra.mxu0 0
      %365 = vmatprep.subr.bf16.mxu0 0
      %366 = vmatpush2.bf16.msra.mxu0 0
      %367 = vmatprep.subr.bf16.mxu0 0
      %368 = vmatpush2.bf16.msra.mxu0 0
      %369 = vmatprep.subr.bf16.mxu0 0
      %370 = vmatpush2.bf16.msra.mxu0 0
      %371 = vmatprep.subr.bf16.mxu0 0
      %372 = vmatpush2.bf16.msra.mxu0 0
      %373 = vmatprep.mubr.bf16.mxu0 0
      %374 = vmatmul.mubr.bf16.gmra.mxu0 %v330
      %v375 = vpop.f32.mrf.mxu0
      %v376 = vadd.f32 0.0, %v375
      %v377 = vpop.f32.mrf.mxu0
      %v378 = vpop.f32.mrf.mxu0
      %v379 = vadd.f32 0.0, %v378
      %v380 = vpop.f32.mrf.mxu0
      %381 = vmatprep.mubr.bf16.mxu0 0
      %382 = vmatmul.mubr.bf16.gmra.mxu0 %v333
      %v383 = vpop.f32.mrf.mxu0
      %v384 = vadd.f32 0.0, %v383
      %v385 = vpop.f32.mrf.mxu0
      %v386 = vpop.f32.mrf.mxu0
      %v387 = vadd.f32 0.0, %v386
      %v388 = vpop.f32.mrf.mxu0
      %389 = vmatprep.mubr.bf16.mxu0 0
      %390 = vmatmul.mubr.bf16.gmra.mxu0 %v336
      %v391 = vpop.f32.mrf.mxu0
      %v392 = vadd.f32 0.0, %v391
      %v393 = vpop.f32.mrf.mxu0
      %v394 = vpop.f32.mrf.mxu0
      %v395 = vadd.f32 0.0, %v394
      %v396 = vpop.f32.mrf.mxu0
      %397 = vmatprep.mubr.bf16.mxu0 0
      %398 = vmatmul.mubr.bf16.gmra.mxu0 %v339
      %v399 = vpop.f32.mrf.mxu0
      %v400 = vadd.f32 0.0, %v399
      %v401 = vpop.f32.mrf.mxu0
      %v402 = vpop.f32.mrf.mxu0
      %v403 = vadd.f32 0.0, %v402
      %v404 = vpop.f32.mrf.mxu0
      %405 = vdwg.mxu0
      %v414 = vunpack.c.l.b16 %v172
      %v415 = vunpack.c.l.b16 %v174
      %v416 = vunpack.c.l.b16 %v176
      %v417 = vunpack.c.l.b16 %v178
      %v418 = vunpack.c.l.b16 %v180
      %v419 = vunpack.c.l.b16 %v182
      %v420 = vunpack.c.l.b16 %v184
      %v421 = vunpack.c.l.b16 %v186
      %v422 = vpack.c.b16 %v415, %v414
      %v423 = vpack.c.b16 %v417, %v416
      %v424 = vpack.c.b16 %v419, %v418
      %v425 = vpack.c.b16 %v421, %v420
      %v428 = vunpack.c.l.b16 %v190
      %v429 = vunpack.c.l.b16 %v191
      %v430 = vpack.c.b16 %v429, %v428
      %v433 = vsel %vm328, %v422, 0
      %v436 = vsel %vm328, %v423, 0
      %v439 = vsel %vm328, %v424, 0
      %v442 = vsel %vm328, %v425, 0
      %444 = vmatprep.subr.bf16.mxu0 0
      %445 = vmatpush1.bf16.msra.mxu0 0
      %446 = vmatprep.subr.bf16.mxu0 0
      %447 = vmatpush1.bf16.msra.mxu0 0
      %448 = vmatprep.subr.bf16.mxu0 0
      %449 = vmatpush1.bf16.msra.mxu0 0
      %450 = vmatprep.subr.bf16.mxu0 0
      %451 = vmatpush1.bf16.msra.mxu0 0
      %452 = vmatprep.subr.bf16.mxu0 0
      %453 = vmatpush1.bf16.msra.mxu0 0
      %454 = vmatprep.subr.bf16.mxu0 0
      %455 = vmatpush1.bf16.msra.mxu0 0
      %456 = vmatprep.subr.bf16.mxu0 0
      %457 = vmatpush1.bf16.msra.mxu0 0
      %458 = vmatprep.subr.bf16.mxu0 0
      %459 = vmatpush1.bf16.msra.mxu0 %v430
      %460 = vmatprep.subr.bf16.mxu0 0
      %461 = vmatpush2.bf16.msra.mxu0 0
      %462 = vmatprep.subr.bf16.mxu0 0
      %463 = vmatpush2.bf16.msra.mxu0 0
      %464 = vmatprep.subr.bf16.mxu0 0
      %465 = vmatpush2.bf16.msra.mxu0 0
      %466 = vmatprep.subr.bf16.mxu0 0
      %467 = vmatpush2.bf16.msra.mxu0 0
      %468 = vmatprep.subr.bf16.mxu0 0
      %469 = vmatpush2.bf16.msra.mxu0 0
      %470 = vmatprep.subr.bf16.mxu0 0
      %471 = vmatpush2.bf16.msra.mxu0 0
      %472 = vmatprep.subr.bf16.mxu0 0
      %473 = vmatpush2.bf16.msra.mxu0 0
      %474 = vmatprep.subr.bf16.mxu0 0
      %475 = vmatpush2.bf16.msra.mxu0 0
      %476 = vmatprep.mubr.bf16.mxu0 0
      %477 = vmatmul.mubr.bf16.gmra.mxu0 %v433
      %v478 = vpop.f32.mrf.mxu0
      %v479 = vadd.f32 %v376, %v478
      %v480 = vpop.f32.mrf.mxu0
      %v481 = vpop.f32.mrf.mxu0
      %v482 = vadd.f32 %v379, %v481
      %v483 = vpop.f32.mrf.mxu0
      %484 = vmatprep.mubr.bf16.mxu0 0
      %485 = vmatmul.mubr.bf16.gmra.mxu0 %v436
      %v486 = vpop.f32.mrf.mxu0
      %v487 = vadd.f32 %v384, %v486
      %v488 = vpop.f32.mrf.mxu0
      %v489 = vpop.f32.mrf.mxu0
      %v490 = vadd.f32 %v387, %v489
      %v491 = vpop.f32.mrf.mxu0
      %492 = vmatprep.mubr.bf16.mxu0 0
      %493 = vmatmul.mubr.bf16.gmra.mxu0 %v439
      %v494 = vpop.f32.mrf.mxu0
      %v495 = vadd.f32 %v392, %v494
      %v496 = vpop.f32.mrf.mxu0
      %v497 = vpop.f32.mrf.mxu0
      %v498 = vadd.f32 %v395, %v497
      %v499 = vpop.f32.mrf.mxu0
      %500 = vmatprep.mubr.bf16.mxu0 0
      %501 = vmatmul.mubr.bf16.gmra.mxu0 %v442
      %v502 = vpop.f32.mrf.mxu0
      %v503 = vadd.f32 %v400, %v502
      %v504 = vpop.f32.mrf.mxu0
      %v505 = vpop.f32.mrf.mxu0
      %v506 = vadd.f32 %v403, %v505
      %v507 = vpop.f32.mrf.mxu0
      %508 = vdwg.mxu0
      %s509 = scalar_lea.vmem %s1, 16
      %v510 = vld [vmem:[%s509] sm:$0xf]
      %v511 = vld [vmem:[%s509 + $0x4] sm:$0xf]
      %v513 = vunpack.c.l.b16 %v188
      %v514 = vpack.c.b16 %v416, %v415
      %v515 = vpack.c.b16 %v418, %v417
      %v516 = vpack.c.b16 %v420, %v419
      %v517 = vpack.c.b16 %v513, %v421
      %v520 = vunpack.c.l.b16 %v510
      %v521 = vunpack.c.l.b16 %v511
      %v522 = vpack.c.b16 %v521, %v520
      %v525 = vsel %vm328, %v514, 0
      %v528 = vsel %vm328, %v515, 0
      %v531 = vsel %vm328, %v516, 0
      %v534 = vsel %vm328, %v517, 0
      %536 = vmatprep.subr.bf16.mxu0 0
      %537 = vmatpush1.bf16.msra.mxu0 0
      %538 = vmatprep.subr.bf16.mxu0 0
      %539 = vmatpush1.bf16.msra.mxu0 0
      %540 = vmatprep.subr.bf16.mxu0 0
      %541 = vmatpush1.bf16.msra.mxu0 0
      %542 = vmatprep.subr.bf16.mxu0 0
      %543 = vmatpush1.bf16.msra.mxu0 0
      %544 = vmatprep.subr.bf16.mxu0 0
      %545 = vmatpush1.bf16.msra.mxu0 0
      %546 = vmatprep.subr.bf16.mxu0 0
      %547 = vmatpush1.bf16.msra.mxu0 0
      %548 = vmatprep.subr.bf16.mxu0 0
      %549 = vmatpush1.bf16.msra.mxu0 0
      %550 = vmatprep.subr.bf16.mxu0 0
      %551 = vmatpush1.bf16.msra.mxu0 %v522
      %552 = vmatprep.subr.bf16.mxu0 0
      %553 = vmatpush2.bf16.msra.mxu0 0
      %554 = vmatprep.subr.bf16.mxu0 0
      %555 = vmatpush2.bf16.msra.mxu0 0
      %556 = vmatprep.subr.bf16.mxu0 0
      %557 = vmatpush2.bf16.msra.mxu0 0
      %558 = vmatprep.subr.bf16.mxu0 0
      %559 = vmatpush2.bf16.msra.mxu0 0
      %560 = vmatprep.subr.bf16.mxu0 0
      %561 = vmatpush2.bf16.msra.mxu0 0
      %562 = vmatprep.subr.bf16.mxu0 0
      %563 = vmatpush2.bf16.msra.mxu0 0
      %564 = vmatprep.subr.bf16.mxu0 0
      %565 = vmatpush2.bf16.msra.mxu0 0
      %566 = vmatprep.subr.bf16.mxu0 0
      %567 = vmatpush2.bf16.msra.mxu0 0
      %568 = vmatprep.mubr.bf16.mxu0 0
      %569 = vmatmul.mubr.bf16.gmra.mxu0 %v525
      %v570 = vpop.f32.mrf.mxu0
      %v571 = vadd.f32 0.0, %v570
      %v572 = vpop.f32.mrf.mxu0
      %v573 = vpop.f32.mrf.mxu0
      %v574 = vadd.f32 0.0, %v573
      %v575 = vpop.f32.mrf.mxu0
      %576 = vmatprep.mubr.bf16.mxu0 0
      %577 = vmatmul.mubr.bf16.gmra.mxu0 %v528
      %v578 = vpop.f32.mrf.mxu0
      %v579 = vadd.f32 0.0, %v578
      %v580 = vpop.f32.mrf.mxu0
      %v581 = vpop.f32.mrf.mxu0
      %v582 = vadd.f32 0.0, %v581
      %v583 = vpop.f32.mrf.mxu0
      %584 = vmatprep.mubr.bf16.mxu0 0
      %585 = vmatmul.mubr.bf16.gmra.mxu0 %v531
      %v586 = vpop.f32.mrf.mxu0
      %v587 = vadd.f32 0.0, %v586
      %v588 = vpop.f32.mrf.mxu0
      %v589 = vpop.f32.mrf.mxu0
      %v590 = vadd.f32 0.0, %v589
      %v591 = vpop.f32.mrf.mxu0
      %592 = vmatprep.mubr.bf16.mxu0 0
      %593 = vmatmul.mubr.bf16.gmra.mxu0 %v534
      %v594 = vpop.f32.mrf.mxu0
      %v595 = vadd.f32 0.0, %v594
      %v596 = vpop.f32.mrf.mxu0
      %v597 = vpop.f32.mrf.mxu0
      %v598 = vadd.f32 0.0, %v597
      %v599 = vpop.f32.mrf.mxu0
      %600 = vdwg.mxu0
      %v601 = vadd.f32 %v479, %v571
      %v602 = vadd.f32 %v482, %v574
      %v603 = vadd.f32 %v487, %v579
      %v604 = vadd.f32 %v490, %v582
      %v605 = vadd.f32 %v495, %v587
      %v606 = vadd.f32 %v498, %v590
      %v607 = vadd.f32 %v503, %v595
      %v608 = vadd.f32 %v506, %v598
      %v610 = vshrl.u32 %v188, 16
      %v612 = vrot.slane %v610, 4
      %v613 = vshll.u32 %v188, 16
      %v615 = vrot.slane %v613, 5
      %v616 = vor.u32 %v612, %v615
      %v617 = vrot.slane %v616, 4
      %v619 = vshll.u32 %v189, 16
      %v621 = vrot.slane %v619, 5
      %v622 = vsel %vm194, %v617, %v621
      %s623 = scalar_lea.vmem %s1, 24
      %v624 = vld [vmem:[%s623] sm:$0xf]
      %v625 = vld [vmem:[%s623 + $0x4] sm:$0xf]
      %v626 = vunpack.c.l.b16 %v622
      %v627 = vpack.c.b16 %v312, %v311
      %v628 = vpack.c.b16 %v314, %v313
      %v629 = vpack.c.b16 %v316, %v315
      %v630 = vpack.c.b16 %v626, %v317
      %v633 = vunpack.c.l.b16 %v624
      %v634 = vunpack.c.l.b16 %v625
      %v635 = vpack.c.b16 %v634, %v633
      %v638 = vsel %vm328, %v627, 0
      %v641 = vsel %vm328, %v628, 0
      %v644 = vsel %vm328, %v629, 0
      %v647 = vsel %vm328, %v630, 0
      %649 = vmatprep.subr.bf16.mxu0 0
      %650 = vmatpush1.bf16.msra.mxu0 0
      %651 = vmatprep.subr.bf16.mxu0 0
      %652 = vmatpush1.bf16.msra.mxu0 0
      %653 = vmatprep.subr.bf16.mxu0 0
      %654 = vmatpush1.bf16.msra.mxu0 0
      %655 = vmatprep.subr.bf16.mxu0 0
      %656 = vmatpush1.bf16.msra.mxu0 0
      %657 = vmatprep.subr.bf16.mxu0 0
      %658 = vmatpush1.bf16.msra.mxu0 0
      %659 = vmatprep.subr.bf16.mxu0 0
      %660 = vmatpush1.bf16.msra.mxu0 0
      %661 = vmatprep.subr.bf16.mxu0 0
      %662 = vmatpush1.bf16.msra.mxu0 0
      %663 = vmatprep.subr.bf16.mxu0 0
      %664 = vmatpush1.bf16.msra.mxu0 %v635
      %665 = vmatprep.subr.bf16.mxu0 0
      %666 = vmatpush2.bf16.msra.mxu0 0
      %667 = vmatprep.subr.bf16.mxu0 0
      %668 = vmatpush2.bf16.msra.mxu0 0
      %669 = vmatprep.subr.bf16.mxu0 0
      %670 = vmatpush2.bf16.msra.mxu0 0
      %671 = vmatprep.subr.bf16.mxu0 0
      %672 = vmatpush2.bf16.msra.mxu0 0
      %673 = vmatprep.subr.bf16.mxu0 0
      %674 = vmatpush2.bf16.msra.mxu0 0
      %675 = vmatprep.subr.bf16.mxu0 0
      %676 = vmatpush2.bf16.msra.mxu0 0
      %677 = vmatprep.subr.bf16.mxu0 0
      %678 = vmatpush2.bf16.msra.mxu0 0
      %679 = vmatprep.subr.bf16.mxu0 0
      %680 = vmatpush2.bf16.msra.mxu0 0
      %681 = vmatprep.mubr.bf16.mxu0 0
      %682 = vmatmul.mubr.bf16.gmra.mxu0 %v638
      %v683 = vpop.f32.mrf.mxu0
      %v684 = vadd.f32 0.0, %v683
      %v685 = vpop.f32.mrf.mxu0
      %v686 = vpop.f32.mrf.mxu0
      %v687 = vadd.f32 0.0, %v686
      %v688 = vpop.f32.mrf.mxu0
      %689 = vmatprep.mubr.bf16.mxu0 0
      %690 = vmatmul.mubr.bf16.gmra.mxu0 %v641
      %v691 = vpop.f32.mrf.mxu0
      %v692 = vadd.f32 0.0, %v691
      %v693 = vpop.f32.mrf.mxu0
      %v694 = vpop.f32.mrf.mxu0
      %v695 = vadd.f32 0.0, %v694
      %v696 = vpop.f32.mrf.mxu0
      %697 = vmatprep.mubr.bf16.mxu0 0
      %698 = vmatmul.mubr.bf16.gmra.mxu0 %v644
      %v699 = vpop.f32.mrf.mxu0
      %v700 = vadd.f32 0.0, %v699
      %v701 = vpop.f32.mrf.mxu0
      %v702 = vpop.f32.mrf.mxu0
      %v703 = vadd.f32 0.0, %v702
      %v704 = vpop.f32.mrf.mxu0
      %705 = vmatprep.mubr.bf16.mxu0 0
      %706 = vmatmul.mubr.bf16.gmra.mxu0 %v647
      %v707 = vpop.f32.mrf.mxu0
      %v708 = vadd.f32 0.0, %v707
      %v709 = vpop.f32.mrf.mxu0
      %v710 = vpop.f32.mrf.mxu0
      %v711 = vadd.f32 0.0, %v710
      %v712 = vpop.f32.mrf.mxu0
      %713 = vdwg.mxu0
      %v714 = vadd.f32 %v601, %v684
      %v715 = vadd.f32 %v602, %v687
      %v716 = vadd.f32 %v603, %v692
      %v717 = vadd.f32 %v604, %v695
      %v718 = vadd.f32 %v605, %v700
      %v719 = vadd.f32 %v606, %v703
      %v720 = vadd.f32 %v607, %v708
      %v721 = vadd.f32 %v608, %v711
      %v722 = vld [vmem:[%s2] sm:$0x1]
      %v724 = vlaneseq
      %v725 = vshrl.u32 %v724, 7
      %v726 = vsub.s32 0, %v725
      %v727 = vrot.slane %v722, %v726
      %v729 = vadd.f32 %v714, %v727
      %v730 = vadd.f32 %v715, %v727
      %v731 = vadd.f32 %v716, %v727
      %v732 = vadd.f32 %v717, %v727
      %v733 = vadd.f32 %v718, %v727
      %v734 = vadd.f32 %v719, %v727
      %v735 = vadd.f32 %v720, %v727
      %v736 = vadd.f32 %v721, %v727
      %v737 = vmax.f32 %v729, 0.0
      %v738 = vmax.f32 %v730, 0.0
      %v739 = vmax.f32 %v731, 0.0
      %v740 = vmax.f32 %v732, 0.0
      %v741 = vmax.f32 %v733, 0.0
      %v742 = vmax.f32 %v734, 0.0
      %v743 = vmax.f32 %v735, 0.0
      %v744 = vmax.f32 %v736, 0.0
      %v745 = vpack.c.bf16 %v737, %v737
      %v746 = vpack.c.bf16 %v738, %v738
      %v747 = vpack.c.bf16 %v739, %v739
      %v748 = vpack.c.bf16 %v740, %v740
      %v749 = vpack.c.bf16 %v741, %v741
      %v750 = vpack.c.bf16 %v742, %v742
      %v751 = vpack.c.bf16 %v743, %v743
      %v752 = vpack.c.bf16 %v744, %v744
      %vm753 = vcmask 60416
      %754 = vst.msk [vmem:[%s170] sm:$0xf] %vm753, %v745
      %755 = vst.msk [vmem:[%s170 + $0x4] sm:$0xf] %vm753, %v746
      %756 = vst.msk [vmem:[%s170 + $0x8] sm:$0xf] %vm753, %v747
      %757 = vst.msk [vmem:[%s170 + $0xc] sm:$0xf] %vm753, %v748
      %758 = vst.msk [vmem:[%s170 + $0x10] sm:$0xf] %vm753, %v749
      %759 = vst.msk [vmem:[%s170 + $0x14] sm:$0xf] %vm753, %v750
      %760 = vst.msk [vmem:[%s170 + $0x18] sm:$0xf] %vm753, %v751
      %761 = vst.msk [vmem:[%s170 + $0x1c] sm:$0xf] %vm753, %v752
      %p762 = scmp.lt.s32.totalorder %s14, 1
      %s763 = scalar_select %p762, %s14, 1
      %s764 = smul.addr %s763, 8
      %s765 = smul.addr %s764, 4
      %s766 = scalar_lea.vmem %s3, %s765
      // Predicated region
      $region33: #{model_forward.4} parent=31 // pred_check
        %p767 = pneg %p100
      $region34: #{model_forward.4} parent=31 // pred_check_branch
        %769 = sbr.rel (%p767) target = $region36
      $region35: #{model_forward.4} parent=31 // pred_region
        _
      $region36: #{model_forward.4} parent=31 // pred_fallthru
        _
    $region32: #{model_forward.4} parent=5 // pred_fallthru
      _
    %p770 = scmp.le.s32.totalorder 2, %s9
    // Predicated region
    $region37: #{model_forward.4} parent=5 // pred_check
      %p771 = pneg %p770
    $region38: #{model_forward.4} parent=5 // pred_check_branch
      %773 = sbr.rel (%p771) target = $region40
    $region39: #{model_forward.4} parent=5 // pred_region
      %s774 = ssub.s32 %s9, 2
      // Predicated region
      $region41: #{model_forward.4} parent=39 // pred_check
        %p775 = pneg %p106
      $region42: #{model_forward.4} parent=39 // pred_check_branch
        %777 = sbr.rel (%p775) target = $region44
      $region43: #{model_forward.4} parent=39 // pred_region
        %p778 = scmp.lt.s32.totalorder %s15, 1
        %s779 = scalar_select %p778, %s15, 1
        %s780 = smul.addr %s779, 8
        %s781 = smul.addr %s780, 4
        %s782 = scalar_lea.vmem %s3, %s781
      $region44: #{model_forward.4} parent=39 // pred_fallthru
        _
    $region40: #{model_forward.4} parent=5 // pred_fallthru
      _
  $region6: #{model_forward.4} parent=0 // loop_footer
    %s13 = sadd.s32 1, %s9
  $region7: #{model_forward.4} parent=0 // loop_footer_branch
    %8 = sbr.rel target = $region3
  $region8: #{model_forward.4} parent=0 // loop_exit
    _

// kernel: model_forward.5
$region0: #{model_forward.5}
  #allocation0 [shape = 'u32[]', space=smem, size = 0x4, offset = 0x4, fixed_abs, tag = 'smem constant byte address 0x4 - core index']
  #allocation1 [shape = 'u32[144,128]{1,0:T(1,128)}', space=vmem, size = 0x12000, scoped, tag = 'internal scratch']
  %s0 = inlined_call_operand.vmem [shape: bf16[2,5,5,32], index: 0, kind: input, shape index: {}]
  %s1 = inlined_call_operand.vmem [shape: bf16[4,32,16], index: 1, kind: input, shape index: {}]
  %s2 = inlined_call_operand.vmem [shape: f32[1,16], index: 2, kind: input, shape index: {}]
  %s3 = inlined_call_operand.vmem [shape: f32[16,16], index: 3, kind: input, shape index: {}]
  %s4 = inlined_call_operand.vmem [shape: f32[1,16], index: 4, kind: input, shape index: {}]
  %s5 = inlined_call_operand.vmem [shape: bf16[2,4,4,16], index: 5, kind: output, shape index: {}]
  %s6 = sld [smem:[#allocation0]]
  $region53: #{model_forward.5} parent=0
    _
  %s8 = ssub.s32 1, %s6
  %s9 = scalar_select 0, %s8, %s6
  loop: start=0, step=1, limit=4
  $region2: #{model_forward.5} parent=0 // loop_pre_header
    _
  $region3: #{model_forward.5} parent=0 // loop_header
    %s11 = sphi 0, %s15
    %p12 = scmp.ge.s32.totalorder %s11, 4
    %s21 = sphi 0, %s23
    %s24 = sphi 0, %s21
    %s25 = sphi 0, %s24
    %s41 = sphi 0, %s25
    %s45 = sphi 0, %s45
    %s47 = sphi 0, %s45
    %s48 = sphi 0, %s47
    %s62 = sphi 0, %s48
    %s66 = sphi 0, %s66
    %s68 = sphi 0, %s66
    %s69 = sphi 0, %s68
    %s83 = sphi 0, %s69
    %s87 = sphi 0, %s87
    %s89 = sphi 0, %s87
    %s90 = sphi 0, %s89
    %s104 = sphi 0, %s90
    %s108 = sphi 0, %s108
    %s110 = sphi 0, %s108
    %s111 = sphi 0, %s110
    %s125 = sphi 0, %s111
    %s131 = sphi 0, %s133
    %s134 = sphi 0, %s131
    %s135 = sphi 0, %s134
    %s151 = sphi 0, %s135
  $region4: #{model_forward.5} parent=0 // loop_header_branch
    %14 = sbr.rel (%p12) target = $region8
  $region5: #{model_forward.5} parent=0 // loop_body
    %s16 = ssub.s32 %s11, 1
    %s17 = ssub.s32 %s11, 2
    %s18 = sadd.s32 %s11, 1
    %s19 = ssub.s32 %s11, %s18
    %p20 = scmp.eq.s32.totalorder %s19, 0
    %s22 = sadd.s32 %s21, 1
    %s23 = scalar_select %p20, %s21, %s22
    %p26 = pneg %p20
    %p27 = scmp.eq.s32.totalorder %s11, 1
    %p28 = por %p26, %p27
    %p29 = scmp.ne.s32.totalorder %s21, %s24
    %p30 = scmp.eq.s32.totalorder %s11, 0
    %p31 = por %p29, %p30
    %p32 = scmp.ne.s32.totalorder %s21, %s24
    %p33 = scmp.eq.s32.totalorder %s16, 1
    %p34 = por %p32, %p33
    %p35 = scmp.ne.s32.totalorder %s24, %s25
    %p36 = scmp.eq.s32.totalorder %s16, 0
    %p37 = por %p35, %p36
    %p38 = scmp.ne.s32.totalorder %s24, %s25
    %p39 = scmp.eq.s32.totalorder %s17, 1
    %p40 = por %p38, %p39
    %p42 = scmp.ne.s32.totalorder %s25, %s41
    %p43 = scmp.eq.s32.totalorder %s17, 0
    %p44 = por %p42, %p43
    %s46 = sadd.s32 %s45, 1
    %p49 = scmp.eq.s32.totalorder %s11, 1
    %p50 = scmp.ne.s32.totalorder %s45, %s47
    %p51 = scmp.eq.s32.totalorder %s11, 0
    %p52 = por %p50, %p51
    %p53 = scmp.ne.s32.totalorder %s45, %s47
    %p54 = scmp.eq.s32.totalorder %s16, 1
    %p55 = por %p53, %p54
    %p56 = scmp.ne.s32.totalorder %s47, %s48
    %p57 = scmp.eq.s32.totalorder %s16, 0
    %p58 = por %p56, %p57
    %p59 = scmp.ne.s32.totalorder %s47, %s48
    %p60 = scmp.eq.s32.totalorder %s17, 1
    %p61 = por %p59, %p60
    %p63 = scmp.ne.s32.totalorder %s48, %s62
    %p64 = scmp.eq.s32.totalorder %s17, 0
    %p65 = por %p63, %p64
    %s67 = sadd.s32 %s66, 1
    %p70 = scmp.eq.s32.totalorder %s11, 1
    %p71 = scmp.ne.s32.totalorder %s66, %s68
    %p72 = scmp.eq.s32.totalorder %s11, 0
    %p73 = por %p71, %p72
    %p74 = scmp.ne.s32.totalorder %s66, %s68
    %p75 = scmp.eq.s32.totalorder %s16, 1
    %p76 = por %p74, %p75
    %p77 = scmp.ne.s32.totalorder %s68, %s69
    %p78 = scmp.eq.s32.totalorder %s16, 0
    %p79 = por %p77, %p78
    %p80 = scmp.ne.s32.totalorder %s68, %s69
    %p81 = scmp.eq.s32.totalorder %s17, 1
    %p82 = por %p80, %p81
    %p84 = scmp.ne.s32.totalorder %s69, %s83
    %p85 = scmp.eq.s32.totalorder %s17, 0
    %p86 = por %p84, %p85
    %s88 = sadd.s32 %s87, 1
    %p91 = scmp.eq.s32.totalorder %s11, 1
    %p92 = scmp.ne.s32.totalorder %s87, %s89
    %p93 = scmp.eq.s32.totalorder %s11, 0
    %p94 = por %p92, %p93
    %p95 = scmp.ne.s32.totalorder %s87, %s89
    %p96 = scmp.eq.s32.totalorder %s16, 1
    %p97 = por %p95, %p96
    %p98 = scmp.ne.s32.totalorder %s89, %s90
    %p99 = scmp.eq.s32.totalorder %s16, 0
    %p100 = por %p98, %p99
    %p101 = scmp.ne.s32.totalorder %s89, %s90
    %p102 = scmp.eq.s32.totalorder %s17, 1
    %p103 = por %p101, %p102
    %p105 = scmp.ne.s32.totalorder %s90, %s104
    %p106 = scmp.eq.s32.totalorder %s17, 0
    %p107 = por %p105, %p106
    %s109 = sadd.s32 %s108, 1
    %p112 = scmp.eq.s32.totalorder %s11, 1
    %p113 = scmp.ne.s32.totalorder %s108, %s110
    %p114 = scmp.eq.s32.totalorder %s11, 0
    %p115 = por %p113, %p114
    %p116 = scmp.ne.s32.totalorder %s108, %s110
    %p117 = scmp.eq.s32.totalorder %s16, 1
    %p118 = por %p116, %p117
    %p119 = scmp.ne.s32.totalorder %s110, %s111
    %p120 = scmp.eq.s32.totalorder %s16, 0
    %p121 = por %p119, %p120
    %p122 = scmp.ne.s32.totalorder %s110, %s111
    %p123 = scmp.eq.s32.totalorder %s17, 1
    %p124 = por %p122, %p123
    %p126 = scmp.ne.s32.totalorder %s111, %s125
    %p127 = scmp.eq.s32.totalorder %s17, 0
    %p128 = por %p126, %p127
    %s129 = ssub.s32 %s11, %s18
    %p130 = scmp.eq.s32.totalorder %s129, 0
    %s132 = sadd.s32 %s131, 1
    %s133 = scalar_select %p130, %s131, %s132
    %p136 = pneg %p130
    %p137 = scmp.eq.s32.totalorder %s11, 1
    %p138 = por %p136, %p137
    %p139 = scmp.ne.s32.totalorder %s131, %s134
    %p140 = scmp.eq.s32.totalorder %s11, 0
    %p141 = por %p139, %p140
    %p142 = scmp.ne.s32.totalorder %s131, %s134
    %p143 = scmp.eq.s32.totalorder %s16, 1
    %p144 = por %p142, %p143
    %p145 = scmp.ne.s32.totalorder %s134, %s135
    %p146 = scmp.eq.s32.totalorder %s16, 0
    %p147 = por %p145, %p146
    %p148 = scmp.ne.s32.totalorder %s134, %s135
    %p149 = scmp.eq.s32.totalorder %s17, 1
    %p150 = por %p148, %p149
    %p152 = scmp.ne.s32.totalorder %s135, %s151
    %p153 = scmp.eq.s32.totalorder %s17, 0
    %p154 = por %p152, %p153
    %p155 = scmp.le.s32.totalorder 1, %s11
    %p156 = scmp.lt.s32.totalorder %s11, 3
    %p157 = pnand %p155, %p156
    %p158 = pneg %p157
    // Predicated region
    $region9: #{model_forward.5} parent=5 // pred_check
      _
    $region10: #{model_forward.5} parent=5 // pred_check_branch
      %160 = sbr.rel (%p157) target = $region12
    $region11: #{model_forward.5} parent=5 // pred_region
      %s161 = ssub.s32 %s11, 1
      // Predicated region
      $region13: #{model_forward.5} parent=11 // pred_check
        %p162 = pneg %p58
      $region14: #{model_forward.5} parent=11 // pred_check_branch
        %164 = sbr.rel (%p162) target = $region16
      $region15: #{model_forward.5} parent=11 // pred_region
        _
      $region16: #{model_forward.5} parent=11 // pred_fallthru
        _
      // Predicated region
      $region17: #{model_forward.5} parent=11 // pred_check
        %p165 = pneg %p79
      $region18: #{model_forward.5} parent=11 // pred_check_branch
        %167 = sbr.rel (%p165) target = $region20
      $region19: #{model_forward.5} parent=11 // pred_region
        _
      $region20: #{model_forward.5} parent=11 // pred_fallthru
        _
      // Predicated region
      $region21: #{model_forward.5} parent=11 // pred_check
        %p168 = pneg %p100
      $region22: #{model_forward.5} parent=11 // pred_check_branch
        %170 = sbr.rel (%p168) target = $region24
      $region23: #{model_forward.5} parent=11 // pred_region
        _
      $region24: #{model_forward.5} parent=11 // pred_fallthru
        _
      // Predicated region
      $region25: #{model_forward.5} parent=11 // pred_check
        %p171 = pneg %p121
      $region26: #{model_forward.5} parent=11 // pred_check_branch
        %173 = sbr.rel (%p171) target = $region28
      $region27: #{model_forward.5} parent=11 // pred_region
        _
      $region28: #{model_forward.5} parent=11 // pred_fallthru
        _
    $region12: #{model_forward.5} parent=5 // pred_fallthru
      _
    %p174 = scmp.lt.s32.totalorder %s11, 2
    // Predicated region
    $region29: #{model_forward.5} parent=5 // pred_check
      %p175 = pneg %p174
    $region30: #{model_forward.5} parent=5 // pred_check_branch
      %177 = sbr.rel (%p175) target = $region32
    $region31: #{model_forward.5} parent=5 // pred_region
      // Predicated region
      $region33: #{model_forward.5} parent=31 // pred_check
        %p178 = pneg %p31
      $region34: #{model_forward.5} parent=31 // pred_check_branch
        %180 = sbr.rel (%p178) target = $region36
      $region35: #{model_forward.5} parent=31 // pred_region
        %p181 = scmp.lt.s32.totalorder %s11, 1
        %s182 = scalar_select %p181, %s11, 1
        %s183 = smul.addr %s182, 5
        %s184 = smul.addr %s183, 4
        %s185 = scalar_lea.vmem %s0, %s184
      $region36: #{model_forward.5} parent=31 // pred_fallthru
        _
    $region32: #{model_forward.5} parent=5 // pred_fallthru
      _
    %p186 = scmp.le.s32.totalorder 1, %s11
    %p187 = scmp.lt.s32.totalorder %s11, 3
    %p188 = pnand %p186, %p187
    %p189 = pneg %p188
    // Predicated region
    $region37: #{model_forward.5} parent=5 // pred_check
      _
    $region38: #{model_forward.5} parent=5 // pred_check_branch
      %191 = sbr.rel (%p188) target = $region40
    $region39: #{model_forward.5} parent=5 // pred_region
      %s192 = ssub.s32 %s11, 1
      %p193 = scmp.lt.s32.totalorder %s16, 1
      %s194 = scalar_select %p193, %s16, 1
      %s195 = smul.addr %s194, 5
      %s196 = smul.addr %s195, 4
      %s197 = scalar_lea.vmem %s0, %s196
      %p198 = pneg %p37
      %p199 = pneg %p34
      %p200 = pneg %p58
      %p201 = pneg %p55
      %p202 = pneg %p79
      %p203 = pneg %p76
      %p204 = pneg %p100
      %p205 = pneg %p97
      %p206 = pneg %p121
      %p207 = pneg %p118
      %p208 = pneg %p147
      %p209 = pneg %p144
      %p210 = scmp.lt.s32.totalorder %s16, 1
      %s211 = scalar_select %p210, %s16, 1
      %s212 = smul.addr %s211, 4
      %s213 = smul.addr %s212, 2
      %s214 = scalar_lea.vmem %s5, %s213
      %p215 = scmp.lt.s32.totalorder %s16, 1
      %s216 = scalar_select %p215, %s16, 1
      %s217 = smul.addr %s216, 5
      %s218 = smul.addr %s217, 4
      %s219 = scalar_lea.vmem %s0, %s218
      %p220 = scmp.lt.s32.totalorder %s16, 1
      %s221 = scalar_select %p220, %s16, 1
      %s222 = smul.addr %s221, 4
      %s223 = smul.addr %s222, 2
      %s224 = scalar_lea.vmem %s5, %s223
      %v226 = vld [vmem:[%s219] sm:$0x7]
      %v227 = vld [vmem:[%s219 + $0x4] sm:$0x7]
      %v228 = vld [vmem:[%s219 + $0x8] sm:$0x7]
      %v229 = vld [vmem:[%s219 + $0xc] sm:$0x7]
      %v230 = vld [vmem:[%s219 + $0x10] sm:$0x7]
      %v231 = vld [vmem:[%s1] sm:$0xf]
      %v232 = vld [vmem:[%s1 + $0x4] sm:$0xf]
      %v233 = vld [vmem:[%s1 + $0x8] sm:$0xf]
      %v234 = vld [vmem:[%s1 + $0xc] sm:$0xf]
      %v240 = vunpack.c.l.s4 1983009808
      %v241 = vunpack.c.0.s8 %v240
      %v242 = vlaneseq
      %v243 = vshrl.u32 %v242, 7
      %v244 = vsub.s32 %v241, %v243
      %v245 = vrot.slane %v226, %v244
      %v246 = vcombine.high %v245, %v245
      %v248 = vunpack.c.l.s4 1983009808
      %v249 = vunpack.c.0.s8 %v248
      %v250 = vlaneseq
      %v251 = vshrl.u32 %v250, 7
      %v252 = vsub.s32 %v249, %v251
      %v253 = vrot.slane %v227, %v252
      %v254 = vcombine.high %v253, %v253
      %v256 = vunpack.c.l.s4 1983009808
      %v257 = vunpack.c.0.s8 %v256
      %v258 = vlaneseq
      %v259 = vshrl.u32 %v258, 7
      %v260 = vsub.s32 %v257, %v259
      %v261 = vrot.slane %v228, %v260
      %v262 = vcombine.high %v261, %v261
      %v264 = vunpack.c.l.s4 1983009808
      %v265 = vunpack.c.0.s8 %v264
      %v266 = vlaneseq
      %v267 = vshrl.u32 %v266, 7
      %v268 = vsub.s32 %v265, %v267
      %v269 = vrot.slane %v229, %v268
      %v270 = vcombine.high %v269, %v269
      %vm271 = vsmask.f32 1280
      %vm272 = vsmask.f32 3336
      %vm273 = vmor %vm271, %vm272
      %vm274 = vsmask.f32 5392
      %vm275 = vmor %vm273, %vm274
      %vm276 = vsmask.f32 7448
      %vm277 = vmor %vm275, %vm276
      %v279 = vshrl.u32 %v245, 16
      %v281 = vrot.slane %v279, 6
      %v282 = vshll.u32 %v245, 16
      %v284 = vrot.slane %v282, 7
      %v285 = vor.u32 %v281, %v284
      %v286 = vrot.slane %v285, 2
      %v288 = vshll.u32 %v246, 16
      %v290 = vrot.slane %v288, 7
      %v291 = vsel %vm277, %v286, %v290
      %v293 = vshrl.u32 %v253, 16
      %v295 = vrot.slane %v293, 6
      %v296 = vshll.u32 %v253, 16
      %v298 = vrot.slane %v296, 7
      %v299 = vor.u32 %v295, %v298
      %v300 = vrot.slane %v299, 2
      %v302 = vshll.u32 %v254, 16
      %v304 = vrot.slane %v302, 7
      %v305 = vsel %vm277, %v300, %v304
      %v307 = vshrl.u32 %v261, 16
      %v309 = vrot.slane %v307, 6
      %v310 = vshll.u32 %v261, 16
      %v312 = vrot.slane %v310, 7
      %v313 = vor.u32 %v309, %v312
      %v314 = vrot.slane %v313, 2
      %v316 = vshll.u32 %v262, 16
      %v318 = vrot.slane %v316, 7
      %v319 = vsel %vm277, %v314, %v318
      %v321 = vshrl.u32 %v269, 16
      %v323 = vrot.slane %v321, 6
      %v324 = vshll.u32 %v269, 16
      %v326 = vrot.slane %v324, 7
      %v327 = vor.u32 %v323, %v326
      %v328 = vrot.slane %v327, 2
      %v330 = vshll.u32 %v270, 16
      %v332 = vrot.slane %v330, 7
      %v333 = vsel %vm277, %v328, %v332
      %s334 = scalar_lea.vmem %s1, 16
      %v335 = vld [vmem:[%s334] sm:$0xf]
      %v336 = vld [vmem:[%s334 + $0x4] sm:$0xf]
      %v337 = vld [vmem:[%s334 + $0x8] sm:$0xf]
      %v338 = vld [vmem:[%s334 + $0xc] sm:$0xf]
      %v339 = vcombine.low %v291, %v305
      %v340 = vcombine.low %v319, %v333
      %v342 = vunpack.c.l.s4 1983009808
      %v343 = vunpack.c.0.s8 %v342
      %v344 = vlaneseq
      %v345 = vshrl.u32 %v344, 7
      %v346 = vsub.s32 %v343, %v345
      %v347 = vrot.slane %v339, %v346
      %v349 = vunpack.c.l.s4 1983009808
      %v350 = vunpack.c.0.s8 %v349
      %v351 = vlaneseq
      %v352 = vshrl.u32 %v351, 7
      %v353 = vsub.s32 %v350, %v352
      %v354 = vrot.slane %v340, %v353
      %v355 = vcombine.low %v347, %v354
      %v360 = vunpack.c.l.b16 %v335
      %v361 = vunpack.c.l.b16 %v336
      %v362 = vunpack.c.l.b16 %v337
      %v363 = vunpack.c.l.b16 %v338
      %v364 = vpack.c.b16 %v361, %v360
      %v365 = vpack.c.b16 %v363, %v362
      %vm368 = vcmask 261120
      %v370 = vsel %vm368, %v355, 0
      %372 = vmatprep.subr.bf16.mxu0 0
      %373 = vmatpush1.bf16.msra.mxu0 0
      %374 = vmatprep.subr.bf16.mxu0 0
      %375 = vmatpush1.bf16.msra.mxu0 0
      %376 = vmatprep.subr.bf16.mxu0 0
      %377 = vmatpush1.bf16.msra.mxu0 0
      %378 = vmatprep.subr.bf16.mxu0 0
      %379 = vmatpush1.bf16.msra.mxu0 0
      %380 = vmatprep.subr.bf16.mxu0 0
      %381 = vmatpush1.bf16.msra.mxu0 0
      %382 = vmatprep.subr.bf16.mxu0 0
      %383 = vmatpush1.bf16.msra.mxu0 0
      %384 = vmatprep.subr.bf16.mxu0 0
      %385 = vmatpush1.bf16.msra.mxu0 %v365
      %386 = vmatprep.subr.bf16.mxu0 0
      %387 = vmatpush1.bf16.msra.mxu0 %v364
      %388 = vmatprep.subr.bf16.mxu0 0
      %389 = vmatpush2.bf16.msra.mxu0 0
      %390 = vmatprep.subr.bf16.mxu0 0
      %391 = vmatpush2.bf16.msra.mxu0 0
      %392 = vmatprep.subr.bf16.mxu0 0
      %393 = vmatpush2.bf16.msra.mxu0 0
      %394 = vmatprep.subr.bf16.mxu0 0
      %395 = vmatpush2.bf16.msra.mxu0 0
      %396 = vmatprep.subr.bf16.mxu0 0
      %397 = vmatpush2.bf16.msra.mxu0 0
      %398 = vmatprep.subr.bf16.mxu0 0
      %399 = vmatpush2.bf16.msra.mxu0 0
      %400 = vmatprep.subr.bf16.mxu0 0
      %401 = vmatpush2.bf16.msra.mxu0 0
      %402 = vmatprep.subr.bf16.mxu0 0
      %403 = vmatpush2.bf16.msra.mxu0 0
      %404 = vmatprep.mubr.bf16.mxu0 0
      %405 = vmatmul.mubr.bf16.gmra.mxu0 %v370
      %v406 = vpop.f32.mrf.mxu0
      %v407 = vadd.f32 0.0, %v406
      %v408 = vpop.f32.mrf.mxu0
      %v409 = vpop.f32.mrf.mxu0
      %v410 = vadd.f32 0.0, %v409
      %v411 = vpop.f32.mrf.mxu0
      %412 = vdwg.mxu0
      %v413 = vcombine.low %v226, %v227
      %v414 = vcombine.low %v228, %v229
      %v416 = vunpack.c.l.s4 1983009808
      %v417 = vunpack.c.0.s8 %v416
      %v418 = vlaneseq
      %v419 = vshrl.u32 %v418, 7
      %v420 = vsub.s32 %v417, %v419
      %v421 = vrot.slane %v413, %v420
      %v423 = vunpack.c.l.s4 1983009808
      %v424 = vunpack.c.0.s8 %v423
      %v425 = vlaneseq
      %v426 = vshrl.u32 %v425, 7
      %v427 = vsub.s32 %v424, %v426
      %v428 = vrot.slane %v414, %v427
      %v429 = vcombine.low %v421, %v428
      %v434 = vunpack.c.l.b16 %v231
      %v435 = vunpack.c.l.b16 %v232
      %v436 = vunpack.c.l.b16 %v233
      %v437 = vunpack.c.l.b16 %v234
      %v438 = vpack.c.b16 %v435, %v434
      %v439 = vpack.c.b16 %v437, %v436
      %v443 = vsel %vm368, %v429, 0
      %445 = vmatprep.subr.bf16.mxu0 0
      %446 = vmatpush1.bf16.msra.mxu0 0
      %447 = vmatprep.subr.bf16.mxu0 0
      %448 = vmatpush1.bf16.msra.mxu0 0
      %449 = vmatprep.subr.bf16.mxu0 0
      %450 = vmatpush1.bf16.msra.mxu0 0
      %451 = vmatprep.subr.bf16.mxu0 0
      %452 = vmatpush1.bf16.msra.mxu0 0
      %453 = vmatprep.subr.bf16.mxu0 0
      %454 = vmatpush1.bf16.msra.mxu0 0
      %455 = vmatprep.subr.bf16.mxu0 0
      %456 = vmatpush1.bf16.msra.mxu0 0
      %457 = vmatprep.subr.bf16.mxu0 0
      %458 = vmatpush1.bf16.msra.mxu0 %v439
      %459 = vmatprep.subr.bf16.mxu0 0
      %460 = vmatpush1.bf16.msra.mxu0 %v438
      %461 = vmatprep.subr.bf16.mxu0 0
      %462 = vmatpush2.bf16.msra.mxu0 0
      %463 = vmatprep.subr.bf16.mxu0 0
      %464 = vmatpush2.bf16.msra.mxu0 0
      %465 = vmatprep.subr.bf16.mxu0 0
      %466 = vmatpush2.bf16.msra.mxu0 0
      %467 = vmatprep.subr.bf16.mxu0 0
      %468 = vmatpush2.bf16.msra.mxu0 0
      %469 = vmatprep.subr.bf16.mxu0 0
      %470 = vmatpush2.bf16.msra.mxu0 0
      %471 = vmatprep.subr.bf16.mxu0 0
      %472 = vmatpush2.bf16.msra.mxu0 0
      %473 = vmatprep.subr.bf16.mxu0 0
      %474 = vmatpush2.bf16.msra.mxu0 0
      %475 = vmatprep.subr.bf16.mxu0 0
      %476 = vmatpush2.bf16.msra.mxu0 0
      %477 = vmatprep.mubr.bf16.mxu0 0
      %478 = vmatmul.mubr.bf16.gmra.mxu0 %v443
      %v479 = vpop.f32.mrf.mxu0
      %v480 = vadd.f32 %v407, %v479
      %v481 = vpop.f32.mrf.mxu0
      %v482 = vpop.f32.mrf.mxu0
      %v483 = vadd.f32 %v410, %v482
      %v484 = vpop.f32.mrf.mxu0
      %485 = vdwg.mxu0
      %s486 = scalar_lea.vmem %s1, 32
      %v487 = vld [vmem:[%s486] sm:$0xf]
      %v488 = vld [vmem:[%s486 + $0x4] sm:$0xf]
      %v489 = vld [vmem:[%s486 + $0x8] sm:$0xf]
      %v490 = vld [vmem:[%s486 + $0xc] sm:$0xf]
      %v492 = vcombine.low %v227, %v228
      %v493 = vcombine.low %v229, %v230
      %v495 = vunpack.c.l.s4 1983009808
      %v496 = vunpack.c.0.s8 %v495
      %v497 = vlaneseq
      %v498 = vshrl.u32 %v497, 7
      %v499 = vsub.s32 %v496, %v498
      %v500 = vrot.slane %v492, %v499
      %v502 = vunpack.c.l.s4 1983009808
      %v503 = vunpack.c.0.s8 %v502
      %v504 = vlaneseq
      %v505 = vshrl.u32 %v504, 7
      %v506 = vsub.s32 %v503, %v505
      %v507 = vrot.slane %v493, %v506
      %v508 = vcombine.low %v500, %v507
      %v513 = vunpack.c.l.b16 %v487
      %v514 = vunpack.c.l.b16 %v488
      %v515 = vunpack.c.l.b16 %v489
      %v516 = vunpack.c.l.b16 %v490
      %v517 = vpack.c.b16 %v514, %v513
      %v518 = vpack.c.b16 %v516, %v515
      %v522 = vsel %vm368, %v508, 0
      %524 = vmatprep.subr.bf16.mxu0 0
      %525 = vmatpush1.bf16.msra.mxu0 0
      %526 = vmatprep.subr.bf16.mxu0 0
      %527 = vmatpush1.bf16.msra.mxu0 0
      %528 = vmatprep.subr.bf16.mxu0 0
      %529 = vmatpush1.bf16.msra.mxu0 0
      %530 = vmatprep.subr.bf16.mxu0 0
      %531 = vmatpush1.bf16.msra.mxu0 0
      %532 = vmatprep.subr.bf16.mxu0 0
      %533 = vmatpush1.bf16.msra.mxu0 0
      %534 = vmatprep.subr.bf16.mxu0 0
      %535 = vmatpush1.bf16.msra.mxu0 0
      %536 = vmatprep.subr.bf16.mxu0 0
      %537 = vmatpush1.bf16.msra.mxu0 %v518
      %538 = vmatprep.subr.bf16.mxu0 0
      %539 = vmatpush1.bf16.msra.mxu0 %v517
      %540 = vmatprep.subr.bf16.mxu0 0
      %541 = vmatpush2.bf16.msra.mxu0 0
      %542 = vmatprep.subr.bf16.mxu0 0
      %543 = vmatpush2.bf16.msra.mxu0 0
      %544 = vmatprep.subr.bf16.mxu0 0
      %545 = vmatpush2.bf16.msra.mxu0 0
      %546 = vmatprep.subr.bf16.mxu0 0
      %547 = vmatpush2.bf16.msra.mxu0 0
      %548 = vmatprep.subr.bf16.mxu0 0
      %549 = vmatpush2.bf16.msra.mxu0 0
      %550 = vmatprep.subr.bf16.mxu0 0
      %551 = vmatpush2.bf16.msra.mxu0 0
      %552 = vmatprep.subr.bf16.mxu0 0
      %553 = vmatpush2.bf16.msra.mxu0 0
      %554 = vmatprep.subr.bf16.mxu0 0
      %555 = vmatpush2.bf16.msra.mxu0 0
      %556 = vmatprep.mubr.bf16.mxu0 0
      %557 = vmatmul.mubr.bf16.gmra.mxu0 %v522
      %v558 = vpop.f32.mrf.mxu0
      %v559 = vadd.f32 0.0, %v558
      %v560 = vpop.f32.mrf.mxu0
      %v561 = vpop.f32.mrf.mxu0
      %v562 = vadd.f32 0.0, %v561
      %v563 = vpop.f32.mrf.mxu0
      %564 = vdwg.mxu0
      %v565 = vadd.f32 %v480, %v559
      %v566 = vadd.f32 %v483, %v562
      %v568 = vunpack.c.l.s4 1983009808
      %v569 = vunpack.c.0.s8 %v568
      %v570 = vlaneseq
      %v571 = vshrl.u32 %v570, 7
      %v572 = vsub.s32 %v569, %v571
      %v573 = vrot.slane %v230, %v572
      %v574 = vcombine.high %v573, %v573
      %v576 = vshrl.u32 %v573, 16
      %v578 = vrot.slane %v576, 6
      %v579 = vshll.u32 %v573, 16
      %v581 = vrot.slane %v579, 7
      %v582 = vor.u32 %v578, %v581
      %v583 = vrot.slane %v582, 2
      %v585 = vshll.u32 %v574, 16
      %v587 = vrot.slane %v585, 7
      %v588 = vsel %vm277, %v583, %v587
      %s589 = scalar_lea.vmem %s1, 48
      %v590 = vld [vmem:[%s589] sm:$0xf]
      %v591 = vld [vmem:[%s589 + $0x4] sm:$0xf]
      %v592 = vld [vmem:[%s589 + $0x8] sm:$0xf]
      %v593 = vld [vmem:[%s589 + $0xc] sm:$0xf]
      %v594 = vcombine.low %v305, %v319
      %v595 = vcombine.low %v333, %v588
      %v597 = vunpack.c.l.s4 1983009808
      %v598 = vunpack.c.0.s8 %v597
      %v599 = vlaneseq
      %v600 = vshrl.u32 %v599, 7
      %v601 = vsub.s32 %v598, %v600
      %v602 = vrot.slane %v594, %v601
      %v604 = vunpack.c.l.s4 1983009808
      %v605 = vunpack.c.0.s8 %v604
      %v606 = vlaneseq
      %v607 = vshrl.u32 %v606, 7
      %v608 = vsub.s32 %v605, %v607
      %v609 = vrot.slane %v595, %v608
      %v610 = vcombine.low %v602, %v609
      %v615 = vunpack.c.l.b16 %v590
      %v616 = vunpack.c.l.b16 %v591
      %v617 = vunpack.c.l.b16 %v592
      %v618 = vunpack.c.l.b16 %v593
      %v619 = vpack.c.b16 %v616, %v615
      %v620 = vpack.c.b16 %v618, %v617
      %v624 = vsel %vm368, %v610, 0
      %626 = vmatprep.subr.bf16.mxu0 0
      %627 = vmatpush1.bf16.msra.mxu0 0
      %628 = vmatprep.subr.bf16.mxu0 0
      %629 = vmatpush1.bf16.msra.mxu0 0
      %630 = vmatprep.subr.bf16.mxu0 0
      %631 = vmatpush1.bf16.msra.mxu0 0
      %632 = vmatprep.subr.bf16.mxu0 0
      %633 = vmatpush1.bf16.msra.mxu0 0
      %634 = vmatprep.subr.bf16.mxu0 0
      %635 = vmatpush1.bf16.msra.mxu0 0
      %636 = vmatprep.subr.bf16.mxu0 0
      %637 = vmatpush1.bf16.msra.mxu0 0
      %638 = vmatprep.subr.bf16.mxu0 0
      %639 = vmatpush1.bf16.msra.mxu0 %v620
      %640 = vmatprep.subr.bf16.mxu0 0
      %641 = vmatpush1.bf16.msra.mxu0 %v619
      %642 = vmatprep.subr.bf16.mxu0 0
      %643 = vmatpush2.bf16.msra.mxu0 0
      %644 = vmatprep.subr.bf16.mxu0 0
      %645 = vmatpush2.bf16.msra.mxu0 0
      %646 = vmatprep.subr.bf16.mxu0 0
      %647 = vmatpush2.bf16.msra.mxu0 0
      %648 = vmatprep.subr.bf16.mxu0 0
      %649 = vmatpush2.bf16.msra.mxu0 0
      %650 = vmatprep.subr.bf16.mxu0 0
      %651 = vmatpush2.bf16.msra.mxu0 0
      %652 = vmatprep.subr.bf16.mxu0 0
      %653 = vmatpush2.bf16.msra.mxu0 0
      %654 = vmatprep.subr.bf16.mxu0 0
      %655 = vmatpush2.bf16.msra.mxu0 0
      %656 = vmatprep.subr.bf16.mxu0 0
      %657 = vmatpush2.bf16.msra.mxu0 0
      %658 = vmatprep.mubr.bf16.mxu0 0
      %659 = vmatmul.mubr.bf16.gmra.mxu0 %v624
      %v660 = vpop.f32.mrf.mxu0
      %v661 = vadd.f32 0.0, %v660
      %v662 = vpop.f32.mrf.mxu0
      %v663 = vpop.f32.mrf.mxu0
      %v664 = vadd.f32 0.0, %v663
      %v665 = vpop.f32.mrf.mxu0
      %666 = vdwg.mxu0
      %v667 = vadd.f32 %v565, %v661
      %v668 = vadd.f32 %v566, %v664
      %v669 = vld [vmem:[%s2] sm:$0x1]
      %v671 = vlaneseq
      %v672 = vshrl.u32 %v671, 7
      %v673 = vsub.s32 0, %v672
      %v674 = vrot.slane %v669, %v673
      %v676 = vadd.f32 %v667, %v674
      %v677 = vadd.f32 %v668, %v674
      %v678 = vmax.f32 %v676, 0.0
      %v679 = vmax.f32 %v677, 0.0
      %v680 = vld [vmem:[%s3] sm:$0xff]
      %v681 = vld [vmem:[%s3 + $0x8] sm:$0xff]
      %v682 = vld [vmem:[%s4] sm:$0x1]
      %v684 = vlaneseq
      %v685 = vshrl.u32 %v684, 7
      %v686 = vsub.s32 0, %v685
      %v687 = vrot.slane %v682, %v686
      %vm689 = vcmask 130048
      %v691 = vsel %vm689, %v678, 0
      %v694 = vsel %vm689, %v679, 0
      %696 = vmatprep.subr.mxu0 0.0
      %697 = vmatpush1.msra.mxu0 0.0
      %698 = vmatprep.subr.mxu0 0.0
      %699 = vmatpush1.msra.mxu0 0.0
      %700 = vmatprep.subr.mxu0 0.0
      %701 = vmatpush1.msra.mxu0 0.0
      %702 = vmatprep.subr.mxu0 0.0
      %703 = vmatpush1.msra.mxu0 0.0
      %704 = vmatprep.subr.mxu0 0.0
      %705 = vmatpush1.msra.mxu0 0.0
      %706 = vmatprep.subr.mxu0 0.0
      %707 = vmatpush1.msra.mxu0 0.0
      %708 = vmatprep.subr.mxu0 0.0
      %709 = vmatpush1.msra.mxu0 0.0
      %710 = vmatprep.subr.mxu0 0.0
      %711 = vmatpush1.msra.mxu0 0.0
      %712 = vmatprep.subr.mxu0 0.0
      %713 = vmatpush1.msra.mxu0 0.0
      %714 = vmatprep.subr.mxu0 0.0
      %715 = vmatpush1.msra.mxu0 0.0
      %716 = vmatprep.subr.mxu0 0.0
      %717 = vmatpush1.msra.mxu0 0.0
      %718 = vmatprep.subr.mxu0 0.0
      %719 = vmatpush1.msra.mxu0 0.0
      %720 = vmatprep.subr.mxu0 0.0
      %721 = vmatpush1.msra.mxu0 0.0
      %722 = vmatprep.subr.mxu0 0.0
      %723 = vmatpush1.msra.mxu0 0.0
      %724 = vmatprep.subr.mxu0 0.0
      %725 = vmatpush1.msra.mxu0 %v681
      %726 = vmatprep.subr.mxu0 0.0
      %727 = vmatpush1.msra.mxu0 %v680
      %728 = vmatprep.subr.mxu0 0.0
      %729 = vmatpush2.msra.mxu0 0.0
      %730 = vmatprep.subr.mxu0 0.0
      %731 = vmatpush2.msra.mxu0 0.0
      %732 = vmatprep.subr.mxu0 0.0
      %733 = vmatpush2.msra.mxu0 0.0
      %734 = vmatprep.subr.mxu0 0.0
      %735 = vmatpush2.msra.mxu0 0.0
      %736 = vmatprep.subr.mxu0 0.0
      %737 = vmatpush2.msra.mxu0 0.0
      %738 = vmatprep.subr.mxu0 0.0
      %739 = vmatpush2.msra.mxu0 0.0
      %740 = vmatprep.subr.mxu0 0.0
      %741 = vmatpush2.msra.mxu0 0.0
      %742 = vmatprep.subr.mxu0 0.0
      %743 = vmatpush2.msra.mxu0 0.0
      %744 = vmatprep.subr.mxu0 0.0
      %745 = vmatpush2.msra.mxu0 0.0
      %746 = vmatprep.subr.mxu0 0.0
      %747 = vmatpush2.msra.mxu0 0.0
      %748 = vmatprep.subr.mxu0 0.0
      %749 = vmatpush2.msra.mxu0 0.0
      %750 = vmatprep.subr.mxu0 0.0
      %751 = vmatpush2.msra.mxu0 0.0
      %752 = vmatprep.subr.mxu0 0.0
      %753 = vmatpush2.msra.mxu0 0.0
      %754 = vmatprep.subr.mxu0 0.0
      %755 = vmatpush2.msra.mxu0 0.0
      %756 = vmatprep.subr.mxu0 0.0
      %757 = vmatpush2.msra.mxu0 0.0
      %758 = vmatprep.subr.mxu0 0.0
      %759 = vmatpush2.msra.mxu0 0.0
      %760 = vmatprep.mubr.f32.mxu0 0.0
      %761 = vmatmul.mubr.f32.gmra.mxu0 %v691
      %v762 = vpop.f32.mrf.mxu0
      %v763 = vadd.f32 %v687, %v762
      %v764 = vpop.f32.mrf.mxu0
      %765 = vmatprep.mubr.f32.mxu0 0.0
      %766 = vmatmul.mubr.f32.gmra.mxu0 %v694
      %v767 = vpop.f32.mrf.mxu0
      %v768 = vadd.f32 %v687, %v767
      %v769 = vpop.f32.mrf.mxu0
      %770 = vdwg.mxu0
      %v771 = vmax.f32 %v763, 0.0
      %v772 = vmax.f32 %v768, 0.0
      %v775 = vcombine.high %v771, %v771
      %v776 = vcombine.high %v772, %v772
      %v779 = vpack.c.bf16 %v771, %v771
      %v780 = vpack.c.bf16 %v775, %v775
      %v781 = vpack.c.bf16 %v772, %v772
      %v782 = vpack.c.bf16 %v776, %v776
      %vm783 = vcmask 123904
      %784 = vst.msk [vmem:[%s224] sm:$0x3] %vm783, %v779
      %785 = vst.msk [vmem:[%s224 + $0x2] sm:$0x3] %vm783, %v780
      %786 = vst.msk [vmem:[%s224 + $0x4] sm:$0x3] %vm783, %v781
      %787 = vst.msk [vmem:[%s224 + $0x6] sm:$0x3] %vm783, %v782
      %p788 = scmp.lt.s32.totalorder %s16, 1
      %s789 = scalar_select %p788, %s16, 1
      %s790 = smul.addr %s789, 4
      %s791 = smul.addr %s790, 2
      %s792 = scalar_lea.vmem %s5, %s791
      // Predicated region
      $region41: #{model_forward.5} parent=39 // pred_check
        %p793 = pneg %p144
      $region42: #{model_forward.5} parent=39 // pred_check_branch
        %795 = sbr.rel (%p793) target = $region44
      $region43: #{model_forward.5} parent=39 // pred_region
        _
      $region44: #{model_forward.5} parent=39 // pred_fallthru
        _
    $region40: #{model_forward.5} parent=5 // pred_fallthru
      _
    %p796 = scmp.le.s32.totalorder 2, %s11
    // Predicated region
    $region45: #{model_forward.5} parent=5 // pred_check
      %p797 = pneg %p796
    $region46: #{model_forward.5} parent=5 // pred_check_branch
      %799 = sbr.rel (%p797) target = $region48
    $region47: #{model_forward.5} parent=5 // pred_region
      %s800 = ssub.s32 %s11, 2
      // Predicated region
      $region49: #{model_forward.5} parent=47 // pred_check
        %p801 = pneg %p150
      $region50: #{model_forward.5} parent=47 // pred_check_branch
        %803 = sbr.rel (%p801) target = $region52
      $region51: #{model_forward.5} parent=47 // pred_region
        %p804 = scmp.lt.s32.totalorder %s17, 1
        %s805 = scalar_select %p804, %s17, 1
        %s806 = smul.addr %s805, 4
        %s807 = smul.addr %s806, 2
        %s808 = scalar_lea.vmem %s5, %s807
      $region52: #{model_forward.5} parent=47 // pred_fallthru
        _
    $region48: #{model_forward.5} parent=5 // pred_fallthru
      _
  $region6: #{model_forward.5} parent=0 // loop_footer
    %s15 = sadd.s32 1, %s11
  $region7: #{model_forward.5} parent=0 // loop_footer_branch
    %10 = sbr.rel target = $region3
  $region8: #{model_forward.5} parent=0 // loop_exit
    _

// kernel: model_forward.7
$region0: #{model_forward.7}
  #allocation0 [shape = 'u32[]', space=smem, size = 0x4, offset = 0x4, fixed_abs, tag = 'smem constant byte address 0x4 - core index']
  #allocation1 [shape = 'u32[144,128]{1,0:T(1,128)}', space=vmem, size = 0x12000, scoped, tag = 'internal scratch']
  %s0 = inlined_call_operand.vmem [shape: f32[2,4,4], index: 0, kind: input, shape index: {}]
  %s1 = inlined_call_operand.vmem [shape: f32[16,4], index: 1, kind: input, shape index: {}]
  %s2 = inlined_call_operand.vmem [shape: f32[4,16], index: 2, kind: input, shape index: {}]
  %s3 = inlined_call_operand.hbm [shape: f32[2,16,16], index: 3, kind: output, shape index: {}]
  %s4 = sld [smem:[#allocation0]]
  $region45: #{model_forward.7} parent=0
    _
  %s6 = ssub.s32 1, %s4
  %s7 = scalar_select 0, %s6, %s4
  $region1: #{model_forward.7} parent=0
    #allocation2 [shape = 'u8[16384]{0}', space=vmem, size = 0x4000, scoped, tag = 'output window, operand 0']
    #allocation3 [shape = 's32[2]{0}', space=sflag, size = 0x8, scoped, tag = 'scoped memory for model_forward.7']
    %8 = vsyncpa [#allocation3], 0
    %s9 = scalar_lea.sflag [#allocation3], 1
    %10 = vsyncpa %s9, 0
    loop: start=0, step=1, limit=4
    $region2: #{model_forward.7} parent=1 // loop_pre_header
      _
    $region3: #{model_forward.7} parent=1 // loop_header
      %s12 = sphi 0, %s16
      %p13 = scmp.ge.s32.totalorder %s12, 4
      %s22 = sphi 0, %s24
      %s25 = sphi 0, %s22
      %s26 = sphi 0, %s25
      %s42 = sphi 0, %s26
      %s46 = sphi 0, %s46
      %s48 = sphi 0, %s46
      %s49 = sphi 0, %s48
      %s63 = sphi 0, %s49
      %s67 = sphi 0, %s67
      %s69 = sphi 0, %s67
      %s70 = sphi 0, %s69
      %s84 = sphi 0, %s70
      %s90 = sphi 0, %s92
      %s93 = sphi 0, %s90
      %s94 = sphi 0, %s93
      %s110 = sphi 0, %s94
    $region4: #{model_forward.7} parent=1 // loop_header_branch
      %15 = sbr.rel (%p13) target = $region8
    $region5: #{model_forward.7} parent=1 // loop_body
      %s17 = ssub.s32 %s12, 1
      %s18 = ssub.s32 %s12, 2
      %s19 = sadd.s32 %s12, 1
      %s20 = ssub.s32 %s12, %s19
      %p21 = scmp.eq.s32.totalorder %s20, 0
      %s23 = sadd.s32 %s22, 1
      %s24 = scalar_select %p21, %s22, %s23
      %p27 = pneg %p21
      %p28 = scmp.eq.s32.totalorder %s12, 1
      %p29 = por %p27, %p28
      %p30 = scmp.ne.s32.totalorder %s22, %s25
      %p31 = scmp.eq.s32.totalorder %s12, 0
      %p32 = por %p30, %p31
      %p33 = scmp.ne.s32.totalorder %s22, %s25
      %p34 = scmp.eq.s32.totalorder %s17, 1
      %p35 = por %p33, %p34
      %p36 = scmp.ne.s32.totalorder %s25, %s26
      %p37 = scmp.eq.s32.totalorder %s17, 0
      %p38 = por %p36, %p37
      %p39 = scmp.ne.s32.totalorder %s25, %s26
      %p40 = scmp.eq.s32.totalorder %s18, 1
      %p41 = por %p39, %p40
      %p43 = scmp.ne.s32.totalorder %s26, %s42
      %p44 = scmp.eq.s32.totalorder %s18, 0
      %p45 = por %p43, %p44
      %s47 = sadd.s32 %s46, 1
      %p50 = scmp.eq.s32.totalorder %s12, 1
      %p51 = scmp.ne.s32.totalorder %s46, %s48
      %p52 = scmp.eq.s32.totalorder %s12, 0
      %p53 = por %p51, %p52
      %p54 = scmp.ne.s32.totalorder %s46, %s48
      %p55 = scmp.eq.s32.totalorder %s17, 1
      %p56 = por %p54, %p55
      %p57 = scmp.ne.s32.totalorder %s48, %s49
      %p58 = scmp.eq.s32.totalorder %s17, 0
      %p59 = por %p57, %p58
      %p60 = scmp.ne.s32.totalorder %s48, %s49
      %p61 = scmp.eq.s32.totalorder %s18, 1
      %p62 = por %p60, %p61
      %p64 = scmp.ne.s32.totalorder %s49, %s63
      %p65 = scmp.eq.s32.totalorder %s18, 0
      %p66 = por %p64, %p65
      %s68 = sadd.s32 %s67, 1
      %p71 = scmp.eq.s32.totalorder %s12, 1
      %p72 = scmp.ne.s32.totalorder %s67, %s69
      %p73 = scmp.eq.s32.totalorder %s12, 0
      %p74 = por %p72, %p73
      %p75 = scmp.ne.s32.totalorder %s67, %s69
      %p76 = scmp.eq.s32.totalorder %s17, 1
      %p77 = por %p75, %p76
      %p78 = scmp.ne.s32.totalorder %s69, %s70
      %p79 = scmp.eq.s32.totalorder %s17, 0
      %p80 = por %p78, %p79
      %p81 = scmp.ne.s32.totalorder %s69, %s70
      %p82 = scmp.eq.s32.totalorder %s18, 1
      %p83 = por %p81, %p82
      %p85 = scmp.ne.s32.totalorder %s70, %s84
      %p86 = scmp.eq.s32.totalorder %s18, 0
      %p87 = por %p85, %p86
      %s88 = ssub.s32 %s12, %s19
      %p89 = scmp.eq.s32.totalorder %s88, 0
      %s91 = sadd.s32 %s90, 1
      %s92 = scalar_select %p89, %s90, %s91
      %p95 = pneg %p89
      %p96 = scmp.eq.s32.totalorder %s12, 1
      %p97 = por %p95, %p96
      %p98 = scmp.ne.s32.totalorder %s90, %s93
      %p99 = scmp.eq.s32.totalorder %s12, 0
      %p100 = por %p98, %p99
      %p101 = scmp.ne.s32.totalorder %s90, %s93
      %p102 = scmp.eq.s32.totalorder %s17, 1
      %p103 = por %p101, %p102
      %p104 = scmp.ne.s32.totalorder %s93, %s94
      %p105 = scmp.eq.s32.totalorder %s17, 0
      %p106 = por %p104, %p105
      %p107 = scmp.ne.s32.totalorder %s93, %s94
      %p108 = scmp.eq.s32.totalorder %s18, 1
      %p109 = por %p107, %p108
      %p111 = scmp.ne.s32.totalorder %s94, %s110
      %p112 = scmp.eq.s32.totalorder %s18, 0
      %p113 = por %p111, %p112
      %p114 = scmp.le.s32.totalorder 1, %s12
      %p115 = scmp.lt.s32.totalorder %s12, 3
      %p116 = pnand %p114, %p115
      %p117 = pneg %p116
      // Predicated region
      $region9: #{model_forward.7} parent=5 // pred_check
        _
      $region10: #{model_forward.7} parent=5 // pred_check_branch
        %119 = sbr.rel (%p116) target = $region12
      $region11: #{model_forward.7} parent=5 // pred_region
        %s120 = ssub.s32 %s12, 1
        // Predicated region
        $region13: #{model_forward.7} parent=11 // pred_check
          %p121 = pneg %p59
        $region14: #{model_forward.7} parent=11 // pred_check_branch
          %123 = sbr.rel (%p121) target = $region16
        $region15: #{model_forward.7} parent=11 // pred_region
          _
        $region16: #{model_forward.7} parent=11 // pred_fallthru
          _
        // Predicated region
        $region17: #{model_forward.7} parent=11 // pred_check
          %p124 = pneg %p80
        $region18: #{model_forward.7} parent=11 // pred_check_branch
          %126 = sbr.rel (%p124) target = $region20
        $region19: #{model_forward.7} parent=11 // pred_region
          _
        $region20: #{model_forward.7} parent=11 // pred_fallthru
          _
      $region12: #{model_forward.7} parent=5 // pred_fallthru
        _
      %p127 = scmp.lt.s32.totalorder %s12, 2
      // Predicated region
      $region21: #{model_forward.7} parent=5 // pred_check
        %p128 = pneg %p127
      $region22: #{model_forward.7} parent=5 // pred_check_branch
        %130 = sbr.rel (%p128) target = $region24
      $region23: #{model_forward.7} parent=5 // pred_region
        // Predicated region
        $region25: #{model_forward.7} parent=23 // pred_check
          %p131 = pneg %p32
        $region26: #{model_forward.7} parent=23 // pred_check_branch
          %133 = sbr.rel (%p131) target = $region28
        $region27: #{model_forward.7} parent=23 // pred_region
          %p134 = scmp.lt.s32.totalorder %s12, 1
          %s135 = scalar_select %p134, %s12, 1
          %s136 = smul.addr %s135, 4
          %s137 = scalar_lea.vmem %s0, %s136
        $region28: #{model_forward.7} parent=23 // pred_fallthru
          _
      $region24: #{model_forward.7} parent=5 // pred_fallthru
        _
      %p138 = scmp.le.s32.totalorder 1, %s12
      %p139 = scmp.lt.s32.totalorder %s12, 3
      %p140 = pnand %p138, %p139
      %p141 = pneg %p140
      // Predicated region
      $region29: #{model_forward.7} parent=5 // pred_check
        _
      $region30: #{model_forward.7} parent=5 // pred_check_branch
        %143 = sbr.rel (%p140) target = $region32
      $region31: #{model_forward.7} parent=5 // pred_region
        %s144 = ssub.s32 %s12, 1
        %p145 = scmp.lt.s32.totalorder %s17, 1
        %s146 = scalar_select %p145, %s17, 1
        %s147 = smul.addr %s146, 4
        %s148 = scalar_lea.vmem %s0, %s147
        %p149 = pneg %p38
        %p150 = pneg %p35
        %p151 = pneg %p59
        %p152 = pneg %p56
        %p153 = pneg %p80
        %p154 = pneg %p77
        %p155 = pneg %p106
        %p156 = pneg %p103
        %s157 = sand.u32 %s93, 1
        %s158 = scalar_lea.sflag [#allocation3], %s157
        %s159 = sand.u32 %s93, 1
        %s160 = smul.addr %s159, 16
        %s161 = scalar_lea.vmem [#allocation2], %s160
        %p162 = scmp.lt.s32.totalorder %s17, 1
        %s163 = scalar_select %p162, %s17, 1
        %s164 = smul.addr %s163, 4
        %s165 = scalar_lea.vmem %s0, %s164
        %v166 = vld [vmem:[%s165] sm:$0xf]
        %v167 = vld [vmem:[%s2] sm:$0xf]
        %vm168 = vcmask 31744
        %v170 = vsel %vm168, %v166, 0
        %vm172 = vcmask 1043456
        %v174 = vsel %vm172, %v167, 0
        %176 = vmatprep.subr.mxu0 0.0
        %177 = vmatpush1.msra.mxu0 0.0
        %178 = vmatprep.subr.mxu0 0.0
        %179 = vmatpush1.msra.mxu0 0.0
        %180 = vmatprep.subr.mxu0 0.0
        %181 = vmatpush1.msra.mxu0 0.0
        %182 = vmatprep.subr.mxu0 0.0
        %183 = vmatpush1.msra.mxu0 0.0
        %184 = vmatprep.subr.mxu0 0.0
        %185 = vmatpush1.msra.mxu0 0.0
        %186 = vmatprep.subr.mxu0 0.0
        %187 = vmatpush1.msra.mxu0 0.0
        %188 = vmatprep.subr.mxu0 0.0
        %189 = vmatpush1.msra.mxu0 0.0
        %190 = vmatprep.subr.mxu0 0.0
        %191 = vmatpush1.msra.mxu0 0.0
        %192 = vmatprep.subr.mxu0 0.0
        %193 = vmatpush1.msra.mxu0 0.0
        %194 = vmatprep.subr.mxu0 0.0
        %195 = vmatpush1.msra.mxu0 0.0
        %196 = vmatprep.subr.mxu0 0.0
        %197 = vmatpush1.msra.mxu0 0.0
        %198 = vmatprep.subr.mxu0 0.0
        %199 = vmatpush1.msra.mxu0 0.0
        %200 = vmatprep.subr.mxu0 0.0
        %201 = vmatpush1.msra.mxu0 0.0
        %202 = vmatprep.subr.mxu0 0.0
        %203 = vmatpush1.msra.mxu0 0.0
        %204 = vmatprep.subr.mxu0 0.0
        %205 = vmatpush1.msra.mxu0 0.0
        %206 = vmatprep.subr.mxu0 0.0
        %207 = vmatpush1.msra.mxu0 %v174
        %208 = vmatprep.subr.mxu0 0.0
        %209 = vmatpush2.msra.mxu0 0.0
        %210 = vmatprep.subr.mxu0 0.0
        %211 = vmatpush2.msra.mxu0 0.0
        %212 = vmatprep.subr.mxu0 0.0
        %213 = vmatpush2.msra.mxu0 0.0
        %214 = vmatprep.subr.mxu0 0.0
        %215 = vmatpush2.msra.mxu0 0.0
        %216 = vmatprep.subr.mxu0 0.0
        %217 = vmatpush2.msra.mxu0 0.0
        %218 = vmatprep.subr.mxu0 0.0
        %219 = vmatpush2.msra.mxu0 0.0
        %220 = vmatprep.subr.mxu0 0.0
        %221 = vmatpush2.msra.mxu0 0.0
        %222 = vmatprep.subr.mxu0 0.0
        %223 = vmatpush2.msra.mxu0 0.0
        %224 = vmatprep.subr.mxu0 0.0
        %225 = vmatpush2.msra.mxu0 0.0
        %226 = vmatprep.subr.mxu0 0.0
        %227 = vmatpush2.msra.mxu0 0.0
        %228 = vmatprep.subr.mxu0 0.0
        %229 = vmatpush2.msra.mxu0 0.0
        %230 = vmatprep.subr.mxu0 0.0
        %231 = vmatpush2.msra.mxu0 0.0
        %232 = vmatprep.subr.mxu0 0.0
        %233 = vmatpush2.msra.mxu0 0.0
        %234 = vmatprep.subr.mxu0 0.0
        %235 = vmatpush2.msra.mxu0 0.0
        %236 = vmatprep.subr.mxu0 0.0
        %237 = vmatpush2.msra.mxu0 0.0
        %238 = vmatprep.subr.mxu0 0.0
        %239 = vmatpush2.msra.mxu0 0.0
        %240 = vmatprep.mubr.f32.mxu0 0.0
        %241 = vmatmul.mubr.f32.gmra.mxu0 %v170
        %v242 = vpop.f32.mrf.mxu0
        %v243 = vadd.f32 0.0, %v242
        %v244 = vpop.f32.mrf.mxu0
        %245 = vdwg.mxu0
        %v246 = vld [vmem:[%s1] sm:$0xff]
        %v247 = vld [vmem:[%s1 + $0x8] sm:$0xff]
        %v249 = vsel %vm168, %v246, 0
        %v252 = vsel %vm168, %v247, 0
        %v255 = vsel %vm172, %v243, 0
        %257 = vmatprep.subr.mxu0 0.0
        %258 = vmatpush1.msra.mxu0 0.0
        %259 = vmatprep.subr.mxu0 0.0
        %260 = vmatpush1.msra.mxu0 0.0
        %261 = vmatprep.subr.mxu0 0.0
        %262 = vmatpush1.msra.mxu0 0.0
        %263 = vmatprep.subr.mxu0 0.0
        %264 = vmatpush1.msra.mxu0 0.0
        %265 = vmatprep.subr.mxu0 0.0
        %266 = vmatpush1.msra.mxu0 0.0
        %267 = vmatprep.subr.mxu0 0.0
        %268 = vmatpush1.msra.mxu0 0.0
        %269 = vmatprep.subr.mxu0 0.0
        %270 = vmatpush1.msra.mxu0 0.0
        %271 = vmatprep.subr.mxu0 0.0
        %272 = vmatpush1.msra.mxu0 0.0
        %273 = vmatprep.subr.mxu0 0.0
        %274 = vmatpush1.msra.mxu0 0.0
        %275 = vmatprep.subr.mxu0 0.0
        %276 = vmatpush1.msra.mxu0 0.0
        %277 = vmatprep.subr.mxu0 0.0
        %278 = vmatpush1.msra.mxu0 0.0
        %279 = vmatprep.subr.mxu0 0.0
        %280 = vmatpush1.msra.mxu0 0.0
        %281 = vmatprep.subr.mxu0 0.0
        %282 = vmatpush1.msra.mxu0 0.0
        %283 = vmatprep.subr.mxu0 0.0
        %284 = vmatpush1.msra.mxu0 0.0
        %285 = vmatprep.subr.mxu0 0.0
        %286 = vmatpush1.msra.mxu0 0.0
        %287 = vmatprep.subr.mxu0 0.0
        %288 = vmatpush1.msra.mxu0 %v255
        %289 = vmatprep.subr.mxu0 0.0
        %290 = vmatpush2.msra.mxu0 0.0
        %291 = vmatprep.subr.mxu0 0.0
        %292 = vmatpush2.msra.mxu0 0.0
        %293 = vmatprep.subr.mxu0 0.0
        %294 = vmatpush2.msra.mxu0 0.0
        %295 = vmatprep.subr.mxu0 0.0
        %296 = vmatpush2.msra.mxu0 0.0
        %297 = vmatprep.subr.mxu0 0.0
        %298 = vmatpush2.msra.mxu0 0.0
        %299 = vmatprep.subr.mxu0 0.0
        %300 = vmatpush2.msra.mxu0 0.0
        %301 = vmatprep.subr.mxu0 0.0
        %302 = vmatpush2.msra.mxu0 0.0
        %303 = vmatprep.subr.mxu0 0.0
        %304 = vmatpush2.msra.mxu0 0.0
        %305 = vmatprep.subr.mxu0 0.0
        %306 = vmatpush2.msra.mxu0 0.0
        %307 = vmatprep.subr.mxu0 0.0
        %308 = vmatpush2.msra.mxu0 0.0
        %309 = vmatprep.subr.mxu0 0.0
        %310 = vmatpush2.msra.mxu0 0.0
        %311 = vmatprep.subr.mxu0 0.0
        %312 = vmatpush2.msra.mxu0 0.0
        %313 = vmatprep.subr.mxu0 0.0
        %314 = vmatpush2.msra.mxu0 0.0
        %315 = vmatprep.subr.mxu0 0.0
        %316 = vmatpush2.msra.mxu0 0.0
        %317 = vmatprep.subr.mxu0 0.0
        %318 = vmatpush2.msra.mxu0 0.0
        %319 = vmatprep.subr.mxu0 0.0
        %320 = vmatpush2.msra.mxu0 0.0
        %321 = vmatprep.mubr.f32.mxu0 0.0
        %322 = vmatmul.mubr.f32.gmra.mxu0 %v249
        %v323 = vpop.f32.mrf.mxu0
        %v324 = vadd.f32 0.0, %v323
        %v325 = vpop.f32.mrf.mxu0
        %326 = vmatprep.mubr.f32.mxu0 0.0
        %327 = vmatmul.mubr.f32.gmra.mxu0 %v252
        %v328 = vpop.f32.mrf.mxu0
        %v329 = vadd.f32 0.0, %v328
        %v330 = vpop.f32.mrf.mxu0
        %331 = vdwg.mxu0
        %vm332 = vcmask 130048
        %333 = vst.msk [vmem:[%s161] sm:$0xff] %vm332, %v324
        %334 = vst.msk [vmem:[%s161 + $0x8] sm:$0xff] %vm332, %v329
        %s335 = sand.u32 %s93, 1
        %s336 = scalar_lea.sflag [#allocation3], %s335
        %s337 = sand.u32 %s93, 1
        %s338 = smul.addr %s337, 16
        %s339 = scalar_lea.vmem [#allocation2], %s338
        // Predicated region
        $region33: #{model_forward.7} parent=31 // pred_check
          %p340 = pneg %p103
        $region34: #{model_forward.7} parent=31 // pred_check_branch
          %342 = sbr.rel (%p340) target = $region36
        $region35: #{model_forward.7} parent=31 // pred_region
          %s344 = ssub.s32 256, 256
          %345 = vsyncadd %s336, %s344
          %s346 = smul.addr %s17, 2
          %s347 = smul.addr %s346, 128
          %s348 = scalar_lea.hbm %s3, %s347
          %s349 = sshll.u32 %s339, 4
          %s350 = int_to_ptr.vmem [resolvable:$true] %s349
          %355 = dma.vmem_to_hbm [thread:$0]  %s350, 256, %s348, %s336, 128, 128, 8
        $region36: #{model_forward.7} parent=31 // pred_fallthru
          _
      $region32: #{model_forward.7} parent=5 // pred_fallthru
        _
      %p356 = scmp.le.s32.totalorder 2, %s12
      // Predicated region
      $region37: #{model_forward.7} parent=5 // pred_check
        %p357 = pneg %p356
      $region38: #{model_forward.7} parent=5 // pred_check_branch
        %359 = sbr.rel (%p357) target = $region40
      $region39: #{model_forward.7} parent=5 // pred_region
        %s360 = ssub.s32 %s12, 2
        // Predicated region
        $region41: #{model_forward.7} parent=39 // pred_check
          %p361 = pneg %p109
        $region42: #{model_forward.7} parent=39 // pred_check_branch
          %363 = sbr.rel (%p361) target = $region44
        $region43: #{model_forward.7} parent=39 // pred_region
          %s364 = sand.u32 %s94, 1
          %s365 = scalar_lea.sflag [#allocation3], %s364
          %s366 = sand.u32 %s94, 1
          %s367 = smul.addr %s366, 16
          %s368 = scalar_lea.vmem [#allocation2], %s367
          %369 = dma.done %s365, 256
        $region44: #{model_forward.7} parent=39 // pred_fallthru
          _
      $region40: #{model_forward.7} parent=5 // pred_fallthru
        _
    $region6: #{model_forward.7} parent=1 // loop_footer
      %s16 = sadd.s32 1, %s12
    $region7: #{model_forward.7} parent=1 // loop_footer_branch
      %11 = sbr.rel target = $region3
    $region8: #{model_forward.7} parent=1 // loop_exit
      _
    %370 = vsyncpa [#allocation3], 1
    %s371 = scalar_lea.sflag [#allocation3], 1
    %372 = vsyncpa %s371, 1

// kernel: model_forward.6
$region0: #{model_forward.6}
  #allocation0 [shape = 'u32[]', space=smem, size = 0x4, offset = 0x4, fixed_abs, tag = 'smem constant byte address 0x4 - core index']
  #allocation1 [shape = 'u32[144,128]{1,0:T(1,128)}', space=vmem, size = 0x12000, scoped, tag = 'internal scratch']
  #allocation2 [shape = 'f32[1,1]{1,0:T(1,128)S(1)}', space=vmem, size = 0x200, scoped, tag = 'scoped memory for model_forward.6']
  %s0 = inlined_call_operand.vmem [shape: bf16[2,6,6,16], index: 0, kind: input, shape index: {}]
  %s1 = inlined_call_operand.vmem [shape: bf16[9,16,16], index: 1, kind: input, shape index: {}]
  %s2 = inlined_call_operand.vmem [shape: f32[1,16], index: 2, kind: input, shape index: {}]
  %s3 = inlined_call_operand.vmem [shape: f32[1,16], index: 3, kind: input, shape index: {}]
  %s4 = inlined_call_operand.<no memory space> [shape: f32[1,1], index: 4, kind: input, shape index: {}]
  %s5 = inlined_call_operand.vmem [shape: f32[2,4,4,1], index: 5, kind: output, shape index: {}]
  %s6 = sld [smem:[#allocation0]]
  $region53: #{model_forward.6} parent=0
    _
  %s8 = ssub.s32 1, %s6
  %s9 = scalar_select 0, %s8, %s6
  %v10 = vstv %s4
  %11 = vst [vmem:[#allocation2] sm:$0x1] %v10
  loop: start=0, step=1, limit=4
  $region2: #{model_forward.6} parent=0 // loop_pre_header
    _
  $region3: #{model_forward.6} parent=0 // loop_header
    %s13 = sphi 0, %s17
    %p14 = scmp.ge.s32.totalorder %s13, 4
    %s23 = sphi 0, %s25
    %s26 = sphi 0, %s23
    %s27 = sphi 0, %s26
    %s43 = sphi 0, %s27
    %s47 = sphi 0, %s47
    %s49 = sphi 0, %s47
    %s50 = sphi 0, %s49
    %s64 = sphi 0, %s50
    %s68 = sphi 0, %s68
    %s70 = sphi 0, %s68
    %s71 = sphi 0, %s70
    %s85 = sphi 0, %s71
    %s89 = sphi 0, %s89
    %s91 = sphi 0, %s89
    %s92 = sphi 0, %s91
    %s106 = sphi 0, %s92
    %s110 = sphi 0, %s110
    %s112 = sphi 0, %s110
    %s113 = sphi 0, %s112
    %s127 = sphi 0, %s113
    %s133 = sphi 0, %s135
    %s136 = sphi 0, %s133
    %s137 = sphi 0, %s136
    %s153 = sphi 0, %s137
  $region4: #{model_forward.6} parent=0 // loop_header_branch
    %16 = sbr.rel (%p14) target = $region8
  $region5: #{model_forward.6} parent=0 // loop_body
    %s18 = ssub.s32 %s13, 1
    %s19 = ssub.s32 %s13, 2
    %s20 = sadd.s32 %s13, 1
    %s21 = ssub.s32 %s13, %s20
    %p22 = scmp.eq.s32.totalorder %s21, 0
    %s24 = sadd.s32 %s23, 1
    %s25 = scalar_select %p22, %s23, %s24
    %p28 = pneg %p22
    %p29 = scmp.eq.s32.totalorder %s13, 1
    %p30 = por %p28, %p29
    %p31 = scmp.ne.s32.totalorder %s23, %s26
    %p32 = scmp.eq.s32.totalorder %s13, 0
    %p33 = por %p31, %p32
    %p34 = scmp.ne.s32.totalorder %s23, %s26
    %p35 = scmp.eq.s32.totalorder %s18, 1
    %p36 = por %p34, %p35
    %p37 = scmp.ne.s32.totalorder %s26, %s27
    %p38 = scmp.eq.s32.totalorder %s18, 0
    %p39 = por %p37, %p38
    %p40 = scmp.ne.s32.totalorder %s26, %s27
    %p41 = scmp.eq.s32.totalorder %s19, 1
    %p42 = por %p40, %p41
    %p44 = scmp.ne.s32.totalorder %s27, %s43
    %p45 = scmp.eq.s32.totalorder %s19, 0
    %p46 = por %p44, %p45
    %s48 = sadd.s32 %s47, 1
    %p51 = scmp.eq.s32.totalorder %s13, 1
    %p52 = scmp.ne.s32.totalorder %s47, %s49
    %p53 = scmp.eq.s32.totalorder %s13, 0
    %p54 = por %p52, %p53
    %p55 = scmp.ne.s32.totalorder %s47, %s49
    %p56 = scmp.eq.s32.totalorder %s18, 1
    %p57 = por %p55, %p56
    %p58 = scmp.ne.s32.totalorder %s49, %s50
    %p59 = scmp.eq.s32.totalorder %s18, 0
    %p60 = por %p58, %p59
    %p61 = scmp.ne.s32.totalorder %s49, %s50
    %p62 = scmp.eq.s32.totalorder %s19, 1
    %p63 = por %p61, %p62
    %p65 = scmp.ne.s32.totalorder %s50, %s64
    %p66 = scmp.eq.s32.totalorder %s19, 0
    %p67 = por %p65, %p66
    %s69 = sadd.s32 %s68, 1
    %p72 = scmp.eq.s32.totalorder %s13, 1
    %p73 = scmp.ne.s32.totalorder %s68, %s70
    %p74 = scmp.eq.s32.totalorder %s13, 0
    %p75 = por %p73, %p74
    %p76 = scmp.ne.s32.totalorder %s68, %s70
    %p77 = scmp.eq.s32.totalorder %s18, 1
    %p78 = por %p76, %p77
    %p79 = scmp.ne.s32.totalorder %s70, %s71
    %p80 = scmp.eq.s32.totalorder %s18, 0
    %p81 = por %p79, %p80
    %p82 = scmp.ne.s32.totalorder %s70, %s71
    %p83 = scmp.eq.s32.totalorder %s19, 1
    %p84 = por %p82, %p83
    %p86 = scmp.ne.s32.totalorder %s71, %s85
    %p87 = scmp.eq.s32.totalorder %s19, 0
    %p88 = por %p86, %p87
    %s90 = sadd.s32 %s89, 1
    %p93 = scmp.eq.s32.totalorder %s13, 1
    %p94 = scmp.ne.s32.totalorder %s89, %s91
    %p95 = scmp.eq.s32.totalorder %s13, 0
    %p96 = por %p94, %p95
    %p97 = scmp.ne.s32.totalorder %s89, %s91
    %p98 = scmp.eq.s32.totalorder %s18, 1
    %p99 = por %p97, %p98
    %p100 = scmp.ne.s32.totalorder %s91, %s92
    %p101 = scmp.eq.s32.totalorder %s18, 0
    %p102 = por %p100, %p101
    %p103 = scmp.ne.s32.totalorder %s91, %s92
    %p104 = scmp.eq.s32.totalorder %s19, 1
    %p105 = por %p103, %p104
    %p107 = scmp.ne.s32.totalorder %s92, %s106
    %p108 = scmp.eq.s32.totalorder %s19, 0
    %p109 = por %p107, %p108
    %s111 = sadd.s32 %s110, 1
    %p114 = scmp.eq.s32.totalorder %s13, 1
    %p115 = scmp.ne.s32.totalorder %s110, %s112
    %p116 = scmp.eq.s32.totalorder %s13, 0
    %p117 = por %p115, %p116
    %p118 = scmp.ne.s32.totalorder %s110, %s112
    %p119 = scmp.eq.s32.totalorder %s18, 1
    %p120 = por %p118, %p119
    %p121 = scmp.ne.s32.totalorder %s112, %s113
    %p122 = scmp.eq.s32.totalorder %s18, 0
    %p123 = por %p121, %p122
    %p124 = scmp.ne.s32.totalorder %s112, %s113
    %p125 = scmp.eq.s32.totalorder %s19, 1
    %p126 = por %p124, %p125
    %p128 = scmp.ne.s32.totalorder %s113, %s127
    %p129 = scmp.eq.s32.totalorder %s19, 0
    %p130 = por %p128, %p129
    %s131 = ssub.s32 %s13, %s20
    %p132 = scmp.eq.s32.totalorder %s131, 0
    %s134 = sadd.s32 %s133, 1
    %s135 = scalar_select %p132, %s133, %s134
    %p138 = pneg %p132
    %p139 = scmp.eq.s32.totalorder %s13, 1
    %p140 = por %p138, %p139
    %p141 = scmp.ne.s32.totalorder %s133, %s136
    %p142 = scmp.eq.s32.totalorder %s13, 0
    %p143 = por %p141, %p142
    %p144 = scmp.ne.s32.totalorder %s133, %s136
    %p145 = scmp.eq.s32.totalorder %s18, 1
    %p146 = por %p144, %p145
    %p147 = scmp.ne.s32.totalorder %s136, %s137
    %p148 = scmp.eq.s32.totalorder %s18, 0
    %p149 = por %p147, %p148
    %p150 = scmp.ne.s32.totalorder %s136, %s137
    %p151 = scmp.eq.s32.totalorder %s19, 1
    %p152 = por %p150, %p151
    %p154 = scmp.ne.s32.totalorder %s137, %s153
    %p155 = scmp.eq.s32.totalorder %s19, 0
    %p156 = por %p154, %p155
    %p157 = scmp.le.s32.totalorder 1, %s13
    %p158 = scmp.lt.s32.totalorder %s13, 3
    %p159 = pnand %p157, %p158
    %p160 = pneg %p159
    // Predicated region
    $region9: #{model_forward.6} parent=5 // pred_check
      _
    $region10: #{model_forward.6} parent=5 // pred_check_branch
      %162 = sbr.rel (%p159) target = $region12
    $region11: #{model_forward.6} parent=5 // pred_region
      %s163 = ssub.s32 %s13, 1
      // Predicated region
      $region13: #{model_forward.6} parent=11 // pred_check
        %p164 = pneg %p60
      $region14: #{model_forward.6} parent=11 // pred_check_branch
        %166 = sbr.rel (%p164) target = $region16
      $region15: #{model_forward.6} parent=11 // pred_region
        _
      $region16: #{model_forward.6} parent=11 // pred_fallthru
        _
      // Predicated region
      $region17: #{model_forward.6} parent=11 // pred_check
        %p167 = pneg %p81
      $region18: #{model_forward.6} parent=11 // pred_check_branch
        %169 = sbr.rel (%p167) target = $region20
      $region19: #{model_forward.6} parent=11 // pred_region
        _
      $region20: #{model_forward.6} parent=11 // pred_fallthru
        _
      // Predicated region
      $region21: #{model_forward.6} parent=11 // pred_check
        %p170 = pneg %p102
      $region22: #{model_forward.6} parent=11 // pred_check_branch
        %172 = sbr.rel (%p170) target = $region24
      $region23: #{model_forward.6} parent=11 // pred_region
        _
      $region24: #{model_forward.6} parent=11 // pred_fallthru
        _
      // Predicated region
      $region25: #{model_forward.6} parent=11 // pred_check
        %p173 = pneg %p123
      $region26: #{model_forward.6} parent=11 // pred_check_branch
        %175 = sbr.rel (%p173) target = $region28
      $region27: #{model_forward.6} parent=11 // pred_region
        _
      $region28: #{model_forward.6} parent=11 // pred_fallthru
        _
    $region12: #{model_forward.6} parent=5 // pred_fallthru
      _
    %p176 = scmp.lt.s32.totalorder %s13, 2
    // Predicated region
    $region29: #{model_forward.6} parent=5 // pred_check
      %p177 = pneg %p176
    $region30: #{model_forward.6} parent=5 // pred_check_branch
      %179 = sbr.rel (%p177) target = $region32
    $region31: #{model_forward.6} parent=5 // pred_region
      // Predicated region
      $region33: #{model_forward.6} parent=31 // pred_check
        %p180 = pneg %p33
      $region34: #{model_forward.6} parent=31 // pred_check_branch
        %182 = sbr.rel (%p180) target = $region36
      $region35: #{model_forward.6} parent=31 // pred_region
        %p183 = scmp.lt.s32.totalorder %s13, 1
        %s184 = scalar_select %p183, %s13, 1
        %s185 = smul.addr %s184, 6
        %s186 = smul.addr %s185, 4
        %s187 = scalar_lea.vmem %s0, %s186
      $region36: #{model_forward.6} parent=31 // pred_fallthru
        _
    $region32: #{model_forward.6} parent=5 // pred_fallthru
      _
    %p188 = scmp.le.s32.totalorder 1, %s13
    %p189 = scmp.lt.s32.totalorder %s13, 3
    %p190 = pnand %p188, %p189
    %p191 = pneg %p190
    // Predicated region
    $region37: #{model_forward.6} parent=5 // pred_check
      _
    $region38: #{model_forward.6} parent=5 // pred_check_branch
      %193 = sbr.rel (%p190) target = $region40
    $region39: #{model_forward.6} parent=5 // pred_region
      %s194 = ssub.s32 %s13, 1
      %p195 = scmp.lt.s32.totalorder %s18, 1
      %s196 = scalar_select %p195, %s18, 1
      %s197 = smul.addr %s196, 6
      %s198 = smul.addr %s197, 4
      %s199 = scalar_lea.vmem %s0, %s198
      %p200 = pneg %p39
      %p201 = pneg %p36
      %p202 = pneg %p60
      %p203 = pneg %p57
      %p204 = pneg %p81
      %p205 = pneg %p78
      %p206 = pneg %p102
      %p207 = pneg %p99
      %p208 = pneg %p123
      %p209 = pneg %p120
      %p210 = pneg %p149
      %p211 = pneg %p146
      %p212 = scmp.lt.s32.totalorder %s18, 1
      %s213 = scalar_select %p212, %s18, 1
      %s214 = smul.addr %s213, 4
      %s215 = smul.addr %s214, 4
      %s216 = scalar_lea.vmem %s5, %s215
      %p217 = scmp.lt.s32.totalorder %s18, 1
      %s218 = scalar_select %p217, %s18, 1
      %s219 = smul.addr %s218, 6
      %s220 = smul.addr %s219, 4
      %s221 = scalar_lea.vmem %s0, %s220
      %p222 = scmp.lt.s32.totalorder %s18, 1
      %s223 = scalar_select %p222, %s18, 1
      %s224 = smul.addr %s223, 4
      %s225 = smul.addr %s224, 4
      %s226 = scalar_lea.vmem %s5, %s225
      %v228 = vld [vmem:[%s221] sm:$0x7]
      %v229 = vld [vmem:[%s221 + $0x4] sm:$0x7]
      %v230 = vld [vmem:[%s221 + $0x8] sm:$0x7]
      %v231 = vld [vmem:[%s221 + $0xc] sm:$0x7]
      %v232 = vld [vmem:[%s221 + $0x10] sm:$0x7]
      %v233 = vld [vmem:[%s221 + $0x14] sm:$0x7]
      %v234 = vld [vmem:[%s1] sm:$0xf]
      %v235 = vld [vmem:[%s1 + $0x4] sm:$0xf]
      %v241 = vunpack.c.l.s4 1983009808
      %v242 = vunpack.c.0.s8 %v241
      %v243 = vlaneseq
      %v244 = vshrl.u32 %v243, 7
      %v245 = vsub.s32 %v242, %v244
      %v246 = vrot.slane %v228, %v245
      %v247 = vcombine.high %v246, %v246
      %v249 = vunpack.c.l.s4 1983009808
      %v250 = vunpack.c.0.s8 %v249
      %v251 = vlaneseq
      %v252 = vshrl.u32 %v251, 7
      %v253 = vsub.s32 %v250, %v252
      %v254 = vrot.slane %v229, %v253
      %v255 = vcombine.high %v254, %v254
      %v257 = vunpack.c.l.s4 1983009808
      %v258 = vunpack.c.0.s8 %v257
      %v259 = vlaneseq
      %v260 = vshrl.u32 %v259, 7
      %v261 = vsub.s32 %v258, %v260
      %v262 = vrot.slane %v230, %v261
      %v263 = vcombine.high %v262, %v262
      %v265 = vunpack.c.l.s4 1983009808
      %v266 = vunpack.c.0.s8 %v265
      %v267 = vlaneseq
      %v268 = vshrl.u32 %v267, 7
      %v269 = vsub.s32 %v266, %v268
      %v270 = vrot.slane %v231, %v269
      %v271 = vcombine.high %v270, %v270
      %vm272 = vsmask.f32 1280
      %vm273 = vsmask.f32 3336
      %vm274 = vmor %vm272, %vm273
      %vm275 = vsmask.f32 5392
      %vm276 = vmor %vm274, %vm275
      %vm277 = vsmask.f32 7448
      %vm278 = vmor %vm276, %vm277
      %v280 = vshrl.u32 %v246, 16
      %v282 = vrot.slane %v280, 6
      %v283 = vshll.u32 %v246, 16
      %v285 = vrot.slane %v283, 7
      %v286 = vor.u32 %v282, %v285
      %v287 = vrot.slane %v286, 2
      %v289 = vshll.u32 %v247, 16
      %v291 = vrot.slane %v289, 7
      %v292 = vsel %vm278, %v287, %v291
      %v294 = vshrl.u32 %v254, 16
      %v296 = vrot.slane %v294, 6
      %v297 = vshll.u32 %v254, 16
      %v299 = vrot.slane %v297, 7
      %v300 = vor.u32 %v296, %v299
      %v301 = vrot.slane %v300, 2
      %v303 = vshll.u32 %v255, 16
      %v305 = vrot.slane %v303, 7
      %v306 = vsel %vm278, %v301, %v305
      %v308 = vshrl.u32 %v262, 16
      %v310 = vrot.slane %v308, 6
      %v311 = vshll.u32 %v262, 16
      %v313 = vrot.slane %v311, 7
      %v314 = vor.u32 %v310, %v313
      %v315 = vrot.slane %v314, 2
      %v317 = vshll.u32 %v263, 16
      %v319 = vrot.slane %v317, 7
      %v320 = vsel %vm278, %v315, %v319
      %v322 = vshrl.u32 %v270, 16
      %v324 = vrot.slane %v322, 6
      %v325 = vshll.u32 %v270, 16
      %v327 = vrot.slane %v325, 7
      %v328 = vor.u32 %v324, %v327
      %v329 = vrot.slane %v328, 2
      %v331 = vshll.u32 %v271, 16
      %v333 = vrot.slane %v331, 7
      %v334 = vsel %vm278, %v329, %v333
      %s335 = scalar_lea.vmem %s1, 8
      %v336 = vld [vmem:[%s335] sm:$0xf]
      %v337 = vld [vmem:[%s335 + $0x4] sm:$0xf]
      %v338 = vcombine.low %v292, %v306
      %v339 = vcombine.low %v320, %v334
      %v341 = vunpack.c.l.s4 1983009808
      %v342 = vunpack.c.0.s8 %v341
      %v343 = vlaneseq
      %v344 = vshrl.u32 %v343, 7
      %v345 = vsub.s32 %v342, %v344
      %v346 = vrot.slane %v338, %v345
      %v348 = vunpack.c.l.s4 1983009808
      %v349 = vunpack.c.0.s8 %v348
      %v350 = vlaneseq
      %v351 = vshrl.u32 %v350, 7
      %v352 = vsub.s32 %v349, %v351
      %v353 = vrot.slane %v339, %v352
      %v354 = vcombine.low %v346, %v353
      %v357 = vunpack.c.l.b16 %v336
      %v358 = vunpack.c.l.b16 %v337
      %v359 = vpack.c.b16 %v358, %v357
      %vm361 = vcmask 130048
      %v363 = vsel %vm361, %v354, 0
      %365 = vmatprep.subr.bf16.mxu0 0
      %366 = vmatpush1.bf16.msra.mxu0 0
      %367 = vmatprep.subr.bf16.mxu0 0
      %368 = vmatpush1.bf16.msra.mxu0 0
      %369 = vmatprep.subr.bf16.mxu0 0
      %370 = vmatpush1.bf16.msra.mxu0 0
      %371 = vmatprep.subr.bf16.mxu0 0
      %372 = vmatpush1.bf16.msra.mxu0 0
      %373 = vmatprep.subr.bf16.mxu0 0
      %374 = vmatpush1.bf16.msra.mxu0 0
      %375 = vmatprep.subr.bf16.mxu0 0
      %376 = vmatpush1.bf16.msra.mxu0 0
      %377 = vmatprep.subr.bf16.mxu0 0
      %378 = vmatpush1.bf16.msra.mxu0 0
      %379 = vmatprep.subr.bf16.mxu0 0
      %380 = vmatpush1.bf16.msra.mxu0 %v359
      %381 = vmatprep.subr.bf16.mxu0 0
      %382 = vmatpush2.bf16.msra.mxu0 0
      %383 = vmatprep.subr.bf16.mxu0 0
      %384 = vmatpush2.bf16.msra.mxu0 0
      %385 = vmatprep.subr.bf16.mxu0 0
      %386 = vmatpush2.bf16.msra.mxu0 0
      %387 = vmatprep.subr.bf16.mxu0 0
      %388 = vmatpush2.bf16.msra.mxu0 0
      %389 = vmatprep.subr.bf16.mxu0 0
      %390 = vmatpush2.bf16.msra.mxu0 0
      %391 = vmatprep.subr.bf16.mxu0 0
      %392 = vmatpush2.bf16.msra.mxu0 0
      %393 = vmatprep.subr.bf16.mxu0 0
      %394 = vmatpush2.bf16.msra.mxu0 0
      %395 = vmatprep.subr.bf16.mxu0 0
      %396 = vmatpush2.bf16.msra.mxu0 0
      %397 = vmatprep.mubr.bf16.mxu0 0
      %398 = vmatmul.mubr.bf16.gmra.mxu0 %v363
      %v399 = vpop.f32.mrf.mxu0
      %v400 = vadd.f32 0.0, %v399
      %v401 = vpop.f32.mrf.mxu0
      %v402 = vpop.f32.mrf.mxu0
      %v403 = vadd.f32 0.0, %v402
      %v404 = vpop.f32.mrf.mxu0
      %405 = vdwg.mxu0
      %v406 = vcombine.low %v228, %v229
      %v407 = vcombine.low %v230, %v231
      %v409 = vunpack.c.l.s4 1983009808
      %v410 = vunpack.c.0.s8 %v409
      %v411 = vlaneseq
      %v412 = vshrl.u32 %v411, 7
      %v413 = vsub.s32 %v410, %v412
      %v414 = vrot.slane %v406, %v413
      %v416 = vunpack.c.l.s4 1983009808
      %v417 = vunpack.c.0.s8 %v416
      %v418 = vlaneseq
      %v419 = vshrl.u32 %v418, 7
      %v420 = vsub.s32 %v417, %v419
      %v421 = vrot.slane %v407, %v420
      %v422 = vcombine.low %v414, %v421
      %v425 = vunpack.c.l.b16 %v234
      %v426 = vunpack.c.l.b16 %v235
      %v427 = vpack.c.b16 %v426, %v425
      %v430 = vsel %vm361, %v422, 0
      %432 = vmatprep.subr.bf16.mxu0 0
      %433 = vmatpush1.bf16.msra.mxu0 0
      %434 = vmatprep.subr.bf16.mxu0 0
      %435 = vmatpush1.bf16.msra.mxu0 0
      %436 = vmatprep.subr.bf16.mxu0 0
      %437 = vmatpush1.bf16.msra.mxu0 0
      %438 = vmatprep.subr.bf16.mxu0 0
      %439 = vmatpush1.bf16.msra.mxu0 0
      %440 = vmatprep.subr.bf16.mxu0 0
      %441 = vmatpush1.bf16.msra.mxu0 0
      %442 = vmatprep.subr.bf16.mxu0 0
      %443 = vmatpush1.bf16.msra.mxu0 0
      %444 = vmatprep.subr.bf16.mxu0 0
      %445 = vmatpush1.bf16.msra.mxu0 0
      %446 = vmatprep.subr.bf16.mxu0 0
      %447 = vmatpush1.bf16.msra.mxu0 %v427
      %448 = vmatprep.subr.bf16.mxu0 0
      %449 = vmatpush2.bf16.msra.mxu0 0
      %450 = vmatprep.subr.bf16.mxu0 0
      %451 = vmatpush2.bf16.msra.mxu0 0
      %452 = vmatprep.subr.bf16.mxu0 0
      %453 = vmatpush2.bf16.msra.mxu0 0
      %454 = vmatprep.subr.bf16.mxu0 0
      %455 = vmatpush2.bf16.msra.mxu0 0
      %456 = vmatprep.subr.bf16.mxu0 0
      %457 = vmatpush2.bf16.msra.mxu0 0
      %458 = vmatprep.subr.bf16.mxu0 0
      %459 = vmatpush2.bf16.msra.mxu0 0
      %460 = vmatprep.subr.bf16.mxu0 0
      %461 = vmatpush2.bf16.msra.mxu0 0
      %462 = vmatprep.subr.bf16.mxu0 0
      %463 = vmatpush2.bf16.msra.mxu0 0
      %464 = vmatprep.mubr.bf16.mxu0 0
      %465 = vmatmul.mubr.bf16.gmra.mxu0 %v430
      %v466 = vpop.f32.mrf.mxu0
      %v467 = vadd.f32 %v400, %v466
      %v468 = vpop.f32.mrf.mxu0
      %v469 = vpop.f32.mrf.mxu0
      %v470 = vadd.f32 %v403, %v469
      %v471 = vpop.f32.mrf.mxu0
      %472 = vdwg.mxu0
      %vm473 = vcmask 1040384
      %vm474 = vcmask 1042434
      %vm475 = vmor %vm473, %vm474
      %vm476 = vcmask 1044484
      %vm477 = vmor %vm475, %vm476
      %vm478 = vcmask 1046534
      %vm479 = vmor %vm477, %vm478
      %v480 = vrot.slane %v246, 7
      %v481 = vrot.slane %v480, 2
      %v482 = vrot.slane %v247, 7
      %v483 = vsel %vm479, %v481, %v482
      %v484 = vrot.slane %v254, 7
      %v485 = vrot.slane %v484, 2
      %v486 = vrot.slane %v255, 7
      %v487 = vsel %vm479, %v485, %v486
      %v488 = vrot.slane %v262, 7
      %v489 = vrot.slane %v488, 2
      %v490 = vrot.slane %v263, 7
      %v491 = vsel %vm479, %v489, %v490
      %v492 = vrot.slane %v270, 7
      %v493 = vrot.slane %v492, 2
      %v494 = vrot.slane %v271, 7
      %v495 = vsel %vm479, %v493, %v494
      %s496 = scalar_lea.vmem %s1, 16
      %v497 = vld [vmem:[%s496] sm:$0xf]
      %v498 = vld [vmem:[%s496 + $0x4] sm:$0xf]
      %v499 = vcombine.low %v483, %v487
      %v500 = vcombine.low %v491, %v495
      %v502 = vunpack.c.l.s4 1983009808
      %v503 = vunpack.c.0.s8 %v502
      %v504 = vlaneseq
      %v505 = vshrl.u32 %v504, 7
      %v506 = vsub.s32 %v503, %v505
      %v507 = vrot.slane %v499, %v506
      %v509 = vunpack.c.l.s4 1983009808
      %v510 = vunpack.c.0.s8 %v509
      %v511 = vlaneseq
      %v512 = vshrl.u32 %v511, 7
      %v513 = vsub.s32 %v510, %v512
      %v514 = vrot.slane %v500, %v513
      %v515 = vcombine.low %v507, %v514
      %v518 = vunpack.c.l.b16 %v497
      %v519 = vunpack.c.l.b16 %v498
      %v520 = vpack.c.b16 %v519, %v518
      %v523 = vsel %vm361, %v515, 0
      %525 = vmatprep.subr.bf16.mxu0 0
      %526 = vmatpush1.bf16.msra.mxu0 0
      %527 = vmatprep.subr.bf16.mxu0 0
      %528 = vmatpush1.bf16.msra.mxu0 0
      %529 = vmatprep.subr.bf16.mxu0 0
      %530 = vmatpush1.bf16.msra.mxu0 0
      %531 = vmatprep.subr.bf16.mxu0 0
      %532 = vmatpush1.bf16.msra.mxu0 0
      %533 = vmatprep.subr.bf16.mxu0 0
      %534 = vmatpush1.bf16.msra.mxu0 0
      %535 = vmatprep.subr.bf16.mxu0 0
      %536 = vmatpush1.bf16.msra.mxu0 0
      %537 = vmatprep.subr.bf16.mxu0 0
      %538 = vmatpush1.bf16.msra.mxu0 0
      %539 = vmatprep.subr.bf16.mxu0 0
      %540 = vmatpush1.bf16.msra.mxu0 %v520
      %541 = vmatprep.subr.bf16.mxu0 0
      %542 = vmatpush2.bf16.msra.mxu0 0
      %543 = vmatprep.subr.bf16.mxu0 0
      %544 = vmatpush2.bf16.msra.mxu0 0
      %545 = vmatprep.subr.bf16.mxu0 0
      %546 = vmatpush2.bf16.msra.mxu0 0
      %547 = vmatprep.subr.bf16.mxu0 0
      %548 = vmatpush2.bf16.msra.mxu0 0
      %549 = vmatprep.subr.bf16.mxu0 0
      %550 = vmatpush2.bf16.msra.mxu0 0
      %551 = vmatprep.subr.bf16.mxu0 0
      %552 = vmatpush2.bf16.msra.mxu0 0
      %553 = vmatprep.subr.bf16.mxu0 0
      %554 = vmatpush2.bf16.msra.mxu0 0
      %555 = vmatprep.subr.bf16.mxu0 0
      %556 = vmatpush2.bf16.msra.mxu0 0
      %557 = vmatprep.mubr.bf16.mxu0 0
      %558 = vmatmul.mubr.bf16.gmra.mxu0 %v523
      %v559 = vpop.f32.mrf.mxu0
      %v560 = vadd.f32 0.0, %v559
      %v561 = vpop.f32.mrf.mxu0
      %v562 = vpop.f32.mrf.mxu0
      %v563 = vadd.f32 0.0, %v562
      %v564 = vpop.f32.mrf.mxu0
      %565 = vdwg.mxu0
      %v566 = vadd.f32 %v467, %v560
      %v567 = vadd.f32 %v470, %v563
      %s568 = scalar_lea.vmem %s1, 24
      %v569 = vld [vmem:[%s568] sm:$0xf]
      %v570 = vld [vmem:[%s568 + $0x4] sm:$0xf]
      %v572 = vcombine.low %v229, %v230
      %v573 = vcombine.low %v231, %v232
      %v575 = vunpack.c.l.s4 1983009808
      %v576 = vunpack.c.0.s8 %v575
      %v577 = vlaneseq
      %v578 = vshrl.u32 %v577, 7
      %v579 = vsub.s32 %v576, %v578
      %v580 = vrot.slane %v572, %v579
      %v582 = vunpack.c.l.s4 1983009808
      %v583 = vunpack.c.0.s8 %v582
      %v584 = vlaneseq
      %v585 = vshrl.u32 %v584, 7
      %v586 = vsub.s32 %v583, %v585
      %v587 = vrot.slane %v573, %v586
      %v588 = vcombine.low %v580, %v587
      %v591 = vunpack.c.l.b16 %v569
      %v592 = vunpack.c.l.b16 %v570
      %v593 = vpack.c.b16 %v592, %v591
      %v596 = vsel %vm361, %v588, 0
      %598 = vmatprep.subr.bf16.mxu0 0
      %599 = vmatpush1.bf16.msra.mxu0 0
      %600 = vmatprep.subr.bf16.mxu0 0
      %601 = vmatpush1.bf16.msra.mxu0 0
      %602 = vmatprep.subr.bf16.mxu0 0
      %603 = vmatpush1.bf16.msra.mxu0 0
      %604 = vmatprep.subr.bf16.mxu0 0
      %605 = vmatpush1.bf16.msra.mxu0 0
      %606 = vmatprep.subr.bf16.mxu0 0
      %607 = vmatpush1.bf16.msra.mxu0 0
      %608 = vmatprep.subr.bf16.mxu0 0
      %609 = vmatpush1.bf16.msra.mxu0 0
      %610 = vmatprep.subr.bf16.mxu0 0
      %611 = vmatpush1.bf16.msra.mxu0 0
      %612 = vmatprep.subr.bf16.mxu0 0
      %613 = vmatpush1.bf16.msra.mxu0 %v593
      %614 = vmatprep.subr.bf16.mxu0 0
      %615 = vmatpush2.bf16.msra.mxu0 0
      %616 = vmatprep.subr.bf16.mxu0 0
      %617 = vmatpush2.bf16.msra.mxu0 0
      %618 = vmatprep.subr.bf16.mxu0 0
      %619 = vmatpush2.bf16.msra.mxu0 0
      %620 = vmatprep.subr.bf16.mxu0 0
      %621 = vmatpush2.bf16.msra.mxu0 0
      %622 = vmatprep.subr.bf16.mxu0 0
      %623 = vmatpush2.bf16.msra.mxu0 0
      %624 = vmatprep.subr.bf16.mxu0 0
      %625 = vmatpush2.bf16.msra.mxu0 0
      %626 = vmatprep.subr.bf16.mxu0 0
      %627 = vmatpush2.bf16.msra.mxu0 0
      %628 = vmatprep.subr.bf16.mxu0 0
      %629 = vmatpush2.bf16.msra.mxu0 0
      %630 = vmatprep.mubr.bf16.mxu0 0
      %631 = vmatmul.mubr.bf16.gmra.mxu0 %v596
      %v632 = vpop.f32.mrf.mxu0
      %v633 = vadd.f32 0.0, %v632
      %v634 = vpop.f32.mrf.mxu0
      %v635 = vpop.f32.mrf.mxu0
      %v636 = vadd.f32 0.0, %v635
      %v637 = vpop.f32.mrf.mxu0
      %638 = vdwg.mxu0
      %v639 = vadd.f32 %v566, %v633
      %v640 = vadd.f32 %v567, %v636
      %v642 = vunpack.c.l.s4 1983009808
      %v643 = vunpack.c.0.s8 %v642
      %v644 = vlaneseq
      %v645 = vshrl.u32 %v644, 7
      %v646 = vsub.s32 %v643, %v645
      %v647 = vrot.slane %v232, %v646
      %v648 = vcombine.high %v647, %v647
      %v650 = vshrl.u32 %v647, 16
      %v652 = vrot.slane %v650, 6
      %v653 = vshll.u32 %v647, 16
      %v655 = vrot.slane %v653, 7
      %v656 = vor.u32 %v652, %v655
      %v657 = vrot.slane %v656, 2
      %v659 = vshll.u32 %v648, 16
      %v661 = vrot.slane %v659, 7
      %v662 = vsel %vm278, %v657, %v661
      %s663 = scalar_lea.vmem %s1, 32
      %v664 = vld [vmem:[%s663] sm:$0xf]
      %v665 = vld [vmem:[%s663 + $0x4] sm:$0xf]
      %v666 = vcombine.low %v306, %v320
      %v667 = vcombine.low %v334, %v662
      %v669 = vunpack.c.l.s4 1983009808
      %v670 = vunpack.c.0.s8 %v669
      %v671 = vlaneseq
      %v672 = vshrl.u32 %v671, 7
      %v673 = vsub.s32 %v670, %v672
      %v674 = vrot.slane %v666, %v673
      %v676 = vunpack.c.l.s4 1983009808
      %v677 = vunpack.c.0.s8 %v676
      %v678 = vlaneseq
      %v679 = vshrl.u32 %v678, 7
      %v680 = vsub.s32 %v677, %v679
      %v681 = vrot.slane %v667, %v680
      %v682 = vcombine.low %v674, %v681
      %v685 = vunpack.c.l.b16 %v664
      %v686 = vunpack.c.l.b16 %v665
      %v687 = vpack.c.b16 %v686, %v685
      %v690 = vsel %vm361, %v682, 0
      %692 = vmatprep.subr.bf16.mxu0 0
      %693 = vmatpush1.bf16.msra.mxu0 0
      %694 = vmatprep.subr.bf16.mxu0 0
      %695 = vmatpush1.bf16.msra.mxu0 0
      %696 = vmatprep.subr.bf16.mxu0 0
      %697 = vmatpush1.bf16.msra.mxu0 0
      %698 = vmatprep.subr.bf16.mxu0 0
      %699 = vmatpush1.bf16.msra.mxu0 0
      %700 = vmatprep.subr.bf16.mxu0 0
      %701 = vmatpush1.bf16.msra.mxu0 0
      %702 = vmatprep.subr.bf16.mxu0 0
      %703 = vmatpush1.bf16.msra.mxu0 0
      %704 = vmatprep.subr.bf16.mxu0 0
      %705 = vmatpush1.bf16.msra.mxu0 0
      %706 = vmatprep.subr.bf16.mxu0 0
      %707 = vmatpush1.bf16.msra.mxu0 %v687
      %708 = vmatprep.subr.bf16.mxu0 0
      %709 = vmatpush2.bf16.msra.mxu0 0
      %710 = vmatprep.subr.bf16.mxu0 0
      %711 = vmatpush2.bf16.msra.mxu0 0
      %712 = vmatprep.subr.bf16.mxu0 0
      %713 = vmatpush2.bf16.msra.mxu0 0
      %714 = vmatprep.subr.bf16.mxu0 0
      %715 = vmatpush2.bf16.msra.mxu0 0
      %716 = vmatprep.subr.bf16.mxu0 0
      %717 = vmatpush2.bf16.msra.mxu0 0
      %718 = vmatprep.subr.bf16.mxu0 0
      %719 = vmatpush2.bf16.msra.mxu0 0
      %720 = vmatprep.subr.bf16.mxu0 0
      %721 = vmatpush2.bf16.msra.mxu0 0
      %722 = vmatprep.subr.bf16.mxu0 0
      %723 = vmatpush2.bf16.msra.mxu0 0
      %724 = vmatprep.mubr.bf16.mxu0 0
      %725 = vmatmul.mubr.bf16.gmra.mxu0 %v690
      %v726 = vpop.f32.mrf.mxu0
      %v727 = vadd.f32 0.0, %v726
      %v728 = vpop.f32.mrf.mxu0
      %v729 = vpop.f32.mrf.mxu0
      %v730 = vadd.f32 0.0, %v729
      %v731 = vpop.f32.mrf.mxu0
      %732 = vdwg.mxu0
      %v733 = vadd.f32 %v639, %v727
      %v734 = vadd.f32 %v640, %v730
      %v735 = vrot.slane %v647, 7
      %v736 = vrot.slane %v735, 2
      %v737 = vrot.slane %v648, 7
      %v738 = vsel %vm479, %v736, %v737
      %s739 = scalar_lea.vmem %s1, 40
      %v740 = vld [vmem:[%s739] sm:$0xf]
      %v741 = vld [vmem:[%s739 + $0x4] sm:$0xf]
      %v742 = vcombine.low %v487, %v491
      %v743 = vcombine.low %v495, %v738
      %v745 = vunpack.c.l.s4 1983009808
      %v746 = vunpack.c.0.s8 %v745
      %v747 = vlaneseq
      %v748 = vshrl.u32 %v747, 7
      %v749 = vsub.s32 %v746, %v748
      %v750 = vrot.slane %v742, %v749
      %v752 = vunpack.c.l.s4 1983009808
      %v753 = vunpack.c.0.s8 %v752
      %v754 = vlaneseq
      %v755 = vshrl.u32 %v754, 7
      %v756 = vsub.s32 %v753, %v755
      %v757 = vrot.slane %v743, %v756
      %v758 = vcombine.low %v750, %v757
      %v761 = vunpack.c.l.b16 %v740
      %v762 = vunpack.c.l.b16 %v741
      %v763 = vpack.c.b16 %v762, %v761
      %v766 = vsel %vm361, %v758, 0
      %768 = vmatprep.subr.bf16.mxu0 0
      %769 = vmatpush1.bf16.msra.mxu0 0
      %770 = vmatprep.subr.bf16.mxu0 0
      %771 = vmatpush1.bf16.msra.mxu0 0
      %772 = vmatprep.subr.bf16.mxu0 0
      %773 = vmatpush1.bf16.msra.mxu0 0
      %774 = vmatprep.subr.bf16.mxu0 0
      %775 = vmatpush1.bf16.msra.mxu0 0
      %776 = vmatprep.subr.bf16.mxu0 0
      %777 = vmatpush1.bf16.msra.mxu0 0
      %778 = vmatprep.subr.bf16.mxu0 0
      %779 = vmatpush1.bf16.msra.mxu0 0
      %780 = vmatprep.subr.bf16.mxu0 0
      %781 = vmatpush1.bf16.msra.mxu0 0
      %782 = vmatprep.subr.bf16.mxu0 0
      %783 = vmatpush1.bf16.msra.mxu0 %v763
      %784 = vmatprep.subr.bf16.mxu0 0
      %785 = vmatpush2.bf16.msra.mxu0 0
      %786 = vmatprep.subr.bf16.mxu0 0
      %787 = vmatpush2.bf16.msra.mxu0 0
      %788 = vmatprep.subr.bf16.mxu0 0
      %789 = vmatpush2.bf16.msra.mxu0 0
      %790 = vmatprep.subr.bf16.mxu0 0
      %791 = vmatpush2.bf16.msra.mxu0 0
      %792 = vmatprep.subr.bf16.mxu0 0
      %793 = vmatpush2.bf16.msra.mxu0 0
      %794 = vmatprep.subr.bf16.mxu0 0
      %795 = vmatpush2.bf16.msra.mxu0 0
      %796 = vmatprep.subr.bf16.mxu0 0
      %797 = vmatpush2.bf16.msra.mxu0 0
      %798 = vmatprep.subr.bf16.mxu0 0
      %799 = vmatpush2.bf16.msra.mxu0 0
      %800 = vmatprep.mubr.bf16.mxu0 0
      %801 = vmatmul.mubr.bf16.gmra.mxu0 %v766
      %v802 = vpop.f32.mrf.mxu0
      %v803 = vadd.f32 0.0, %v802
      %v804 = vpop.f32.mrf.mxu0
      %v805 = vpop.f32.mrf.mxu0
      %v806 = vadd.f32 0.0, %v805
      %v807 = vpop.f32.mrf.mxu0
      %808 = vdwg.mxu0
      %v809 = vadd.f32 %v733, %v803
      %v810 = vadd.f32 %v734, %v806
      %s811 = scalar_lea.vmem %s1, 48
      %v812 = vld [vmem:[%s811] sm:$0xf]
      %v813 = vld [vmem:[%s811 + $0x4] sm:$0xf]
      %v815 = vcombine.low %v232, %v233
      %v817 = vunpack.c.l.s4 1983009808
      %v818 = vunpack.c.0.s8 %v817
      %v819 = vlaneseq
      %v820 = vshrl.u32 %v819, 7
      %v821 = vsub.s32 %v818, %v820
      %v822 = vrot.slane %v815, %v821
      %v823 = vcombine.low %v421, %v822
      %v826 = vunpack.c.l.b16 %v812
      %v827 = vunpack.c.l.b16 %v813
      %v828 = vpack.c.b16 %v827, %v826
      %v831 = vsel %vm361, %v823, 0
      %833 = vmatprep.subr.bf16.mxu0 0
      %834 = vmatpush1.bf16.msra.mxu0 0
      %835 = vmatprep.subr.bf16.mxu0 0
      %836 = vmatpush1.bf16.msra.mxu0 0
      %837 = vmatprep.subr.bf16.mxu0 0
      %838 = vmatpush1.bf16.msra.mxu0 0
      %839 = vmatprep.subr.bf16.mxu0 0
      %840 = vmatpush1.bf16.msra.mxu0 0
      %841 = vmatprep.subr.bf16.mxu0 0
      %842 = vmatpush1.bf16.msra.mxu0 0
      %843 = vmatprep.subr.bf16.mxu0 0
      %844 = vmatpush1.bf16.msra.mxu0 0
      %845 = vmatprep.subr.bf16.mxu0 0
      %846 = vmatpush1.bf16.msra.mxu0 0
      %847 = vmatprep.subr.bf16.mxu0 0
      %848 = vmatpush1.bf16.msra.mxu0 %v828
      %849 = vmatprep.subr.bf16.mxu0 0
      %850 = vmatpush2.bf16.msra.mxu0 0
      %851 = vmatprep.subr.bf16.mxu0 0
      %852 = vmatpush2.bf16.msra.mxu0 0
      %853 = vmatprep.subr.bf16.mxu0 0
      %854 = vmatpush2.bf16.msra.mxu0 0
      %855 = vmatprep.subr.bf16.mxu0 0
      %856 = vmatpush2.bf16.msra.mxu0 0
      %857 = vmatprep.subr.bf16.mxu0 0
      %858 = vmatpush2.bf16.msra.mxu0 0
      %859 = vmatprep.subr.bf16.mxu0 0
      %860 = vmatpush2.bf16.msra.mxu0 0
      %861 = vmatprep.subr.bf16.mxu0 0
      %862 = vmatpush2.bf16.msra.mxu0 0
      %863 = vmatprep.subr.bf16.mxu0 0
      %864 = vmatpush2.bf16.msra.mxu0 0
      %865 = vmatprep.mubr.bf16.mxu0 0
      %866 = vmatmul.mubr.bf16.gmra.mxu0 %v831
      %v867 = vpop.f32.mrf.mxu0
      %v868 = vadd.f32 0.0, %v867
      %v869 = vpop.f32.mrf.mxu0
      %v870 = vpop.f32.mrf.mxu0
      %v871 = vadd.f32 0.0, %v870
      %v872 = vpop.f32.mrf.mxu0
      %873 = vdwg.mxu0
      %v874 = vadd.f32 %v809, %v868
      %v875 = vadd.f32 %v810, %v871
      %v877 = vunpack.c.l.s4 1983009808
      %v878 = vunpack.c.0.s8 %v877
      %v879 = vlaneseq
      %v880 = vshrl.u32 %v879, 7
      %v881 = vsub.s32 %v878, %v880
      %v882 = vrot.slane %v233, %v881
      %v883 = vcombine.high %v882, %v882
      %v885 = vshrl.u32 %v882, 16
      %v887 = vrot.slane %v885, 6
      %v888 = vshll.u32 %v882, 16
      %v890 = vrot.slane %v888, 7
      %v891 = vor.u32 %v887, %v890
      %v892 = vrot.slane %v891, 2
      %v894 = vshll.u32 %v883, 16
      %v896 = vrot.slane %v894, 7
      %v897 = vsel %vm278, %v892, %v896
      %s898 = scalar_lea.vmem %s1, 56
      %v899 = vld [vmem:[%s898] sm:$0xf]
      %v900 = vld [vmem:[%s898 + $0x4] sm:$0xf]
      %v901 = vcombine.low %v662, %v897
      %v903 = vunpack.c.l.s4 1983009808
      %v904 = vunpack.c.0.s8 %v903
      %v905 = vlaneseq
      %v906 = vshrl.u32 %v905, 7
      %v907 = vsub.s32 %v904, %v906
      %v908 = vrot.slane %v901, %v907
      %v909 = vcombine.low %v353, %v908
      %v912 = vunpack.c.l.b16 %v899
      %v913 = vunpack.c.l.b16 %v900
      %v914 = vpack.c.b16 %v913, %v912
      %v917 = vsel %vm361, %v909, 0
      %919 = vmatprep.subr.bf16.mxu0 0
      %920 = vmatpush1.bf16.msra.mxu0 0
      %921 = vmatprep.subr.bf16.mxu0 0
      %922 = vmatpush1.bf16.msra.mxu0 0
      %923 = vmatprep.subr.bf16.mxu0 0
      %924 = vmatpush1.bf16.msra.mxu0 0
      %925 = vmatprep.subr.bf16.mxu0 0
      %926 = vmatpush1.bf16.msra.mxu0 0
      %927 = vmatprep.subr.bf16.mxu0 0
      %928 = vmatpush1.bf16.msra.mxu0 0
      %929 = vmatprep.subr.bf16.mxu0 0
      %930 = vmatpush1.bf16.msra.mxu0 0
      %931 = vmatprep.subr.bf16.mxu0 0
      %932 = vmatpush1.bf16.msra.mxu0 0
      %933 = vmatprep.subr.bf16.mxu0 0
      %934 = vmatpush1.bf16.msra.mxu0 %v914
      %935 = vmatprep.subr.bf16.mxu0 0
      %936 = vmatpush2.bf16.msra.mxu0 0
      %937 = vmatprep.subr.bf16.mxu0 0
      %938 = vmatpush2.bf16.msra.mxu0 0
      %939 = vmatprep.subr.bf16.mxu0 0
      %940 = vmatpush2.bf16.msra.mxu0 0
      %941 = vmatprep.subr.bf16.mxu0 0
      %942 = vmatpush2.bf16.msra.mxu0 0
      %943 = vmatprep.subr.bf16.mxu0 0
      %944 = vmatpush2.bf16.msra.mxu0 0
      %945 = vmatprep.subr.bf16.mxu0 0
      %946 = vmatpush2.bf16.msra.mxu0 0
      %947 = vmatprep.subr.bf16.mxu0 0
      %948 = vmatpush2.bf16.msra.mxu0 0
      %949 = vmatprep.subr.bf16.mxu0 0
      %950 = vmatpush2.bf16.msra.mxu0 0
      %951 = vmatprep.mubr.bf16.mxu0 0
      %952 = vmatmul.mubr.bf16.gmra.mxu0 %v917
      %v953 = vpop.f32.mrf.mxu0
      %v954 = vadd.f32 0.0, %v953
      %v955 = vpop.f32.mrf.mxu0
      %v956 = vpop.f32.mrf.mxu0
      %v957 = vadd.f32 0.0, %v956
      %v958 = vpop.f32.mrf.mxu0
      %959 = vdwg.mxu0
      %v960 = vadd.f32 %v874, %v954
      %v961 = vadd.f32 %v875, %v957
      %v962 = vrot.slane %v882, 7
      %v963 = vrot.slane %v962, 2
      %v964 = vrot.slane %v883, 7
      %v965 = vsel %vm479, %v963, %v964
      %s966 = scalar_lea.vmem %s1, 64
      %v967 = vld [vmem:[%s966] sm:$0xf]
      %v968 = vld [vmem:[%s966 + $0x4] sm:$0xf]
      %v969 = vcombine.low %v738, %v965
      %v971 = vunpack.c.l.s4 1983009808
      %v972 = vunpack.c.0.s8 %v971
      %v973 = vlaneseq
      %v974 = vshrl.u32 %v973, 7
      %v975 = vsub.s32 %v972, %v974
      %v976 = vrot.slane %v969, %v975
      %v977 = vcombine.low %v514, %v976
      %v980 = vunpack.c.l.b16 %v967
      %v981 = vunpack.c.l.b16 %v968
      %v982 = vpack.c.b16 %v981, %v980
      %v985 = vsel %vm361, %v977, 0
      %987 = vmatprep.subr.bf16.mxu0 0
      %988 = vmatpush1.bf16.msra.mxu0 0
      %989 = vmatprep.subr.bf16.mxu0 0
      %990 = vmatpush1.bf16.msra.mxu0 0
      %991 = vmatprep.subr.bf16.mxu0 0
      %992 = vmatpush1.bf16.msra.mxu0 0
      %993 = vmatprep.subr.bf16.mxu0 0
      %994 = vmatpush1.bf16.msra.mxu0 0
      %995 = vmatprep.subr.bf16.mxu0 0
      %996 = vmatpush1.bf16.msra.mxu0 0
      %997 = vmatprep.subr.bf16.mxu0 0
      %998 = vmatpush1.bf16.msra.mxu0 0
      %999 = vmatprep.subr.bf16.mxu0 0
      %1000 = vmatpush1.bf16.msra.mxu0 0
      %1001 = vmatprep.subr.bf16.mxu0 0
      %1002 = vmatpush1.bf16.msra.mxu0 %v982
      %1003 = vmatprep.subr.bf16.mxu0 0
      %1004 = vmatpush2.bf16.msra.mxu0 0
      %1005 = vmatprep.subr.bf16.mxu0 0
      %1006 = vmatpush2.bf16.msra.mxu0 0
      %1007 = vmatprep.subr.bf16.mxu0 0
      %1008 = vmatpush2.bf16.msra.mxu0 0
      %1009 = vmatprep.subr.bf16.mxu0 0
      %1010 = vmatpush2.bf16.msra.mxu0 0
      %1011 = vmatprep.subr.bf16.mxu0 0
      %1012 = vmatpush2.bf16.msra.mxu0 0
      %1013 = vmatprep.subr.bf16.mxu0 0
      %1014 = vmatpush2.bf16.msra.mxu0 0
      %1015 = vmatprep.subr.bf16.mxu0 0
      %1016 = vmatpush2.bf16.msra.mxu0 0
      %1017 = vmatprep.subr.bf16.mxu0 0
      %1018 = vmatpush2.bf16.msra.mxu0 0
      %1019 = vmatprep.mubr.bf16.mxu0 0
      %1020 = vmatmul.mubr.bf16.gmra.mxu0 %v985
      %v1021 = vpop.f32.mrf.mxu0
      %v1022 = vadd.f32 0.0, %v1021
      %v1023 = vpop.f32.mrf.mxu0
      %v1024 = vpop.f32.mrf.mxu0
      %v1025 = vadd.f32 0.0, %v1024
      %v1026 = vpop.f32.mrf.mxu0
      %1027 = vdwg.mxu0
      %v1028 = vadd.f32 %v960, %v1022
      %v1029 = vadd.f32 %v961, %v1025
      %v1030 = vld [vmem:[%s2] sm:$0x1]
      %v1032 = vlaneseq
      %v1033 = vshrl.u32 %v1032, 7
      %v1034 = vsub.s32 0, %v1033
      %v1035 = vrot.slane %v1030, %v1034
      %v1037 = vadd.f32 %v1028, %v1035
      %v1038 = vadd.f32 %v1029, %v1035
      %v1039 = vmax.f32 %v1037, 0.0
      %v1040 = vmax.f32 %v1038, 0.0
      %v1041 = vld [vmem:[%s3] sm:$0x1]
      %v1043 = vlaneseq
      %v1044 = vshrl.u32 %v1043, 7
      %v1045 = vsub.s32 0, %v1044
      %v1046 = vrot.slane %v1041, %v1045
      %v1048 = vmul.f32 %v1039, %v1046
      %v1049 = vmul.f32 %v1040, %v1046
      %v1050 = vsel %vm361, %v1048, 0.0
      %1051 = vadd.xlane.f32.xlu0 %v1050
      %v1052 = vpop.xlane.xlu0 %1051
      %v1053 = vsel %vm361, %v1049, 0.0
      %1054 = vadd.xlane.f32.xlu0 %v1053
      %v1055 = vpop.xlane.xlu0 %1054
      %v1056 = vld [vmem:[#allocation2] sm:$0x1]
      %v1058 = vlaneseq
      %v1059 = vshrl.u32 %v1058, 7
      %v1060 = vsub.s32 0, %v1059
      %v1061 = vrot.slane %v1056, %v1060
      %v1063 = vadd.f32 %v1052, %v1061
      %v1064 = vadd.f32 %v1055, %v1061
      %v1065 = vsub.f32 0.0, %v1063
      %v1066 = vsub.f32 0.0, %v1064
      %v1067 = vmul.f32 %v1065, 1.442695
      %v1068 = vpow.pop %v1067
      %v1069 = vmul.f32 %v1066, 1.442695
      %v1070 = vpow.pop %v1069
      %v1071 = vadd.f32 %v1068, 1.0
      %v1072 = vadd.f32 %v1070, 1.0
      %v1073 = vrcp.pop %v1071
      %v1074 = vmul.f32 1.0, %v1073
      %v1075 = vrcp.pop %v1072
      %v1076 = vmul.f32 1.0, %v1075
      %v1079 = vcombine.high %v1074, %v1074
      %v1080 = vcombine.high %v1076, %v1076
      %vm1083 = vcmask 3072
      %1084 = vst.msk [vmem:[%s226] sm:$0xf] %vm1083, %v1074
      %1085 = vst.msk [vmem:[%s226 + $0x4] sm:$0xf] %vm1083, %v1079
      %1086 = vst.msk [vmem:[%s226 + $0x8] sm:$0xf] %vm1083, %v1076
      %1087 = vst.msk [vmem:[%s226 + $0xc] sm:$0xf] %vm1083, %v1080
      %p1088 = scmp.lt.s32.totalorder %s18, 1
      %s1089 = scalar_select %p1088, %s18, 1
      %s1090 = smul.addr %s1089, 4
      %s1091 = smul.addr %s1090, 4
      %s1092 = scalar_lea.vmem %s5, %s1091
      // Predicated region
      $region41: #{model_forward.6} parent=39 // pred_check
        %p1093 = pneg %p146
      $region42: #{model_forward.6} parent=39 // pred_check_branch
        %1095 = sbr.rel (%p1093) target = $region44
      $region43: #{model_forward.6} parent=39 // pred_region
        _
      $region44: #{model_forward.6} parent=39 // pred_fallthru
        _
    $region40: #{model_forward.6} parent=5 // pred_fallthru
      _
    %p1096 = scmp.le.s32.totalorder 2, %s13
    // Predicated region
    $region45: #{model_forward.6} parent=5 // pred_check
      %p1097 = pneg %p1096
    $region46: #{model_forward.6} parent=5 // pred_check_branch
      %1099 = sbr.rel (%p1097) target = $region48
    $region47: #{model_forward.6} parent=5 // pred_region
      %s1100 = ssub.s32 %s13, 2
      // Predicated region
      $region49: #{model_forward.6} parent=47 // pred_check
        %p1101 = pneg %p152
      $region50: #{model_forward.6} parent=47 // pred_check_branch
        %1103 = sbr.rel (%p1101) target = $region52
      $region51: #{model_forward.6} parent=47 // pred_region
        %p1104 = scmp.lt.s32.totalorder %s19, 1
        %s1105 = scalar_select %p1104, %s19, 1
        %s1106 = smul.addr %s1105, 4
        %s1107 = smul.addr %s1106, 4
        %s1108 = scalar_lea.vmem %s5, %s1107
      $region52: #{model_forward.6} parent=47 // pred_fallthru
        _
    $region48: #{model_forward.6} parent=5 // pred_fallthru
      _
  $region6: #{model_forward.6} parent=0 // loop_footer
    %s17 = sadd.s32 1, %s13
  $region7: #{model_forward.6} parent=0 // loop_footer_branch
    %12 = sbr.rel target = $region3
  $region8: #{model_forward.6} parent=0 // loop_exit
    _

</llo_original>
